<compile_context>
chip_gen: v7x
topology: tpu7x:2x2x1
jax: 0.10.0
libtpu: 0.0.40
codegen_flags: <defaults>
</compile_context>

<pallas_src>
import functools
import math

import jax
import jax.numpy as jnp
from jax.experimental import pallas as pl
from jax.experimental.pallas import tpu as pltpu

F32 = jnp.float32

# ----------------------- config (small, deterministic) -----------------------
VOCAB = 64        # synthetic vocab for the stand-in pretrained encoder
MAXS = 16         # max sequence length for position embeddings
H = 32            # pretrain.config.hidden_size
HID = 32          # config.hid_dim
OUT = 32          # config.out_dim
CLASS = 4         # config.class_size
LAYERS = 2        # config.num_layers
NCAPS = 3         # config.num_capsules
NROUTE = 3        # config.num_routing
ALPHA = 0.1       # HGAT leaky-relu slope (alpha=0.1 in the spec)
NEG = -1e9
# dropout = 0.0 (eval mode -> no-op)

_PARALLEL = pltpu.CompilerParams(dimension_semantics=("parallel",))


def _rep(shape):
    """BlockSpec for a whole-array operand replicated across a 1-D grid."""
    nd = len(shape)
    return pl.BlockSpec(shape, lambda i: (0,) * nd)


# --------------------------- in-kernel helpers --------------------------------

def _ln(x, g, b, eps=1e-5):
    mu = jnp.mean(x, axis=-1, keepdims=True)
    var = jnp.mean((x - mu) * (x - mu), axis=-1, keepdims=True)
    return (x - mu) * jax.lax.rsqrt(var + eps) * g + b


def _softmax_rows(logits):
    m = jnp.max(logits, axis=-1, keepdims=True)
    e = jnp.exp(logits - m)
    return e * pl.reciprocal(jnp.sum(e, axis=-1, keepdims=True), approx=True)


# --------------------- kernel 1: fused transformer encoder --------------------

def _encoder_kernel(x_ref, bias_ref,
                    ln0g, ln0b, wqkv, bqkv, wo, bo,
                    ln1g, ln1b, wf1, bf1, wf2, bf2, ln2g, ln2b,
                    o_ref, *, hdim, scale):
    x = _ln(x_ref[...], ln0g[...], ln0b[...])                            # (BS, H)
    qkv = jnp.dot(x, wqkv[...], preferred_element_type=F32) + bqkv[...]  # (BS, 3H)
    q = qkv[:, :hdim]
    k = qkv[:, hdim:2 * hdim]
    v = qkv[:, 2 * hdim:]
    # block-diagonal (per-batch) attention over the folded (BS, BS) score matrix
    s = jax.lax.dot_general(q, k, (((1,), (1,)), ((), ())),
                            preferred_element_type=F32) * scale + bias_ref[...]
    p = _softmax_rows(s)
    ctx = jnp.dot(p, v, preferred_element_type=F32)
    x1 = _ln(x + jnp.dot(ctx, wo[...], preferred_element_type=F32) + bo[...],
             ln1g[...], ln1b[...])
    h = jnp.maximum(jnp.dot(x1, wf1[...], preferred_element_type=F32) + bf1[...], 0.0)
    ffn = jnp.dot(h, wf2[...], preferred_element_type=F32) + bf2[...]
    o_ref[...] = _ln(x1 + ffn, ln2g[...], ln2b[...])


def pretrain_forward(input_ids, attention_mask, p):
    # TODO(synk): HF AutoModel replaced by a deterministic 1-layer transformer encoder.
    b, s = input_ids.shape
    bs = b * s
    x = p['tok_emb'][input_ids] + p['pos_emb'][None, :s, :]   # embedding gather: JAX glue
    x2 = x.reshape(bs, H)
    # block-diagonal + key-padding bias, built once in tiny XLA glue
    flat_mask = attention_mask.reshape(bs)
    bid = jnp.arange(bs, dtype=jnp.int32) // s
    keep = (bid[:, None] == bid[None, :]) & (flat_mask[None, :] > 0)
    attn_bias = jnp.where(keep, 0.0, NEG).astype(F32)

    specs = [_rep((bs, H)), _rep((bs, bs)),
             _rep((1, H)), _rep((1, H)),
             _rep((H, 3 * H)), _rep((1, 3 * H)),
             _rep((H, H)), _rep((1, H)),
             _rep((1, H)), _rep((1, H)),
             _rep((H, 4 * H)), _rep((1, 4 * H)),
             _rep((4 * H, H)), _rep((1, H)),
             _rep((1, H)), _rep((1, H))]
    out = pl.pallas_call(
        functools.partial(_encoder_kernel, hdim=H, scale=1.0 / math.sqrt(H)),
        out_shape=jax.ShapeDtypeStruct((bs, H), F32),
        grid=(1,),
        in_specs=specs,
        out_specs=_rep((bs, H)),
    )(x2, attn_bias,
      p['ln0_g'], p['ln0_b'], p['wqkv'], p['bqkv'], p['wo'], p['bo'],
      p['ln1_g'], p['ln1_b'], p['w_ff1'], p['b_ff1'], p['w_ff2'], p['b_ff2'],
      p['ln2_g'], p['ln2_b'])
    return out.reshape(b, s, H)


# ------------------- kernel 2: VGAE-1 + GraphConvolution (k=0) ----------------

def _graph0_kernel(x_ref, adj_ref, w1, b1, wmu, bmu, wg, bg, o_ref):
    x = x_ref[0]        # (S, Din)
    adj = adj_ref[0]    # (S, S)
    # VGAE (eval mode: z = mu)
    h1 = jnp.maximum(
        jnp.dot(adj, jnp.dot(x, w1[...], preferred_element_type=F32),
                preferred_element_type=F32) + b1[...], 0.0)
    mu = jnp.dot(adj, jnp.dot(h1, wmu[...], preferred_element_type=F32),
                 preferred_element_type=F32) + bmu[...]
    a_hid = jax.nn.sigmoid(
        jax.lax.dot_general(mu, mu, (((1,), (1,)), ((), ())),
                            preferred_element_type=F32))                 # (S, S)
    # GraphConvolution on the decoded adjacency
    o_ref[0] = jnp.dot(a_hid, jnp.dot(x, wg[...], preferred_element_type=F32),
                       preferred_element_type=F32) + bg[...]


def graph_layer0(x, adj, pv, pg):
    B, S, Din = x.shape
    return pl.pallas_call(
        _graph0_kernel,
        out_shape=jax.ShapeDtypeStruct((B, S, HID), F32),
        grid=(B,),
        in_specs=[pl.BlockSpec((1, S, Din), lambda i: (i, 0, 0)),
                  pl.BlockSpec((1, S, S), lambda i: (i, 0, 0)),
                  _rep((Din, HID)), _rep((1, HID)),
                  _rep((HID, HID)), _rep((1, HID)),
                  _rep((Din, HID)), _rep((1, HID))],
        out_specs=pl.BlockSpec((1, S, HID), lambda i: (i, 0, 0)),
        compiler_params=_PARALLEL,
    )(x, adj, pv['w1'], pv['b1'], pv['w_mu'], pv['b_mu'], pg['w'], pg['b'])


# --------------- kernel 3: VGAE-2 + HyperGraphAttention (k=1) -----------------

def _graph1_kernel(x_ref, adj_ref, w1, b1, wmu, bmu,
                   wt, a1, wtr, btr, wt2, a2, o_ref, *, alpha):
    x = x_ref[0]        # (S, HID)
    adj = adj_ref[0]    # (S, S)
    # VGAE (eval mode: z = mu)
    h1 = jnp.maximum(
        jnp.dot(adj, jnp.dot(x, w1[...], preferred_element_type=F32),
                preferred_element_type=F32) + b1[...], 0.0)
    mu = jnp.dot(adj, jnp.dot(h1, wmu[...], preferred_element_type=F32),
                 preferred_element_type=F32) + bmu[...]
    a_hid = jax.nn.sigmoid(
        jax.lax.dot_general(mu, mu, (((1,), (1,)), ((), ())),
                            preferred_element_type=F32))                 # (S, S), symmetric
    # HyperGraphAttention (transfer=True).  NOTE: a_hid = sigmoid(.) > 0 everywhere,
    # so the >0 mask keeps every entry — faithful to the reference, which feeds the
    # decoded adjacency straight into the attention layer.
    x_att = jnp.dot(x, wt[...], preferred_element_type=F32)
    x_tr = jnp.dot(x, wtr[...], preferred_element_type=F32) + btr[...]
    node_sc = jax.lax.dot_general(a1[...], x_att, (((1,), (1,)), ((), ())),
                                  preferred_element_type=F32)            # (1, S)
    node_sc = jnp.where(node_sc >= 0.0, node_sc, alpha * node_sc)
    p1 = _softmax_rows(jnp.where(a_hid > 0.0, node_sc, NEG))             # node -> edge
    edge_feat = jnp.dot(p1, x_tr, preferred_element_type=F32)            # (S, HID)
    e_att = jnp.dot(edge_feat, wt2[...], preferred_element_type=F32)
    edge_sc = jax.lax.dot_general(a2[...], e_att, (((1,), (1,)), ((), ())),
                                  preferred_element_type=F32)            # (1, S)
    edge_sc = jnp.where(edge_sc >= 0.0, edge_sc, alpha * edge_sc)
    # a_hid is symmetric (sigmoid of mu @ mu^T), so a_hid.T == a_hid.
    p2 = _softmax_rows(jnp.where(a_hid > 0.0, edge_sc, NEG))             # edge -> node
    node_out = jnp.dot(p2, edge_feat, preferred_element_type=F32)
    o_ref[0] = jnp.where(node_out > 0.0, node_out,
                         jnp.exp(jnp.minimum(node_out, 0.0)) - 1.0)      # elu


def graph_layer1(x, adj, pv, ph):
    B, S, D = x.shape
    return pl.pallas_call(
        functools.partial(_graph1_kernel, alpha=ALPHA),
        out_shape=jax.ShapeDtypeStruct((B, S, HID), F32),
        grid=(B,),
        in_specs=[pl.BlockSpec((1, S, D), lambda i: (i, 0, 0)),
                  pl.BlockSpec((1, S, S), lambda i: (i, 0, 0)),
                  _rep((D, HID)), _rep((1, HID)),
                  _rep((HID, HID)), _rep((1, HID)),
                  _rep((HID, HID)), _rep((1, HID)),
                  _rep((HID, HID)), _rep((1, HID)),
                  _rep((HID, HID)), _rep((1, HID))],
        out_specs=pl.BlockSpec((1, S, HID), lambda i: (i, 0, 0)),
        compiler_params=_PARALLEL,
    )(x, adj, pv['w1'], pv['b1'], pv['w_mu'], pv['b_mu'],
      ph['wt'], ph['a1'], ph['w'], ph['b'], ph['wt2'], ph['a2'])


# ------------- kernel 4: capsule routing + sum + pred + log_softmax -----------

def _caps_pred_kernel(x_ref, wcaps_ref, wp_ref, bp_ref, o_ref,
                      *, nb, seq, ncaps, dout, nroute):
    u_all = jnp.dot(x_ref[...], wcaps_ref[...], preferred_element_type=F32)  # (B*S, ncaps*dout)
    row_id = jax.lax.broadcasted_iota(jnp.int32, (nb, 1), 0)
    pooled_mat = jnp.zeros((nb, dout), F32)
    for b in range(nb):                              # B=2, unrolled
        u = u_all[b * seq:(b + 1) * seq, :]          # (S, ncaps*dout)
        b_ij = jnp.zeros((seq, ncaps), F32)
        v_caps = []
        for it in range(nroute):                     # dynamic routing, unrolled
            c = _softmax_rows(b_ij)                  # (S, ncaps)
            v_caps = []
            for cap in range(ncaps):
                u_c = u[:, cap * dout:(cap + 1) * dout]
                s_j = jnp.sum(c[:, cap:cap + 1] * u_c, axis=0, keepdims=True)  # (1, dout)
                n2 = jnp.sum(s_j * s_j, axis=-1, keepdims=True)
                v_caps.append((n2 / (1.0 + n2)) * s_j * jax.lax.rsqrt(n2 + 1e-9))
            if it + 1 < nroute:
                upd = b_ij
                for cap in range(ncaps):
                    u_c = u[:, cap * dout:(cap + 1) * dout]
                    agree = jax.lax.dot_general(
                        u_c, v_caps[cap], (((1,), (1,)), ((), ())),
                        preferred_element_type=F32)                      # (S, 1)
                    sel = (jax.lax.broadcasted_iota(jnp.int32, (1, ncaps), 1)
                           == cap).astype(F32)
                    upd = upd + agree * sel
                b_ij = upd
        pooled = v_caps[0]
        for cap in range(1, ncaps):
            pooled = pooled + v_caps[cap]                                # sum over capsules
        pooled_mat = pooled_mat + jnp.where(row_id == b, pooled, 0.0)
    logits = jnp.dot(pooled_mat, wp_ref[...], preferred_element_type=F32) + bp_ref[...]
    m = jnp.max(logits, axis=-1, keepdims=True)
    lse = jnp.log(jnp.sum(jnp.exp(logits - m), axis=-1, keepdims=True))
    o_ref[...] = logits - m - lse


def caps_pred(g_hid, pcaps, ppred):
    B, S, D = g_hid.shape
    x2 = g_hid.reshape(B * S, D)
    return pl.pallas_call(
        functools.partial(_caps_pred_kernel, nb=B, seq=S, ncaps=NCAPS,
                          dout=OUT, nroute=NROUTE),
        out_shape=jax.ShapeDtypeStruct((B, CLASS), F32),
        grid=(1,),
        in_specs=[_rep((B * S, D)), _rep((D, NCAPS * OUT)),
                  _rep((OUT, CLASS)), _rep((1, CLASS))],
        out_specs=_rep((B, CLASS)),
    )(x2, pcaps['wcaps'], ppred['w'], ppred['b'])


# ------------------------------ full forward ----------------------------------

def eshgat_forward(params, input_ids, attention_mask, adjmat):
    outs = pretrain_forward(input_ids, attention_mask, params['pretrain'])   # (B,S,H)
    # k = 0: A_hid = VGAE1(g_hid, adjmat); g_hid = GraphConvolution(g_hid, A_hid)
    g_hid = graph_layer0(outs, adjmat, params['vae'][0], params['gcn0'])
    # k = 1: A_hid = VGAE2(g_hid, adjmat); g_hid = HyperGraphAttention(g_hid, A_hid)
    g_hid = graph_layer1(g_hid, adjmat, params['vae'][1], params['hgat'])
    # capsule routing over positions, sum over capsules, pred, log_softmax
    return caps_pred(g_hid, params['caps'], params['pred'])


# ----------------------------- parameter init ---------------------------------

def _w(key, shape):
    return (jax.random.normal(key, shape, F32) / math.sqrt(shape[0])).astype(F32)


def init_params(key):
    ks = iter(jax.random.split(key, 40))
    pre = {
        'tok_emb': jax.random.normal(next(ks), (VOCAB, H), F32) * 0.02,
        'pos_emb': jax.random.normal(next(ks), (MAXS, H), F32) * 0.02,
        'ln0_g': jnp.ones((1, H), F32), 'ln0_b': jnp.zeros((1, H), F32),
        'ln1_g': jnp.ones((1, H), F32), 'ln1_b': jnp.zeros((1, H), F32),
        'ln2_g': jnp.ones((1, H), F32), 'ln2_b': jnp.zeros((1, H), F32),
        'wqkv': _w(next(ks), (H, 3 * H)), 'bqkv': jnp.zeros((1, 3 * H), F32),
        'wo': _w(next(ks), (H, H)), 'bo': jnp.zeros((1, H), F32),
        'w_ff1': _w(next(ks), (H, 4 * H)), 'b_ff1': jnp.zeros((1, 4 * H), F32),
        'w_ff2': _w(next(ks), (4 * H, H)), 'b_ff2': jnp.zeros((1, H), F32),
    }
    p = {'pretrain': pre, 'vae': []}
    for k in range(LAYERS):
        din = H if k == 0 else HID
        p['vae'].append({'w1': _w(next(ks), (din, HID)), 'b1': jnp.zeros((1, HID), F32),
                         'w_mu': _w(next(ks), (HID, HID)), 'b_mu': jnp.zeros((1, HID), F32)})
    p['gcn0'] = {'w': _w(next(ks), (H, HID)), 'b': jnp.zeros((1, HID), F32)}
    p['hgat'] = {'wt': _w(next(ks), (HID, HID)),
                 'w': _w(next(ks), (HID, HID)), 'b': jnp.zeros((1, HID), F32),
                 'a1': _w(next(ks), (1, HID)),
                 'wt2': _w(next(ks), (HID, HID)),
                 'a2': _w(next(ks), (1, HID))}
    p['caps'] = {'wcaps': _w(next(ks), (HID, NCAPS * OUT))}
    p['pred'] = {'w': _w(next(ks), (OUT, CLASS)), 'b': jnp.zeros((1, CLASS), F32)}
    return p


# ---------------------------------- main ---------------------------------------

if __name__ == "__main__":
    key = jax.random.PRNGKey(0)
    kp, kid, kadj = jax.random.split(key, 3)
    params = init_params(kp)

    b, s = 2, 8
    input_ids = jax.random.randint(kid, (b, s), 0, VOCAB, dtype=jnp.int32)
    attention_mask = jnp.ones((b, s), F32)
    a = jax.random.uniform(kadj, (b, s, s))
    adj = ((a + jnp.transpose(a, (0, 2, 1))) * 0.5 > 0.5).astype(F32)
    adjmat = jnp.clip(adj + jnp.eye(s, dtype=F32)[None], 0.0, 1.0)

    fwd = jax.jit(eshgat_forward)
    logits = fwd(params, input_ids, attention_mask, adjmat)
    jax.block_until_ready(logits)
    assert logits.shape == (b, CLASS)
    assert bool(jnp.all(jnp.isfinite(logits)))
    print("KERNEL_OK")
</pallas_src>

<mosaic_0001>
module attributes {stable_mosaic.version = 11 : i64} {
  func.func @_graph0_kernel(%arg0: i32, %arg1: memref<1x8x32xf32, #tpu.memory_space<vmem>>, %arg2: memref<1x8x8xf32, #tpu.memory_space<vmem>>, %arg3: memref<32x32xf32, #tpu.memory_space<vmem>>, %arg4: memref<1x32xf32, #tpu.memory_space<vmem>>, %arg5: memref<32x32xf32, #tpu.memory_space<vmem>>, %arg6: memref<1x32xf32, #tpu.memory_space<vmem>>, %arg7: memref<32x32xf32, #tpu.memory_space<vmem>>, %arg8: memref<1x32xf32, #tpu.memory_space<vmem>>, %arg9: memref<1x8x32xf32, #tpu.memory_space<vmem>>) attributes {dimension_semantics = [#tpu.dimension_semantics<parallel>], iteration_bounds = array<i64: 2>, scalar_prefetch = 0 : i64, scratch_operands = 0 : i64, tpu.core_type = #tpu.core_type<tc>, window_params = [{transform_indices = @transform_0, window_bounds = array<i64: 1, 8, 32>}, {transform_indices = @transform_1, window_bounds = array<i64: 1, 8, 8>}, {pipeline_mode = #tpu.pipeline_mode<synchronous>, transform_indices = @transform_2, window_bounds = array<i64: 32, 32>}, {pipeline_mode = #tpu.pipeline_mode<synchronous>, transform_indices = @transform_3, window_bounds = array<i64: 1, 32>}, {pipeline_mode = #tpu.pipeline_mode<synchronous>, transform_indices = @transform_4, window_bounds = array<i64: 32, 32>}, {pipeline_mode = #tpu.pipeline_mode<synchronous>, transform_indices = @transform_5, window_bounds = array<i64: 1, 32>}, {pipeline_mode = #tpu.pipeline_mode<synchronous>, transform_indices = @transform_6, window_bounds = array<i64: 32, 32>}, {pipeline_mode = #tpu.pipeline_mode<synchronous>, transform_indices = @transform_7, window_bounds = array<i64: 1, 32>}, {transform_indices = @transform_8, window_bounds = array<i64: 1, 8, 32>}]} {
    %c0 = arith.constant 0 : index
    %c0_0 = arith.constant 0 : index
    %c0_1 = arith.constant 0 : index
    %0 = vector.load %arg1[%c0, %c0_0, %c0_1] : memref<1x8x32xf32, #tpu.memory_space<vmem>>, vector<1x8x32xf32>
    %1 = vector.shape_cast %0 : vector<1x8x32xf32> to vector<8x32xf32>
    %c0_2 = arith.constant 0 : index
    %c0_3 = arith.constant 0 : index
    %c0_4 = arith.constant 0 : index
    %2 = vector.load %arg2[%c0_2, %c0_3, %c0_4] : memref<1x8x8xf32, #tpu.memory_space<vmem>>, vector<1x8x8xf32>
    %3 = vector.shape_cast %2 : vector<1x8x8xf32> to vector<8x8xf32>
    %c0_5 = arith.constant 0 : index
    %c0_6 = arith.constant 0 : index
    %4 = vector.load %arg3[%c0_5, %c0_6] : memref<32x32xf32, #tpu.memory_space<vmem>>, vector<32x32xf32>
    %cst = arith.constant dense<0.000000e+00> : vector<8x32xf32>
    %5 = tpu.matmul %1, %4, %cst {dimension_numbers = #tpu.dot_dimension_numbers<[1], [0], [0], [1], [0, 0, 1, 1], [], []>} : vector<8x32xf32>, vector<32x32xf32>, vector<8x32xf32> -> vector<8x32xf32>
    %cst_7 = arith.constant dense<0.000000e+00> : vector<8x32xf32>
    %6 = tpu.matmul %3, %5, %cst_7 {dimension_numbers = #tpu.dot_dimension_numbers<[1], [0], [0], [1], [0, 0, 1, 1], [], []>} : vector<8x8xf32>, vector<8x32xf32>, vector<8x32xf32> -> vector<8x32xf32>
    %c0_8 = arith.constant 0 : index
    %c0_9 = arith.constant 0 : index
    %7 = vector.load %arg4[%c0_8, %c0_9] : memref<1x32xf32, #tpu.memory_space<vmem>>, vector<1x32xf32>
    %8 = vector.broadcast %7 : vector<1x32xf32> to vector<8x32xf32>
    %9 = arith.addf %6, %8 : vector<8x32xf32>
    %cst_10 = arith.constant 0.000000e+00 : f32
    %10 = vector.broadcast %cst_10 : f32 to vector<8x32xf32>
    %11 = arith.maximumf %9, %10 : vector<8x32xf32>
    %c0_11 = arith.constant 0 : index
    %c0_12 = arith.constant 0 : index
    %12 = vector.load %arg5[%c0_11, %c0_12] : memref<32x32xf32, #tpu.memory_space<vmem>>, vector<32x32xf32>
    %cst_13 = arith.constant dense<0.000000e+00> : vector<8x32xf32>
    %13 = tpu.matmul %11, %12, %cst_13 {dimension_numbers = #tpu.dot_dimension_numbers<[1], [0], [0], [1], [0, 0, 1, 1], [], []>} : vector<8x32xf32>, vector<32x32xf32>, vector<8x32xf32> -> vector<8x32xf32>
    %cst_14 = arith.constant dense<0.000000e+00> : vector<8x32xf32>
    %14 = tpu.matmul %3, %13, %cst_14 {dimension_numbers = #tpu.dot_dimension_numbers<[1], [0], [0], [1], [0, 0, 1, 1], [], []>} : vector<8x8xf32>, vector<8x32xf32>, vector<8x32xf32> -> vector<8x32xf32>
    %c0_15 = arith.constant 0 : index
    %c0_16 = arith.constant 0 : index
    %15 = vector.load %arg6[%c0_15, %c0_16] : memref<1x32xf32, #tpu.memory_space<vmem>>, vector<1x32xf32>
    %16 = vector.broadcast %15 : vector<1x32xf32> to vector<8x32xf32>
    %17 = arith.addf %14, %16 : vector<8x32xf32>
    %cst_17 = arith.constant dense<0.000000e+00> : vector<8x8xf32>
    %18 = tpu.matmul %17, %17, %cst_17 {dimension_numbers = #tpu.dot_dimension_numbers<[1], [1], [0], [0], [0, 0, 1, 0], [], []>} : vector<8x32xf32>, vector<8x32xf32>, vector<8x8xf32> -> vector<8x8xf32>
    %19 = arith.negf %18 : vector<8x8xf32>
    %20 = math.exp %19 : vector<8x8xf32>
    %cst_18 = arith.constant 1.000000e+00 : f32
    %21 = vector.broadcast %cst_18 : f32 to vector<8x8xf32>
    %22 = arith.addf %21, %20 : vector<8x8xf32>
    %23 = arith.divf %21, %22 : vector<8x8xf32>
    %c0_19 = arith.constant 0 : index
    %c0_20 = arith.constant 0 : index
    %24 = vector.load %arg7[%c0_19, %c0_20] : memref<32x32xf32, #tpu.memory_space<vmem>>, vector<32x32xf32>
    %cst_21 = arith.constant dense<0.000000e+00> : vector<8x32xf32>
    %25 = tpu.matmul %1, %24, %cst_21 {dimension_numbers = #tpu.dot_dimension_numbers<[1], [0], [0], [1], [0, 0, 1, 1], [], []>} : vector<8x32xf32>, vector<32x32xf32>, vector<8x32xf32> -> vector<8x32xf32>
    %cst_22 = arith.constant dense<0.000000e+00> : vector<8x32xf32>
    %26 = tpu.matmul %23, %25, %cst_22 {dimension_numbers = #tpu.dot_dimension_numbers<[1], [0], [0], [1], [0, 0, 1, 1], [], []>} : vector<8x8xf32>, vector<8x32xf32>, vector<8x32xf32> -> vector<8x32xf32>
    %c0_23 = arith.constant 0 : index
    %c0_24 = arith.constant 0 : index
    %27 = vector.load %arg8[%c0_23, %c0_24] : memref<1x32xf32, #tpu.memory_space<vmem>>, vector<1x32xf32>
    %28 = vector.broadcast %27 : vector<1x32xf32> to vector<8x32xf32>
    %29 = arith.addf %26, %28 : vector<8x32xf32>
    %c0_25 = arith.constant 0 : index
    %c0_26 = arith.constant 0 : index
    %c0_27 = arith.constant 0 : index
    %30 = vector.load %arg9[%c0_25, %c0_26, %c0_27] : memref<1x8x32xf32, #tpu.memory_space<vmem>>, vector<1x8x32xf32>
    %31 = vector.shape_cast %30 : vector<1x8x32xf32> to vector<8x32xf32>
    %32 = vector.shape_cast %29 : vector<8x32xf32> to vector<1x8x32xf32>
    tpu.vector_store %arg9[%c0_25, %c0_26, %c0_27], %32 {strides = array<i32>} : memref<1x8x32xf32, #tpu.memory_space<vmem>>, vector<1x8x32xf32>,
    return
  }
  func.func @transform_0(%arg0: i32) -> (i32, i32, i32) {
    %c0_i32 = arith.constant 0 : i32
    %c0_i32_0 = arith.constant 0 : i32
    %c0_i32_1 = arith.constant 0 : i32
    return %arg0, %c0_i32, %c0_i32_0 : i32, i32, i32
  }
  func.func @transform_1(%arg0: i32) -> (i32, i32, i32) {
    %c0_i32 = arith.constant 0 : i32
    %c0_i32_0 = arith.constant 0 : i32
    %c0_i32_1 = arith.constant 0 : i32
    return %arg0, %c0_i32, %c0_i32_0 : i32, i32, i32
  }
  func.func @transform_2(%arg0: i32) -> (i32, i32) {
    %c0_i32 = arith.constant 0 : i32
    %c0_i32_0 = arith.constant 0 : i32
    %c0_i32_1 = arith.constant 0 : i32
    return %c0_i32, %c0_i32_0 : i32, i32
  }
  func.func @transform_3(%arg0: i32) -> (i32, i32) {
    %c0_i32 = arith.constant 0 : i32
    %c0_i32_0 = arith.constant 0 : i32
    %c0_i32_1 = arith.constant 0 : i32
    return %c0_i32, %c0_i32_0 : i32, i32
  }
  func.func @transform_4(%arg0: i32) -> (i32, i32) {
    %c0_i32 = arith.constant 0 : i32
    %c0_i32_0 = arith.constant 0 : i32
    %c0_i32_1 = arith.constant 0 : i32
    return %c0_i32, %c0_i32_0 : i32, i32
  }
  func.func @transform_5(%arg0: i32) -> (i32, i32) {
    %c0_i32 = arith.constant 0 : i32
    %c0_i32_0 = arith.constant 0 : i32
    %c0_i32_1 = arith.constant 0 : i32
    return %c0_i32, %c0_i32_0 : i32, i32
  }
  func.func @transform_6(%arg0: i32) -> (i32, i32) {
    %c0_i32 = arith.constant 0 : i32
    %c0_i32_0 = arith.constant 0 : i32
    %c0_i32_1 = arith.constant 0 : i32
    return %c0_i32, %c0_i32_0 : i32, i32
  }
  func.func @transform_7(%arg0: i32) -> (i32, i32) {
    %c0_i32 = arith.constant 0 : i32
    %c0_i32_0 = arith.constant 0 : i32
    %c0_i32_1 = arith.constant 0 : i32
    return %c0_i32, %c0_i32_0 : i32, i32
  }
  func.func @transform_8(%arg0: i32) -> (i32, i32, i32) {
    %c0_i32 = arith.constant 0 : i32
    %c0_i32_0 = arith.constant 0 : i32
    %c0_i32_1 = arith.constant 0 : i32
    return %arg0, %c0_i32, %c0_i32_0 : i32, i32, i32
  }
}

module attributes {stable_mosaic.version = 11 : i64} {
  func.func @_encoder_kernel(%arg0: i32, %arg1: memref<16x32xf32, #tpu.memory_space<vmem>>, %arg2: memref<16x16xf32, #tpu.memory_space<vmem>>, %arg3: memref<1x32xf32, #tpu.memory_space<vmem>>, %arg4: memref<1x32xf32, #tpu.memory_space<vmem>>, %arg5: memref<32x96xf32, #tpu.memory_space<vmem>>, %arg6: memref<1x96xf32, #tpu.memory_space<vmem>>, %arg7: memref<32x32xf32, #tpu.memory_space<vmem>>, %arg8: memref<1x32xf32, #tpu.memory_space<vmem>>, %arg9: memref<1x32xf32, #tpu.memory_space<vmem>>, %arg10: memref<1x32xf32, #tpu.memory_space<vmem>>, %arg11: memref<32x128xf32, #tpu.memory_space<vmem>>, %arg12: memref<1x128xf32, #tpu.memory_space<vmem>>, %arg13: memref<128x32xf32, #tpu.memory_space<vmem>>, %arg14: memref<1x32xf32, #tpu.memory_space<vmem>>, %arg15: memref<1x32xf32, #tpu.memory_space<vmem>>, %arg16: memref<1x32xf32, #tpu.memory_space<vmem>>, %arg17: memref<16x32xf32, #tpu.memory_space<vmem>>) attributes {dimension_semantics = [#tpu.dimension_semantics<arbitrary>], iteration_bounds = array<i64: 1>, scalar_prefetch = 0 : i64, scratch_operands = 0 : i64, tpu.core_type = #tpu.core_type<tc>, window_params = [{pipeline_mode = #tpu.pipeline_mode<synchronous>, transform_indices = @transform_0, window_bounds = array<i64: 16, 32>}, {pipeline_mode = #tpu.pipeline_mode<synchronous>, transform_indices = @transform_1, window_bounds = array<i64: 16, 16>}, {pipeline_mode = #tpu.pipeline_mode<synchronous>, transform_indices = @transform_2, window_bounds = array<i64: 1, 32>}, {pipeline_mode = #tpu.pipeline_mode<synchronous>, transform_indices = @transform_3, window_bounds = array<i64: 1, 32>}, {pipeline_mode = #tpu.pipeline_mode<synchronous>, transform_indices = @transform_4, window_bounds = array<i64: 32, 96>}, {pipeline_mode = #tpu.pipeline_mode<synchronous>, transform_indices = @transform_5, window_bounds = array<i64: 1, 96>}, {pipeline_mode = #tpu.pipeline_mode<synchronous>, transform_indices = @transform_6, window_bounds = array<i64: 32, 32>}, {pipeline_mode = #tpu.pipeline_mode<synchronous>, transform_indices = @transform_7, window_bounds = array<i64: 1, 32>}, {pipeline_mode = #tpu.pipeline_mode<synchronous>, transform_indices = @transform_8, window_bounds = array<i64: 1, 32>}, {pipeline_mode = #tpu.pipeline_mode<synchronous>, transform_indices = @transform_9, window_bounds = array<i64: 1, 32>}, {pipeline_mode = #tpu.pipeline_mode<synchronous>, transform_indices = @transform_10, window_bounds = array<i64: 32, 128>}, {pipeline_mode = #tpu.pipeline_mode<synchronous>, transform_indices = @transform_11, window_bounds = array<i64: 1, 128>}, {pipeline_mode = #tpu.pipeline_mode<synchronous>, transform_indices = @transform_12, window_bounds = array<i64: 128, 32>}, {pipeline_mode = #tpu.pipeline_mode<synchronous>, transform_indices = @transform_13, window_bounds = array<i64: 1, 32>}, {pipeline_mode = #tpu.pipeline_mode<synchronous>, transform_indices = @transform_14, window_bounds = array<i64: 1, 32>}, {pipeline_mode = #tpu.pipeline_mode<synchronous>, transform_indices = @transform_15, window_bounds = array<i64: 1, 32>}, {pipeline_mode = #tpu.pipeline_mode<synchronous>, transform_indices = @transform_16, window_bounds = array<i64: 16, 32>}]} {
    %c0 = arith.constant 0 : index
    %c0_0 = arith.constant 0 : index
    %0 = vector.load %arg1[%c0, %c0_0] : memref<16x32xf32, #tpu.memory_space<vmem>>, vector<16x32xf32>
    %c0_1 = arith.constant 0 : index
    %c0_2 = arith.constant 0 : index
    %1 = vector.load %arg3[%c0_1, %c0_2] : memref<1x32xf32, #tpu.memory_space<vmem>>, vector<1x32xf32>
    %c0_3 = arith.constant 0 : index
    %c0_4 = arith.constant 0 : index
    %2 = vector.load %arg4[%c0_3, %c0_4] : memref<1x32xf32, #tpu.memory_space<vmem>>, vector<1x32xf32>
    %cst = arith.constant dense<0.000000e+00> : vector<16xf32>
    %3 = vector.multi_reduction <add>, %0, %cst [1] : vector<16x32xf32> to vector<16xf32>
    %4 = vector.shape_cast %3 : vector<16xf32> to vector<16x1xf32>
    %cst_5 = arith.constant 3.200000e+01 : f32
    %5 = vector.broadcast %cst_5 : f32 to vector<16x1xf32>
    %6 = arith.divf %4, %5 : vector<16x1xf32>
    %7 = vector.broadcast %6 : vector<16x1xf32> to vector<16x32xf32>
    %8 = arith.subf %0, %7 : vector<16x32xf32>
    %9 = vector.broadcast %6 : vector<16x1xf32> to vector<16x32xf32>
    %10 = arith.subf %0, %9 : vector<16x32xf32>
    %11 = arith.mulf %8, %10 : vector<16x32xf32>
    %cst_6 = arith.constant dense<0.000000e+00> : vector<16xf32>
    %12 = vector.multi_reduction <add>, %11, %cst_6 [1] : vector<16x32xf32> to vector<16xf32>
    %13 = vector.shape_cast %12 : vector<16xf32> to vector<16x1xf32>
    %cst_7 = arith.constant 3.200000e+01 : f32
    %14 = vector.broadcast %cst_7 : f32 to vector<16x1xf32>
    %15 = arith.divf %13, %14 : vector<16x1xf32>
    %16 = vector.broadcast %6 : vector<16x1xf32> to vector<16x32xf32>
    %17 = arith.subf %0, %16 : vector<16x32xf32>
    %cst_8 = arith.constant 9.99999974E-6 : f32
    %18 = vector.broadcast %cst_8 : f32 to vector<16x1xf32>
    %19 = arith.addf %15, %18 : vector<16x1xf32>
    %20 = math.rsqrt %19 : vector<16x1xf32>
    %21 = vector.broadcast %20 : vector<16x1xf32> to vector<16x32xf32>
    %22 = arith.mulf %17, %21 : vector<16x32xf32>
    %23 = vector.broadcast %1 : vector<1x32xf32> to vector<16x32xf32>
    %24 = arith.mulf %22, %23 : vector<16x32xf32>
    %25 = vector.broadcast %2 : vector<1x32xf32> to vector<16x32xf32>
    %26 = arith.addf %24, %25 : vector<16x32xf32>
    %c0_9 = arith.constant 0 : index
    %c0_10 = arith.constant 0 : index
    %27 = vector.load %arg5[%c0_9, %c0_10] : memref<32x96xf32, #tpu.memory_space<vmem>>, vector<32x96xf32>
    %cst_11 = arith.constant dense<0.000000e+00> : vector<16x96xf32>
    %28 = tpu.matmul %26, %27, %cst_11 {dimension_numbers = #tpu.dot_dimension_numbers<[1], [0], [0], [1], [0, 0, 1, 1], [], []>} : vector<16x32xf32>, vector<32x96xf32>, vector<16x96xf32> -> vector<16x96xf32>
    %c0_12 = arith.constant 0 : index
    %c0_13 = arith.constant 0 : index
    %29 = vector.load %arg6[%c0_12, %c0_13] : memref<1x96xf32, #tpu.memory_space<vmem>>, vector<1x96xf32>
    %30 = vector.broadcast %29 : vector<1x96xf32> to vector<16x96xf32>
    %31 = arith.addf %28, %30 : vector<16x96xf32>
    %32 = vector.extract_strided_slice %31 {offsets = [0, 0], sizes = [16, 32], strides = [1, 1]} : vector<16x96xf32> to vector<16x32xf32>
    %33 = vector.extract_strided_slice %31 {offsets = [0, 32], sizes = [16, 32], strides = [1, 1]} : vector<16x96xf32> to vector<16x32xf32>
    %34 = vector.extract_strided_slice %31 {offsets = [0, 64], sizes = [16, 32], strides = [1, 1]} : vector<16x96xf32> to vector<16x32xf32>
    %cst_14 = arith.constant dense<0.000000e+00> : vector<16x16xf32>
    %35 = tpu.matmul %32, %33, %cst_14 {dimension_numbers = #tpu.dot_dimension_numbers<[1], [1], [0], [0], [0, 0, 1, 0], [], []>} : vector<16x32xf32>, vector<16x32xf32>, vector<16x16xf32> -> vector<16x16xf32>
    %cst_15 = arith.constant 0.176776692 : f32
    %36 = vector.broadcast %cst_15 : f32 to vector<16x16xf32>
    %37 = arith.mulf %35, %36 : vector<16x16xf32>
    %c0_16 = arith.constant 0 : index
    %c0_17 = arith.constant 0 : index
    %38 = vector.load %arg2[%c0_16, %c0_17] : memref<16x16xf32, #tpu.memory_space<vmem>>, vector<16x16xf32>
    %39 = arith.addf %37, %38 : vector<16x16xf32>
    %cst_18 = arith.constant dense<0xFF800000> : vector<16xf32>
    %40 = vector.multi_reduction <maximumf>, %39, %cst_18 [1] : vector<16x16xf32> to vector<16xf32>
    %41 = vector.shape_cast %40 : vector<16xf32> to vector<16x1xf32>
    %42 = vector.broadcast %41 : vector<16x1xf32> to vector<16x16xf32>
    %43 = arith.subf %39, %42 : vector<16x16xf32>
    %44 = math.exp %43 : vector<16x16xf32>
    %cst_19 = arith.constant dense<0.000000e+00> : vector<16xf32>
    %45 = vector.multi_reduction <add>, %44, %cst_19 [1] : vector<16x16xf32> to vector<16xf32>
    %46 = vector.shape_cast %45 : vector<16xf32> to vector<16x1xf32>
    %47 = tpu.reciprocal %46 {approx = true} : vector<16x1xf32> -> vector<16x1xf32>
    %48 = vector.broadcast %47 : vector<16x1xf32> to vector<16x16xf32>
    %49 = arith.mulf %44, %48 : vector<16x16xf32>
    %cst_20 = arith.constant dense<0.000000e+00> : vector<16x32xf32>
    %50 = tpu.matmul %49, %34, %cst_20 {dimension_numbers = #tpu.dot_dimension_numbers<[1], [0], [0], [1], [0, 0, 1, 1], [], []>} : vector<16x16xf32>, vector<16x32xf32>, vector<16x32xf32> -> vector<16x32xf32>
    %c0_21 = arith.constant 0 : index
    %c0_22 = arith.constant 0 : index
    %51 = vector.load %arg7[%c0_21, %c0_22] : memref<32x32xf32, #tpu.memory_space<vmem>>, vector<32x32xf32>
    %cst_23 = arith.constant dense<0.000000e+00> : vector<16x32xf32>
    %52 = tpu.matmul %50, %51, %cst_23 {dimension_numbers = #tpu.dot_dimension_numbers<[1], [0], [0], [1], [0, 0, 1, 1], [], []>} : vector<16x32xf32>, vector<32x32xf32>, vector<16x32xf32> -> vector<16x32xf32>
    %53 = arith.addf %26, %52 : vector<16x32xf32>
    %c0_24 = arith.constant 0 : index
    %c0_25 = arith.constant 0 : index
    %54 = vector.load %arg8[%c0_24, %c0_25] : memref<1x32xf32, #tpu.memory_space<vmem>>, vector<1x32xf32>
    %55 = vector.broadcast %54 : vector<1x32xf32> to vector<16x32xf32>
    %56 = arith.addf %53, %55 : vector<16x32xf32>
    %c0_26 = arith.constant 0 : index
    %c0_27 = arith.constant 0 : index
    %57 = vector.load %arg9[%c0_26, %c0_27] : memref<1x32xf32, #tpu.memory_space<vmem>>, vector<1x32xf32>
    %c0_28 = arith.constant 0 : index
    %c0_29 = arith.constant 0 : index
    %58 = vector.load %arg10[%c0_28, %c0_29] : memref<1x32xf32, #tpu.memory_space<vmem>>, vector<1x32xf32>
    %cst_30 = arith.constant dense<0.000000e+00> : vector<16xf32>
    %59 = vector.multi_reduction <add>, %56, %cst_30 [1] : vector<16x32xf32> to vector<16xf32>
    %60 = vector.shape_cast %59 : vector<16xf32> to vector<16x1xf32>
    %cst_31 = arith.constant 3.200000e+01 : f32
    %61 = vector.broadcast %cst_31 : f32 to vector<16x1xf32>
    %62 = arith.divf %60, %61 : vector<16x1xf32>
    %63 = vector.broadcast %62 : vector<16x1xf32> to vector<16x32xf32>
    %64 = arith.subf %56, %63 : vector<16x32xf32>
    %65 = vector.broadcast %62 : vector<16x1xf32> to vector<16x32xf32>
    %66 = arith.subf %56, %65 : vector<16x32xf32>
    %67 = arith.mulf %64, %66 : vector<16x32xf32>
    %cst_32 = arith.constant dense<0.000000e+00> : vector<16xf32>
    %68 = vector.multi_reduction <add>, %67, %cst_32 [1] : vector<16x32xf32> to vector<16xf32>
    %69 = vector.shape_cast %68 : vector<16xf32> to vector<16x1xf32>
    %cst_33 = arith.constant 3.200000e+01 : f32
    %70 = vector.broadcast %cst_33 : f32 to vector<16x1xf32>
    %71 = arith.divf %69, %70 : vector<16x1xf32>
    %72 = vector.broadcast %62 : vector<16x1xf32> to vector<16x32xf32>
    %73 = arith.subf %56, %72 : vector<16x32xf32>
    %cst_34 = arith.constant 9.99999974E-6 : f32
    %74 = vector.broadcast %cst_34 : f32 to vector<16x1xf32>
    %75 = arith.addf %71, %74 : vector<16x1xf32>
    %76 = math.rsqrt %75 : vector<16x1xf32>
    %77 = vector.broadcast %76 : vector<16x1xf32> to vector<16x32xf32>
    %78 = arith.mulf %73, %77 : vector<16x32xf32>
    %79 = vector.broadcast %57 : vector<1x32xf32> to vector<16x32xf32>
    %80 = arith.mulf %78, %79 : vector<16x32xf32>
    %81 = vector.broadcast %58 : vector<1x32xf32> to vector<16x32xf32>
    %82 = arith.addf %80, %81 : vector<16x32xf32>
    %c0_35 = arith.constant 0 : index
    %c0_36 = arith.constant 0 : index
    %83 = vector.load %arg11[%c0_35, %c0_36] : memref<32x128xf32, #tpu.memory_space<vmem>>, vector<32x128xf32>
    %cst_37 = arith.constant dense<0.000000e+00> : vector<16x128xf32>
    %84 = tpu.matmul %82, %83, %cst_37 {dimension_numbers = #tpu.dot_dimension_numbers<[1], [0], [0], [1], [0, 0, 1, 1], [], []>} : vector<16x32xf32>, vector<32x128xf32>, vector<16x128xf32> -> vector<16x128xf32>
    %c0_38 = arith.constant 0 : index
    %c0_39 = arith.constant 0 : index
    %85 = vector.load %arg12[%c0_38, %c0_39] : memref<1x128xf32, #tpu.memory_space<vmem>>, vector<1x128xf32>
    %86 = vector.broadcast %85 : vector<1x128xf32> to vector<16x128xf32>
    %87 = arith.addf %84, %86 : vector<16x128xf32>
    %cst_40 = arith.constant 0.000000e+00 : f32
    %88 = vector.broadcast %cst_40 : f32 to vector<16x128xf32>
    %89 = arith.maximumf %87, %88 : vector<16x128xf32>
    %c0_41 = arith.constant 0 : index
    %c0_42 = arith.constant 0 : index
    %90 = vector.load %arg13[%c0_41, %c0_42] : memref<128x32xf32, #tpu.memory_space<vmem>>, vector<128x32xf32>
    %cst_43 = arith.constant dense<0.000000e+00> : vector<16x32xf32>
    %91 = tpu.matmul %89, %90, %cst_43 {dimension_numbers = #tpu.dot_dimension_numbers<[1], [0], [0], [1], [0, 0, 1, 1], [], []>} : vector<16x128xf32>, vector<128x32xf32>, vector<16x32xf32> -> vector<16x32xf32>
    %c0_44 = arith.constant 0 : index
    %c0_45 = arith.constant 0 : index
    %92 = vector.load %arg14[%c0_44, %c0_45] : memref<1x32xf32, #tpu.memory_space<vmem>>, vector<1x32xf32>
    %93 = vector.broadcast %92 : vector<1x32xf32> to vector<16x32xf32>
    %94 = arith.addf %91, %93 : vector<16x32xf32>
    %95 = arith.addf %82, %94 : vector<16x32xf32>
    %c0_46 = arith.constant 0 : index
    %c0_47 = arith.constant 0 : index
    %96 = vector.load %arg15[%c0_46, %c0_47] : memref<1x32xf32, #tpu.memory_space<vmem>>, vector<1x32xf32>
    %c0_48 = arith.constant 0 : index
    %c0_49 = arith.constant 0 : index
    %97 = vector.load %arg16[%c0_48, %c0_49] : memref<1x32xf32, #tpu.memory_space<vmem>>, vector<1x32xf32>
    %cst_50 = arith.constant dense<0.000000e+00> : vector<16xf32>
    %98 = vector.multi_reduction <add>, %95, %cst_50 [1] : vector<16x32xf32> to vector<16xf32>
    %99 = vector.shape_cast %98 : vector<16xf32> to vector<16x1xf32>
    %cst_51 = arith.constant 3.200000e+01 : f32
    %100 = vector.broadcast %cst_51 : f32 to vector<16x1xf32>
    %101 = arith.divf %99, %100 : vector<16x1xf32>
    %102 = vector.broadcast %101 : vector<16x1xf32> to vector<16x32xf32>
    %103 = arith.subf %95, %102 : vector<16x32xf32>
    %104 = vector.broadcast %101 : vector<16x1xf32> to vector<16x32xf32>
    %105 = arith.subf %95, %104 : vector<16x32xf32>
    %106 = arith.mulf %103, %105 : vector<16x32xf32>
    %cst_52 = arith.constant dense<0.000000e+00> : vector<16xf32>
    %107 = vector.multi_reduction <add>, %106, %cst_52 [1] : vector<16x32xf32> to vector<16xf32>
    %108 = vector.shape_cast %107 : vector<16xf32> to vector<16x1xf32>
    %cst_53 = arith.constant 3.200000e+01 : f32
    %109 = vector.broadcast %cst_53 : f32 to vector<16x1xf32>
    %110 = arith.divf %108, %109 : vector<16x1xf32>
    %111 = vector.broadcast %101 : vector<16x1xf32> to vector<16x32xf32>
    %112 = arith.subf %95, %111 : vector<16x32xf32>
    %cst_54 = arith.constant 9.99999974E-6 : f32
    %113 = vector.broadcast %cst_54 : f32 to vector<16x1xf32>
    %114 = arith.addf %110, %113 : vector<16x1xf32>
    %115 = math.rsqrt %114 : vector<16x1xf32>
    %116 = vector.broadcast %115 : vector<16x1xf32> to vector<16x32xf32>
    %117 = arith.mulf %112, %116 : vector<16x32xf32>
    %118 = vector.broadcast %96 : vector<1x32xf32> to vector<16x32xf32>
    %119 = arith.mulf %117, %118 : vector<16x32xf32>
    %120 = vector.broadcast %97 : vector<1x32xf32> to vector<16x32xf32>
    %121 = arith.addf %119, %120 : vector<16x32xf32>
    %c0_55 = arith.constant 0 : index
    %c0_56 = arith.constant 0 : index
    %122 = vector.load %arg17[%c0_55, %c0_56] : memref<16x32xf32, #tpu.memory_space<vmem>>, vector<16x32xf32>
    tpu.vector_store %arg17[%c0_55, %c0_56], %121 {strides = array<i32>} : memref<16x32xf32, #tpu.memory_space<vmem>>, vector<16x32xf32>,
    return
  }
  func.func @transform_0(%arg0: i32) -> (i32, i32) {
    %c0_i32 = arith.constant 0 : i32
    %c0_i32_0 = arith.constant 0 : i32
    %c0_i32_1 = arith.constant 0 : i32
    return %c0_i32, %c0_i32_0 : i32, i32
  }
  func.func @transform_1(%arg0: i32) -> (i32, i32) {
    %c0_i32 = arith.constant 0 : i32
    %c0_i32_0 = arith.constant 0 : i32
    %c0_i32_1 = arith.constant 0 : i32
    return %c0_i32, %c0_i32_0 : i32, i32
  }
  func.func @transform_2(%arg0: i32) -> (i32, i32) {
    %c0_i32 = arith.constant 0 : i32
    %c0_i32_0 = arith.constant 0 : i32
    %c0_i32_1 = arith.constant 0 : i32
    return %c0_i32, %c0_i32_0 : i32, i32
  }
  func.func @transform_3(%arg0: i32) -> (i32, i32) {
    %c0_i32 = arith.constant 0 : i32
    %c0_i32_0 = arith.constant 0 : i32
    %c0_i32_1 = arith.constant 0 : i32
    return %c0_i32, %c0_i32_0 : i32, i32
  }
  func.func @transform_4(%arg0: i32) -> (i32, i32) {
    %c0_i32 = arith.constant 0 : i32
    %c0_i32_0 = arith.constant 0 : i32
    %c0_i32_1 = arith.constant 0 : i32
    return %c0_i32, %c0_i32_0 : i32, i32
  }
  func.func @transform_5(%arg0: i32) -> (i32, i32) {
    %c0_i32 = arith.constant 0 : i32
    %c0_i32_0 = arith.constant 0 : i32
    %c0_i32_1 = arith.constant 0 : i32
    return %c0_i32, %c0_i32_0 : i32, i32
  }
  func.func @transform_6(%arg0: i32) -> (i32, i32) {
    %c0_i32 = arith.constant 0 : i32
    %c0_i32_0 = arith.constant 0 : i32
    %c0_i32_1 = arith.constant 0 : i32
    return %c0_i32, %c0_i32_0 : i32, i32
  }
  func.func @transform_7(%arg0: i32) -> (i32, i32) {
    %c0_i32 = arith.constant 0 : i32
    %c0_i32_0 = arith.constant 0 : i32
    %c0_i32_1 = arith.constant 0 : i32
    return %c0_i32, %c0_i32_0 : i32, i32
  }
  func.func @transform_8(%arg0: i32) -> (i32, i32) {
    %c0_i32 = arith.constant 0 : i32
    %c0_i32_0 = arith.constant 0 : i32
    %c0_i32_1 = arith.constant 0 : i32
    return %c0_i32, %c0_i32_0 : i32, i32
  }
  func.func @transform_9(%arg0: i32) -> (i32, i32) {
    %c0_i32 = arith.constant 0 : i32
    %c0_i32_0 = arith.constant 0 : i32
    %c0_i32_1 = arith.constant 0 : i32
    return %c0_i32, %c0_i32_0 : i32, i32
  }
  func.func @transform_10(%arg0: i32) -> (i32, i32) {
    %c0_i32 = arith.constant 0 : i32
    %c0_i32_0 = arith.constant 0 : i32
    %c0_i32_1 = arith.constant 0 : i32
    return %c0_i32, %c0_i32_0 : i32, i32
  }
  func.func @transform_11(%arg0: i32) -> (i32, i32) {
    %c0_i32 = arith.constant 0 : i32
    %c0_i32_0 = arith.constant 0 : i32
    %c0_i32_1 = arith.constant 0 : i32
    return %c0_i32, %c0_i32_0 : i32, i32
  }
  func.func @transform_12(%arg0: i32) -> (i32, i32) {
    %c0_i32 = arith.constant 0 : i32
    %c0_i32_0 = arith.constant 0 : i32
    %c0_i32_1 = arith.constant 0 : i32
    return %c0_i32, %c0_i32_0 : i32, i32
  }
  func.func @transform_13(%arg0: i32) -> (i32, i32) {
    %c0_i32 = arith.constant 0 : i32
    %c0_i32_0 = arith.constant 0 : i32
    %c0_i32_1 = arith.constant 0 : i32
    return %c0_i32, %c0_i32_0 : i32, i32
  }
  func.func @transform_14(%arg0: i32) -> (i32, i32) {
    %c0_i32 = arith.constant 0 : i32
    %c0_i32_0 = arith.constant 0 : i32
    %c0_i32_1 = arith.constant 0 : i32
    return %c0_i32, %c0_i32_0 : i32, i32
  }
  func.func @transform_15(%arg0: i32) -> (i32, i32) {
    %c0_i32 = arith.constant 0 : i32
    %c0_i32_0 = arith.constant 0 : i32
    %c0_i32_1 = arith.constant 0 : i32
    return %c0_i32, %c0_i32_0 : i32, i32
  }
  func.func @transform_16(%arg0: i32) -> (i32, i32) {
    %c0_i32 = arith.constant 0 : i32
    %c0_i32_0 = arith.constant 0 : i32
    %c0_i32_1 = arith.constant 0 : i32
    return %c0_i32, %c0_i32_0 : i32, i32
  }
}

module attributes {stable_mosaic.version = 11 : i64} {
  func.func @_graph1_kernel(%arg0: i32, %arg1: memref<1x8x32xf32, #tpu.memory_space<vmem>>, %arg2: memref<1x8x8xf32, #tpu.memory_space<vmem>>, %arg3: memref<32x32xf32, #tpu.memory_space<vmem>>, %arg4: memref<1x32xf32, #tpu.memory_space<vmem>>, %arg5: memref<32x32xf32, #tpu.memory_space<vmem>>, %arg6: memref<1x32xf32, #tpu.memory_space<vmem>>, %arg7: memref<32x32xf32, #tpu.memory_space<vmem>>, %arg8: memref<1x32xf32, #tpu.memory_space<vmem>>, %arg9: memref<32x32xf32, #tpu.memory_space<vmem>>, %arg10: memref<1x32xf32, #tpu.memory_space<vmem>>, %arg11: memref<32x32xf32, #tpu.memory_space<vmem>>, %arg12: memref<1x32xf32, #tpu.memory_space<vmem>>, %arg13: memref<1x8x32xf32, #tpu.memory_space<vmem>>) attributes {dimension_semantics = [#tpu.dimension_semantics<parallel>], iteration_bounds = array<i64: 2>, scalar_prefetch = 0 : i64, scratch_operands = 0 : i64, tpu.core_type = #tpu.core_type<tc>, window_params = [{transform_indices = @transform_0, window_bounds = array<i64: 1, 8, 32>}, {transform_indices = @transform_1, window_bounds = array<i64: 1, 8, 8>}, {pipeline_mode = #tpu.pipeline_mode<synchronous>, transform_indices = @transform_2, window_bounds = array<i64: 32, 32>}, {pipeline_mode = #tpu.pipeline_mode<synchronous>, transform_indices = @transform_3, window_bounds = array<i64: 1, 32>}, {pipeline_mode = #tpu.pipeline_mode<synchronous>, transform_indices = @transform_4, window_bounds = array<i64: 32, 32>}, {pipeline_mode = #tpu.pipeline_mode<synchronous>, transform_indices = @transform_5, window_bounds = array<i64: 1, 32>}, {pipeline_mode = #tpu.pipeline_mode<synchronous>, transform_indices = @transform_6, window_bounds = array<i64: 32, 32>}, {pipeline_mode = #tpu.pipeline_mode<synchronous>, transform_indices = @transform_7, window_bounds = array<i64: 1, 32>}, {pipeline_mode = #tpu.pipeline_mode<synchronous>, transform_indices = @transform_8, window_bounds = array<i64: 32, 32>}, {pipeline_mode = #tpu.pipeline_mode<synchronous>, transform_indices = @transform_9, window_bounds = array<i64: 1, 32>}, {pipeline_mode = #tpu.pipeline_mode<synchronous>, transform_indices = @transform_10, window_bounds = array<i64: 32, 32>}, {pipeline_mode = #tpu.pipeline_mode<synchronous>, transform_indices = @transform_11, window_bounds = array<i64: 1, 32>}, {transform_indices = @transform_12, window_bounds = array<i64: 1, 8, 32>}]} {
    %c0 = arith.constant 0 : index
    %c0_0 = arith.constant 0 : index
    %c0_1 = arith.constant 0 : index
    %0 = vector.load %arg1[%c0, %c0_0, %c0_1] : memref<1x8x32xf32, #tpu.memory_space<vmem>>, vector<1x8x32xf32>
    %1 = vector.shape_cast %0 : vector<1x8x32xf32> to vector<8x32xf32>
    %c0_2 = arith.constant 0 : index
    %c0_3 = arith.constant 0 : index
    %c0_4 = arith.constant 0 : index
    %2 = vector.load %arg2[%c0_2, %c0_3, %c0_4] : memref<1x8x8xf32, #tpu.memory_space<vmem>>, vector<1x8x8xf32>
    %3 = vector.shape_cast %2 : vector<1x8x8xf32> to vector<8x8xf32>
    %c0_5 = arith.constant 0 : index
    %c0_6 = arith.constant 0 : index
    %4 = vector.load %arg3[%c0_5, %c0_6] : memref<32x32xf32, #tpu.memory_space<vmem>>, vector<32x32xf32>
    %cst = arith.constant dense<0.000000e+00> : vector<8x32xf32>
    %5 = tpu.matmul %1, %4, %cst {dimension_numbers = #tpu.dot_dimension_numbers<[1], [0], [0], [1], [0, 0, 1, 1], [], []>} : vector<8x32xf32>, vector<32x32xf32>, vector<8x32xf32> -> vector<8x32xf32>
    %cst_7 = arith.constant dense<0.000000e+00> : vector<8x32xf32>
    %6 = tpu.matmul %3, %5, %cst_7 {dimension_numbers = #tpu.dot_dimension_numbers<[1], [0], [0], [1], [0, 0, 1, 1], [], []>} : vector<8x8xf32>, vector<8x32xf32>, vector<8x32xf32> -> vector<8x32xf32>
    %c0_8 = arith.constant 0 : index
    %c0_9 = arith.constant 0 : index
    %7 = vector.load %arg4[%c0_8, %c0_9] : memref<1x32xf32, #tpu.memory_space<vmem>>, vector<1x32xf32>
    %8 = vector.broadcast %7 : vector<1x32xf32> to vector<8x32xf32>
    %9 = arith.addf %6, %8 : vector<8x32xf32>
    %cst_10 = arith.constant 0.000000e+00 : f32
    %10 = vector.broadcast %cst_10 : f32 to vector<8x32xf32>
    %11 = arith.maximumf %9, %10 : vector<8x32xf32>
    %c0_11 = arith.constant 0 : index
    %c0_12 = arith.constant 0 : index
    %12 = vector.load %arg5[%c0_11, %c0_12] : memref<32x32xf32, #tpu.memory_space<vmem>>, vector<32x32xf32>
    %cst_13 = arith.constant dense<0.000000e+00> : vector<8x32xf32>
    %13 = tpu.matmul %11, %12, %cst_13 {dimension_numbers = #tpu.dot_dimension_numbers<[1], [0], [0], [1], [0, 0, 1, 1], [], []>} : vector<8x32xf32>, vector<32x32xf32>, vector<8x32xf32> -> vector<8x32xf32>
    %cst_14 = arith.constant dense<0.000000e+00> : vector<8x32xf32>
    %14 = tpu.matmul %3, %13, %cst_14 {dimension_numbers = #tpu.dot_dimension_numbers<[1], [0], [0], [1], [0, 0, 1, 1], [], []>} : vector<8x8xf32>, vector<8x32xf32>, vector<8x32xf32> -> vector<8x32xf32>
    %c0_15 = arith.constant 0 : index
    %c0_16 = arith.constant 0 : index
    %15 = vector.load %arg6[%c0_15, %c0_16] : memref<1x32xf32, #tpu.memory_space<vmem>>, vector<1x32xf32>
    %16 = vector.broadcast %15 : vector<1x32xf32> to vector<8x32xf32>
    %17 = arith.addf %14, %16 : vector<8x32xf32>
    %cst_17 = arith.constant dense<0.000000e+00> : vector<8x8xf32>
    %18 = tpu.matmul %17, %17, %cst_17 {dimension_numbers = #tpu.dot_dimension_numbers<[1], [1], [0], [0], [0, 0, 1, 0], [], []>} : vector<8x32xf32>, vector<8x32xf32>, vector<8x8xf32> -> vector<8x8xf32>
    %19 = arith.negf %18 : vector<8x8xf32>
    %20 = math.exp %19 : vector<8x8xf32>
    %cst_18 = arith.constant 1.000000e+00 : f32
    %21 = vector.broadcast %cst_18 : f32 to vector<8x8xf32>
    %22 = arith.addf %21, %20 : vector<8x8xf32>
    %23 = arith.divf %21, %22 : vector<8x8xf32>
    %c0_19 = arith.constant 0 : index
    %c0_20 = arith.constant 0 : index
    %24 = vector.load %arg7[%c0_19, %c0_20] : memref<32x32xf32, #tpu.memory_space<vmem>>, vector<32x32xf32>
    %cst_21 = arith.constant dense<0.000000e+00> : vector<8x32xf32>
    %25 = tpu.matmul %1, %24, %cst_21 {dimension_numbers = #tpu.dot_dimension_numbers<[1], [0], [0], [1], [0, 0, 1, 1], [], []>} : vector<8x32xf32>, vector<32x32xf32>, vector<8x32xf32> -> vector<8x32xf32>
    %c0_22 = arith.constant 0 : index
    %c0_23 = arith.constant 0 : index
    %26 = vector.load %arg9[%c0_22, %c0_23] : memref<32x32xf32, #tpu.memory_space<vmem>>, vector<32x32xf32>
    %cst_24 = arith.constant dense<0.000000e+00> : vector<8x32xf32>
    %27 = tpu.matmul %1, %26, %cst_24 {dimension_numbers = #tpu.dot_dimension_numbers<[1], [0], [0], [1], [0, 0, 1, 1], [], []>} : vector<8x32xf32>, vector<32x32xf32>, vector<8x32xf32> -> vector<8x32xf32>
    %c0_25 = arith.constant 0 : index
    %c0_26 = arith.constant 0 : index
    %28 = vector.load %arg10[%c0_25, %c0_26] : memref<1x32xf32, #tpu.memory_space<vmem>>, vector<1x32xf32>
    %29 = vector.broadcast %28 : vector<1x32xf32> to vector<8x32xf32>
    %30 = arith.addf %27, %29 : vector<8x32xf32>
    %c0_27 = arith.constant 0 : index
    %c0_28 = arith.constant 0 : index
    %31 = vector.load %arg8[%c0_27, %c0_28] : memref<1x32xf32, #tpu.memory_space<vmem>>, vector<1x32xf32>
    %cst_29 = arith.constant dense<0.000000e+00> : vector<1x8xf32>
    %32 = tpu.matmul %31, %25, %cst_29 {dimension_numbers = #tpu.dot_dimension_numbers<[1], [1], [0], [0], [0, 0, 1, 0], [], []>} : vector<1x32xf32>, vector<8x32xf32>, vector<1x8xf32> -> vector<1x8xf32>
    %cst_30 = arith.constant 0.000000e+00 : f32
    %33 = vector.broadcast %cst_30 : f32 to vector<1x8xf32>
    %34 = arith.cmpf oge, %32, %33 : vector<1x8xf32>
    %cst_31 = arith.constant 1.000000e-01 : f32
    %35 = vector.broadcast %cst_31 : f32 to vector<1x8xf32>
    %36 = arith.mulf %35, %32 : vector<1x8xf32>
    %37 = arith.select %34, %32, %36 : vector<1x8xi1>, vector<1x8xf32>
    %cst_32 = arith.constant 0.000000e+00 : f32
    %38 = vector.broadcast %cst_32 : f32 to vector<8x8xf32>
    %39 = arith.cmpf ogt, %23, %38 : vector<8x8xf32>
    %cst_33 = arith.constant -1.000000e+09 : f32
    %40 = vector.shape_cast %37 : vector<1x8xf32> to vector<1x8xf32>
    %41 = vector.broadcast %40 : vector<1x8xf32> to vector<8x8xf32>
    %42 = vector.broadcast %cst_33 : f32 to vector<8x8xf32>
    %43 = arith.select %39, %41, %42 : vector<8x8xi1>, vector<8x8xf32>
    %cst_34 = arith.constant dense<0xFF800000> : vector<8xf32>
    %44 = vector.multi_reduction <maximumf>, %43, %cst_34 [1] : vector<8x8xf32> to vector<8xf32>
    %45 = vector.shape_cast %44 : vector<8xf32> to vector<8x1xf32>
    %46 = vector.broadcast %45 : vector<8x1xf32> to vector<8x8xf32>
    %47 = arith.subf %43, %46 : vector<8x8xf32>
    %48 = math.exp %47 : vector<8x8xf32>
    %cst_35 = arith.constant dense<0.000000e+00> : vector<8xf32>
    %49 = vector.multi_reduction <add>, %48, %cst_35 [1] : vector<8x8xf32> to vector<8xf32>
    %50 = vector.shape_cast %49 : vector<8xf32> to vector<8x1xf32>
    %51 = tpu.reciprocal %50 {approx = true} : vector<8x1xf32> -> vector<8x1xf32>
    %52 = vector.broadcast %51 : vector<8x1xf32> to vector<8x8xf32>
    %53 = arith.mulf %48, %52 : vector<8x8xf32>
    %cst_36 = arith.constant dense<0.000000e+00> : vector<8x32xf32>
    %54 = tpu.matmul %53, %30, %cst_36 {dimension_numbers = #tpu.dot_dimension_numbers<[1], [0], [0], [1], [0, 0, 1, 1], [], []>} : vector<8x8xf32>, vector<8x32xf32>, vector<8x32xf32> -> vector<8x32xf32>
    %c0_37 = arith.constant 0 : index
    %c0_38 = arith.constant 0 : index
    %55 = vector.load %arg11[%c0_37, %c0_38] : memref<32x32xf32, #tpu.memory_space<vmem>>, vector<32x32xf32>
    %cst_39 = arith.constant dense<0.000000e+00> : vector<8x32xf32>
    %56 = tpu.matmul %54, %55, %cst_39 {dimension_numbers = #tpu.dot_dimension_numbers<[1], [0], [0], [1], [0, 0, 1, 1], [], []>} : vector<8x32xf32>, vector<32x32xf32>, vector<8x32xf32> -> vector<8x32xf32>
    %c0_40 = arith.constant 0 : index
    %c0_41 = arith.constant 0 : index
    %57 = vector.load %arg12[%c0_40, %c0_41] : memref<1x32xf32, #tpu.memory_space<vmem>>, vector<1x32xf32>
    %cst_42 = arith.constant dense<0.000000e+00> : vector<1x8xf32>
    %58 = tpu.matmul %57, %56, %cst_42 {dimension_numbers = #tpu.dot_dimension_numbers<[1], [1], [0], [0], [0, 0, 1, 0], [], []>} : vector<1x32xf32>, vector<8x32xf32>, vector<1x8xf32> -> vector<1x8xf32>
    %cst_43 = arith.constant 0.000000e+00 : f32
    %59 = vector.broadcast %cst_43 : f32 to vector<1x8xf32>
    %60 = arith.cmpf oge, %58, %59 : vector<1x8xf32>
    %cst_44 = arith.constant 1.000000e-01 : f32
    %61 = vector.broadcast %cst_44 : f32 to vector<1x8xf32>
    %62 = arith.mulf %61, %58 : vector<1x8xf32>
    %63 = arith.select %60, %58, %62 : vector<1x8xi1>, vector<1x8xf32>
    %cst_45 = arith.constant 0.000000e+00 : f32
    %64 = vector.broadcast %cst_45 : f32 to vector<8x8xf32>
    %65 = arith.cmpf ogt, %23, %64 : vector<8x8xf32>
    %cst_46 = arith.constant -1.000000e+09 : f32
    %66 = vector.shape_cast %63 : vector<1x8xf32> to vector<1x8xf32>
    %67 = vector.broadcast %66 : vector<1x8xf32> to vector<8x8xf32>
    %68 = vector.broadcast %cst_46 : f32 to vector<8x8xf32>
    %69 = arith.select %65, %67, %68 : vector<8x8xi1>, vector<8x8xf32>
    %cst_47 = arith.constant dense<0xFF800000> : vector<8xf32>
    %70 = vector.multi_reduction <maximumf>, %69, %cst_47 [1] : vector<8x8xf32> to vector<8xf32>
    %71 = vector.shape_cast %70 : vector<8xf32> to vector<8x1xf32>
    %72 = vector.broadcast %71 : vector<8x1xf32> to vector<8x8xf32>
    %73 = arith.subf %69, %72 : vector<8x8xf32>
    %74 = math.exp %73 : vector<8x8xf32>
    %cst_48 = arith.constant dense<0.000000e+00> : vector<8xf32>
    %75 = vector.multi_reduction <add>, %74, %cst_48 [1] : vector<8x8xf32> to vector<8xf32>
    %76 = vector.shape_cast %75 : vector<8xf32> to vector<8x1xf32>
    %77 = tpu.reciprocal %76 {approx = true} : vector<8x1xf32> -> vector<8x1xf32>
    %78 = vector.broadcast %77 : vector<8x1xf32> to vector<8x8xf32>
    %79 = arith.mulf %74, %78 : vector<8x8xf32>
    %cst_49 = arith.constant dense<0.000000e+00> : vector<8x32xf32>
    %80 = tpu.matmul %79, %54, %cst_49 {dimension_numbers = #tpu.dot_dimension_numbers<[1], [0], [0], [1], [0, 0, 1, 1], [], []>} : vector<8x8xf32>, vector<8x32xf32>, vector<8x32xf32> -> vector<8x32xf32>
    %cst_50 = arith.constant 0.000000e+00 : f32
    %81 = vector.broadcast %cst_50 : f32 to vector<8x32xf32>
    %82 = arith.cmpf ogt, %80, %81 : vector<8x32xf32>
    %cst_51 = arith.constant 0.000000e+00 : f32
    %83 = vector.broadcast %cst_51 : f32 to vector<8x32xf32>
    %84 = arith.minimumf %80, %83 : vector<8x32xf32>
    %85 = math.exp %84 : vector<8x32xf32>
    %cst_52 = arith.constant 1.000000e+00 : f32
    %86 = vector.broadcast %cst_52 : f32 to vector<8x32xf32>
    %87 = arith.subf %85, %86 : vector<8x32xf32>
    %88 = arith.select %82, %80, %87 : vector<8x32xi1>, vector<8x32xf32>
    %c0_53 = arith.constant 0 : index
    %c0_54 = arith.constant 0 : index
    %c0_55 = arith.constant 0 : index
    %89 = vector.load %arg13[%c0_53, %c0_54, %c0_55] : memref<1x8x32xf32, #tpu.memory_space<vmem>>, vector<1x8x32xf32>
    %90 = vector.shape_cast %89 : vector<1x8x32xf32> to vector<8x32xf32>
    %91 = vector.shape_cast %88 : vector<8x32xf32> to vector<1x8x32xf32>
    tpu.vector_store %arg13[%c0_53, %c0_54, %c0_55], %91 {strides = array<i32>} : memref<1x8x32xf32, #tpu.memory_space<vmem>>, vector<1x8x32xf32>,
    return
  }
  func.func @transform_0(%arg0: i32) -> (i32, i32, i32) {
    %c0_i32 = arith.constant 0 : i32
    %c0_i32_0 = arith.constant 0 : i32
    %c0_i32_1 = arith.constant 0 : i32
    return %arg0, %c0_i32, %c0_i32_0 : i32, i32, i32
  }
  func.func @transform_1(%arg0: i32) -> (i32, i32, i32) {
    %c0_i32 = arith.constant 0 : i32
    %c0_i32_0 = arith.constant 0 : i32
    %c0_i32_1 = arith.constant 0 : i32
    return %arg0, %c0_i32, %c0_i32_0 : i32, i32, i32
  }
  func.func @transform_2(%arg0: i32) -> (i32, i32) {
    %c0_i32 = arith.constant 0 : i32
    %c0_i32_0 = arith.constant 0 : i32
    %c0_i32_1 = arith.constant 0 : i32
    return %c0_i32, %c0_i32_0 : i32, i32
  }
  func.func @transform_3(%arg0: i32) -> (i32, i32) {
    %c0_i32 = arith.constant 0 : i32
    %c0_i32_0 = arith.constant 0 : i32
    %c0_i32_1 = arith.constant 0 : i32
    return %c0_i32, %c0_i32_0 : i32, i32
  }
  func.func @transform_4(%arg0: i32) -> (i32, i32) {
    %c0_i32 = arith.constant 0 : i32
    %c0_i32_0 = arith.constant 0 : i32
    %c0_i32_1 = arith.constant 0 : i32
    return %c0_i32, %c0_i32_0 : i32, i32
  }
  func.func @transform_5(%arg0: i32) -> (i32, i32) {
    %c0_i32 = arith.constant 0 : i32
    %c0_i32_0 = arith.constant 0 : i32
    %c0_i32_1 = arith.constant 0 : i32
    return %c0_i32, %c0_i32_0 : i32, i32
  }
  func.func @transform_6(%arg0: i32) -> (i32, i32) {
    %c0_i32 = arith.constant 0 : i32
    %c0_i32_0 = arith.constant 0 : i32
    %c0_i32_1 = arith.constant 0 : i32
    return %c0_i32, %c0_i32_0 : i32, i32
  }
  func.func @transform_7(%arg0: i32) -> (i32, i32) {
    %c0_i32 = arith.constant 0 : i32
    %c0_i32_0 = arith.constant 0 : i32
    %c0_i32_1 = arith.constant 0 : i32
    return %c0_i32, %c0_i32_0 : i32, i32
  }
  func.func @transform_8(%arg0: i32) -> (i32, i32) {
    %c0_i32 = arith.constant 0 : i32
    %c0_i32_0 = arith.constant 0 : i32
    %c0_i32_1 = arith.constant 0 : i32
    return %c0_i32, %c0_i32_0 : i32, i32
  }
  func.func @transform_9(%arg0: i32) -> (i32, i32) {
    %c0_i32 = arith.constant 0 : i32
    %c0_i32_0 = arith.constant 0 : i32
    %c0_i32_1 = arith.constant 0 : i32
    return %c0_i32, %c0_i32_0 : i32, i32
  }
  func.func @transform_10(%arg0: i32) -> (i32, i32) {
    %c0_i32 = arith.constant 0 : i32
    %c0_i32_0 = arith.constant 0 : i32
    %c0_i32_1 = arith.constant 0 : i32
    return %c0_i32, %c0_i32_0 : i32, i32
  }
  func.func @transform_11(%arg0: i32) -> (i32, i32) {
    %c0_i32 = arith.constant 0 : i32
    %c0_i32_0 = arith.constant 0 : i32
    %c0_i32_1 = arith.constant 0 : i32
    return %c0_i32, %c0_i32_0 : i32, i32
  }
  func.func @transform_12(%arg0: i32) -> (i32, i32, i32) {
    %c0_i32 = arith.constant 0 : i32
    %c0_i32_0 = arith.constant 0 : i32
    %c0_i32_1 = arith.constant 0 : i32
    return %arg0, %c0_i32, %c0_i32_0 : i32, i32, i32
  }
}

module attributes {stable_mosaic.version = 11 : i64} {
  func.func @_caps_pred_kernel(%arg0: i32, %arg1: memref<16x32xf32, #tpu.memory_space<vmem>>, %arg2: memref<32x96xf32, #tpu.memory_space<vmem>>, %arg3: memref<32x4xf32, #tpu.memory_space<vmem>>, %arg4: memref<1x4xf32, #tpu.memory_space<vmem>>, %arg5: memref<2x4xf32, #tpu.memory_space<vmem>>) attributes {dimension_semantics = [#tpu.dimension_semantics<arbitrary>], iteration_bounds = array<i64: 1>, scalar_prefetch = 0 : i64, scratch_operands = 0 : i64, tpu.core_type = #tpu.core_type<tc>, window_params = [{pipeline_mode = #tpu.pipeline_mode<synchronous>, transform_indices = @transform_0, window_bounds = array<i64: 16, 32>}, {pipeline_mode = #tpu.pipeline_mode<synchronous>, transform_indices = @transform_1, window_bounds = array<i64: 32, 96>}, {pipeline_mode = #tpu.pipeline_mode<synchronous>, transform_indices = @transform_2, window_bounds = array<i64: 32, 4>}, {pipeline_mode = #tpu.pipeline_mode<synchronous>, transform_indices = @transform_3, window_bounds = array<i64: 1, 4>}, {pipeline_mode = #tpu.pipeline_mode<synchronous>, transform_indices = @transform_4, window_bounds = array<i64: 2, 4>}]} {
    %c0 = arith.constant 0 : index
    %c0_0 = arith.constant 0 : index
    %0 = vector.load %arg1[%c0, %c0_0] : memref<16x32xf32, #tpu.memory_space<vmem>>, vector<16x32xf32>
    %c0_1 = arith.constant 0 : index
    %c0_2 = arith.constant 0 : index
    %1 = vector.load %arg2[%c0_1, %c0_2] : memref<32x96xf32, #tpu.memory_space<vmem>>, vector<32x96xf32>
    %cst = arith.constant dense<0.000000e+00> : vector<16x96xf32>
    %2 = tpu.matmul %0, %1, %cst {dimension_numbers = #tpu.dot_dimension_numbers<[1], [0], [0], [1], [0, 0, 1, 1], [], []>} : vector<16x32xf32>, vector<32x96xf32>, vector<16x96xf32> -> vector<16x96xf32>
    %3 = tpu.iota {dimensions = array<i32: 0>} : vector<2x1xi32>
    %cst_3 = arith.constant 0.000000e+00 : f32
    %4 = vector.broadcast %cst_3 : f32 to vector<2x32xf32>
    %5 = vector.extract_strided_slice %2 {offsets = [0, 0], sizes = [8, 96], strides = [1, 1]} : vector<16x96xf32> to vector<8x96xf32>
    %cst_4 = arith.constant 0.000000e+00 : f32
    %6 = vector.broadcast %cst_4 : f32 to vector<8x3xf32>
    %cst_5 = arith.constant dense<0xFF800000> : vector<8xf32>
    %7 = vector.multi_reduction <maximumf>, %6, %cst_5 [1] : vector<8x3xf32> to vector<8xf32>
    %8 = vector.shape_cast %7 : vector<8xf32> to vector<8x1xf32>
    %9 = vector.broadcast %8 : vector<8x1xf32> to vector<8x3xf32>
    %10 = arith.subf %6, %9 : vector<8x3xf32>
    %11 = math.exp %10 : vector<8x3xf32>
    %cst_6 = arith.constant dense<0.000000e+00> : vector<8xf32>
    %12 = vector.multi_reduction <add>, %11, %cst_6 [1] : vector<8x3xf32> to vector<8xf32>
    %13 = vector.shape_cast %12 : vector<8xf32> to vector<8x1xf32>
    %14 = tpu.reciprocal %13 {approx = true} : vector<8x1xf32> -> vector<8x1xf32>
    %15 = vector.broadcast %14 : vector<8x1xf32> to vector<8x3xf32>
    %16 = arith.mulf %11, %15 : vector<8x3xf32>
    %17 = vector.extract_strided_slice %5 {offsets = [0, 0], sizes = [8, 32], strides = [1, 1]} : vector<8x96xf32> to vector<8x32xf32>
    %18 = vector.extract_strided_slice %16 {offsets = [0, 0], sizes = [8, 1], strides = [1, 1]} : vector<8x3xf32> to vector<8x1xf32>
    %19 = vector.broadcast %18 : vector<8x1xf32> to vector<8x32xf32>
    %20 = arith.mulf %19, %17 : vector<8x32xf32>
    %cst_7 = arith.constant dense<0.000000e+00> : vector<32xf32>
    %21 = vector.multi_reduction <add>, %20, %cst_7 [0] : vector<8x32xf32> to vector<32xf32>
    %22 = vector.shape_cast %21 : vector<32xf32> to vector<1x32xf32>
    %23 = arith.mulf %22, %22 : vector<1x32xf32>
    %cst_8 = arith.constant dense<0.000000e+00> : vector<1xf32>
    %24 = vector.multi_reduction <add>, %23, %cst_8 [1] : vector<1x32xf32> to vector<1xf32>
    %25 = vector.shape_cast %24 : vector<1xf32> to vector<1x1xf32>
    %cst_9 = arith.constant 1.000000e+00 : f32
    %26 = vector.broadcast %cst_9 : f32 to vector<1x1xf32>
    %27 = arith.addf %26, %25 : vector<1x1xf32>
    %28 = arith.divf %25, %27 : vector<1x1xf32>
    %29 = vector.broadcast %28 : vector<1x1xf32> to vector<1x32xf32>
    %30 = arith.mulf %29, %22 : vector<1x32xf32>
    %cst_10 = arith.constant 9.99999971E-10 : f32
    %31 = vector.broadcast %cst_10 : f32 to vector<1x1xf32>
    %32 = arith.addf %25, %31 : vector<1x1xf32>
    %33 = math.rsqrt %32 : vector<1x1xf32>
    %34 = vector.broadcast %33 : vector<1x1xf32> to vector<1x32xf32>
    %35 = arith.mulf %30, %34 : vector<1x32xf32>
    %36 = vector.extract_strided_slice %5 {offsets = [0, 32], sizes = [8, 32], strides = [1, 1]} : vector<8x96xf32> to vector<8x32xf32>
    %37 = vector.extract_strided_slice %16 {offsets = [0, 1], sizes = [8, 1], strides = [1, 1]} : vector<8x3xf32> to vector<8x1xf32>
    %38 = vector.broadcast %37 : vector<8x1xf32> to vector<8x32xf32>
    %39 = arith.mulf %38, %36 : vector<8x32xf32>
    %cst_11 = arith.constant dense<0.000000e+00> : vector<32xf32>
    %40 = vector.multi_reduction <add>, %39, %cst_11 [0] : vector<8x32xf32> to vector<32xf32>
    %41 = vector.shape_cast %40 : vector<32xf32> to vector<1x32xf32>
    %42 = arith.mulf %41, %41 : vector<1x32xf32>
    %cst_12 = arith.constant dense<0.000000e+00> : vector<1xf32>
    %43 = vector.multi_reduction <add>, %42, %cst_12 [1] : vector<1x32xf32> to vector<1xf32>
    %44 = vector.shape_cast %43 : vector<1xf32> to vector<1x1xf32>
    %cst_13 = arith.constant 1.000000e+00 : f32
    %45 = vector.broadcast %cst_13 : f32 to vector<1x1xf32>
    %46 = arith.addf %45, %44 : vector<1x1xf32>
    %47 = arith.divf %44, %46 : vector<1x1xf32>
    %48 = vector.broadcast %47 : vector<1x1xf32> to vector<1x32xf32>
    %49 = arith.mulf %48, %41 : vector<1x32xf32>
    %cst_14 = arith.constant 9.99999971E-10 : f32
    %50 = vector.broadcast %cst_14 : f32 to vector<1x1xf32>
    %51 = arith.addf %44, %50 : vector<1x1xf32>
    %52 = math.rsqrt %51 : vector<1x1xf32>
    %53 = vector.broadcast %52 : vector<1x1xf32> to vector<1x32xf32>
    %54 = arith.mulf %49, %53 : vector<1x32xf32>
    %55 = vector.extract_strided_slice %5 {offsets = [0, 64], sizes = [8, 32], strides = [1, 1]} : vector<8x96xf32> to vector<8x32xf32>
    %56 = vector.extract_strided_slice %16 {offsets = [0, 2], sizes = [8, 1], strides = [1, 1]} : vector<8x3xf32> to vector<8x1xf32>
    %57 = vector.broadcast %56 : vector<8x1xf32> to vector<8x32xf32>
    %58 = arith.mulf %57, %55 : vector<8x32xf32>
    %cst_15 = arith.constant dense<0.000000e+00> : vector<32xf32>
    %59 = vector.multi_reduction <add>, %58, %cst_15 [0] : vector<8x32xf32> to vector<32xf32>
    %60 = vector.shape_cast %59 : vector<32xf32> to vector<1x32xf32>
    %61 = arith.mulf %60, %60 : vector<1x32xf32>
    %cst_16 = arith.constant dense<0.000000e+00> : vector<1xf32>
    %62 = vector.multi_reduction <add>, %61, %cst_16 [1] : vector<1x32xf32> to vector<1xf32>
    %63 = vector.shape_cast %62 : vector<1xf32> to vector<1x1xf32>
    %cst_17 = arith.constant 1.000000e+00 : f32
    %64 = vector.broadcast %cst_17 : f32 to vector<1x1xf32>
    %65 = arith.addf %64, %63 : vector<1x1xf32>
    %66 = arith.divf %63, %65 : vector<1x1xf32>
    %67 = vector.broadcast %66 : vector<1x1xf32> to vector<1x32xf32>
    %68 = arith.mulf %67, %60 : vector<1x32xf32>
    %cst_18 = arith.constant 9.99999971E-10 : f32
    %69 = vector.broadcast %cst_18 : f32 to vector<1x1xf32>
    %70 = arith.addf %63, %69 : vector<1x1xf32>
    %71 = math.rsqrt %70 : vector<1x1xf32>
    %72 = vector.broadcast %71 : vector<1x1xf32> to vector<1x32xf32>
    %73 = arith.mulf %68, %72 : vector<1x32xf32>
    %74 = vector.extract_strided_slice %5 {offsets = [0, 0], sizes = [8, 32], strides = [1, 1]} : vector<8x96xf32> to vector<8x32xf32>
    %cst_19 = arith.constant dense<0.000000e+00> : vector<8x1xf32>
    %75 = tpu.matmul %74, %35, %cst_19 {dimension_numbers = #tpu.dot_dimension_numbers<[1], [1], [0], [0], [0, 0, 1, 0], [], []>} : vector<8x32xf32>, vector<1x32xf32>, vector<8x1xf32> -> vector<8x1xf32>
    %76 = tpu.iota {dimensions = array<i32: 1>} : vector<1x3xi32>
    %c0_i32 = arith.constant 0 : i32
    %77 = vector.broadcast %c0_i32 : i32 to vector<1x3xi32>
    %78 = arith.cmpi eq, %76, %77 : vector<1x3xi32>
    %79 = arith.extui %78 : vector<1x3xi1> to vector<1x3xi32>
    %80 = arith.sitofp %79 : vector<1x3xi32> to vector<1x3xf32>
    %81 = vector.broadcast %75 : vector<8x1xf32> to vector<8x3xf32>
    %82 = vector.broadcast %80 : vector<1x3xf32> to vector<8x3xf32>
    %83 = arith.mulf %81, %82 : vector<8x3xf32>
    %84 = arith.addf %6, %83 : vector<8x3xf32>
    %85 = vector.extract_strided_slice %5 {offsets = [0, 32], sizes = [8, 32], strides = [1, 1]} : vector<8x96xf32> to vector<8x32xf32>
    %cst_20 = arith.constant dense<0.000000e+00> : vector<8x1xf32>
    %86 = tpu.matmul %85, %54, %cst_20 {dimension_numbers = #tpu.dot_dimension_numbers<[1], [1], [0], [0], [0, 0, 1, 0], [], []>} : vector<8x32xf32>, vector<1x32xf32>, vector<8x1xf32> -> vector<8x1xf32>
    %87 = tpu.iota {dimensions = array<i32: 1>} : vector<1x3xi32>
    %c1_i32 = arith.constant 1 : i32
    %88 = vector.broadcast %c1_i32 : i32 to vector<1x3xi32>
    %89 = arith.cmpi eq, %87, %88 : vector<1x3xi32>
    %90 = arith.extui %89 : vector<1x3xi1> to vector<1x3xi32>
    %91 = arith.sitofp %90 : vector<1x3xi32> to vector<1x3xf32>
    %92 = vector.broadcast %86 : vector<8x1xf32> to vector<8x3xf32>
    %93 = vector.broadcast %91 : vector<1x3xf32> to vector<8x3xf32>
    %94 = arith.mulf %92, %93 : vector<8x3xf32>
    %95 = arith.addf %84, %94 : vector<8x3xf32>
    %96 = vector.extract_strided_slice %5 {offsets = [0, 64], sizes = [8, 32], strides = [1, 1]} : vector<8x96xf32> to vector<8x32xf32>
    %cst_21 = arith.constant dense<0.000000e+00> : vector<8x1xf32>
    %97 = tpu.matmul %96, %73, %cst_21 {dimension_numbers = #tpu.dot_dimension_numbers<[1], [1], [0], [0], [0, 0, 1, 0], [], []>} : vector<8x32xf32>, vector<1x32xf32>, vector<8x1xf32> -> vector<8x1xf32>
    %98 = tpu.iota {dimensions = array<i32: 1>} : vector<1x3xi32>
    %c2_i32 = arith.constant 2 : i32
    %99 = vector.broadcast %c2_i32 : i32 to vector<1x3xi32>
    %100 = arith.cmpi eq, %98, %99 : vector<1x3xi32>
    %101 = arith.extui %100 : vector<1x3xi1> to vector<1x3xi32>
    %102 = arith.sitofp %101 : vector<1x3xi32> to vector<1x3xf32>
    %103 = vector.broadcast %97 : vector<8x1xf32> to vector<8x3xf32>
    %104 = vector.broadcast %102 : vector<1x3xf32> to vector<8x3xf32>
    %105 = arith.mulf %103, %104 : vector<8x3xf32>
    %106 = arith.addf %95, %105 : vector<8x3xf32>
    %cst_22 = arith.constant dense<0xFF800000> : vector<8xf32>
    %107 = vector.multi_reduction <maximumf>, %106, %cst_22 [1] : vector<8x3xf32> to vector<8xf32>
    %108 = vector.shape_cast %107 : vector<8xf32> to vector<8x1xf32>
    %109 = vector.broadcast %108 : vector<8x1xf32> to vector<8x3xf32>
    %110 = arith.subf %106, %109 : vector<8x3xf32>
    %111 = math.exp %110 : vector<8x3xf32>
    %cst_23 = arith.constant dense<0.000000e+00> : vector<8xf32>
    %112 = vector.multi_reduction <add>, %111, %cst_23 [1] : vector<8x3xf32> to vector<8xf32>
    %113 = vector.shape_cast %112 : vector<8xf32> to vector<8x1xf32>
    %114 = tpu.reciprocal %113 {approx = true} : vector<8x1xf32> -> vector<8x1xf32>
    %115 = vector.broadcast %114 : vector<8x1xf32> to vector<8x3xf32>
    %116 = arith.mulf %111, %115 : vector<8x3xf32>
    %117 = vector.extract_strided_slice %5 {offsets = [0, 0], sizes = [8, 32], strides = [1, 1]} : vector<8x96xf32> to vector<8x32xf32>
    %118 = vector.extract_strided_slice %116 {offsets = [0, 0], sizes = [8, 1], strides = [1, 1]} : vector<8x3xf32> to vector<8x1xf32>
    %119 = vector.broadcast %118 : vector<8x1xf32> to vector<8x32xf32>
    %120 = arith.mulf %119, %117 : vector<8x32xf32>
    %cst_24 = arith.constant dense<0.000000e+00> : vector<32xf32>
    %121 = vector.multi_reduction <add>, %120, %cst_24 [0] : vector<8x32xf32> to vector<32xf32>
    %122 = vector.shape_cast %121 : vector<32xf32> to vector<1x32xf32>
    %123 = arith.mulf %122, %122 : vector<1x32xf32>
    %cst_25 = arith.constant dense<0.000000e+00> : vector<1xf32>
    %124 = vector.multi_reduction <add>, %123, %cst_25 [1] : vector<1x32xf32> to vector<1xf32>
    %125 = vector.shape_cast %124 : vector<1xf32> to vector<1x1xf32>
    %cst_26 = arith.constant 1.000000e+00 : f32
    %126 = vector.broadcast %cst_26 : f32 to vector<1x1xf32>
    %127 = arith.addf %126, %125 : vector<1x1xf32>
    %128 = arith.divf %125, %127 : vector<1x1xf32>
    %129 = vector.broadcast %128 : vector<1x1xf32> to vector<1x32xf32>
    %130 = arith.mulf %129, %122 : vector<1x32xf32>
    %cst_27 = arith.constant 9.99999971E-10 : f32
    %131 = vector.broadcast %cst_27 : f32 to vector<1x1xf32>
    %132 = arith.addf %125, %131 : vector<1x1xf32>
    %133 = math.rsqrt %132 : vector<1x1xf32>
    %134 = vector.broadcast %133 : vector<1x1xf32> to vector<1x32xf32>
    %135 = arith.mulf %130, %134 : vector<1x32xf32>
    %136 = vector.extract_strided_slice %5 {offsets = [0, 32], sizes = [8, 32], strides = [1, 1]} : vector<8x96xf32> to vector<8x32xf32>
    %137 = vector.extract_strided_slice %116 {offsets = [0, 1], sizes = [8, 1], strides = [1, 1]} : vector<8x3xf32> to vector<8x1xf32>
    %138 = vector.broadcast %137 : vector<8x1xf32> to vector<8x32xf32>
    %139 = arith.mulf %138, %136 : vector<8x32xf32>
    %cst_28 = arith.constant dense<0.000000e+00> : vector<32xf32>
    %140 = vector.multi_reduction <add>, %139, %cst_28 [0] : vector<8x32xf32> to vector<32xf32>
    %141 = vector.shape_cast %140 : vector<32xf32> to vector<1x32xf32>
    %142 = arith.mulf %141, %141 : vector<1x32xf32>
    %cst_29 = arith.constant dense<0.000000e+00> : vector<1xf32>
    %143 = vector.multi_reduction <add>, %142, %cst_29 [1] : vector<1x32xf32> to vector<1xf32>
    %144 = vector.shape_cast %143 : vector<1xf32> to vector<1x1xf32>
    %cst_30 = arith.constant 1.000000e+00 : f32
    %145 = vector.broadcast %cst_30 : f32 to vector<1x1xf32>
    %146 = arith.addf %145, %144 : vector<1x1xf32>
    %147 = arith.divf %144, %146 : vector<1x1xf32>
    %148 = vector.broadcast %147 : vector<1x1xf32> to vector<1x32xf32>
    %149 = arith.mulf %148, %141 : vector<1x32xf32>
    %cst_31 = arith.constant 9.99999971E-10 : f32
    %150 = vector.broadcast %cst_31 : f32 to vector<1x1xf32>
    %151 = arith.addf %144, %150 : vector<1x1xf32>
    %152 = math.rsqrt %151 : vector<1x1xf32>
    %153 = vector.broadcast %152 : vector<1x1xf32> to vector<1x32xf32>
    %154 = arith.mulf %149, %153 : vector<1x32xf32>
    %155 = vector.extract_strided_slice %5 {offsets = [0, 64], sizes = [8, 32], strides = [1, 1]} : vector<8x96xf32> to vector<8x32xf32>
    %156 = vector.extract_strided_slice %116 {offsets = [0, 2], sizes = [8, 1], strides = [1, 1]} : vector<8x3xf32> to vector<8x1xf32>
    %157 = vector.broadcast %156 : vector<8x1xf32> to vector<8x32xf32>
    %158 = arith.mulf %157, %155 : vector<8x32xf32>
    %cst_32 = arith.constant dense<0.000000e+00> : vector<32xf32>
    %159 = vector.multi_reduction <add>, %158, %cst_32 [0] : vector<8x32xf32> to vector<32xf32>
    %160 = vector.shape_cast %159 : vector<32xf32> to vector<1x32xf32>
    %161 = arith.mulf %160, %160 : vector<1x32xf32>
    %cst_33 = arith.constant dense<0.000000e+00> : vector<1xf32>
    %162 = vector.multi_reduction <add>, %161, %cst_33 [1] : vector<1x32xf32> to vector<1xf32>
    %163 = vector.shape_cast %162 : vector<1xf32> to vector<1x1xf32>
    %cst_34 = arith.constant 1.000000e+00 : f32
    %164 = vector.broadcast %cst_34 : f32 to vector<1x1xf32>
    %165 = arith.addf %164, %163 : vector<1x1xf32>
    %166 = arith.divf %163, %165 : vector<1x1xf32>
    %167 = vector.broadcast %166 : vector<1x1xf32> to vector<1x32xf32>
    %168 = arith.mulf %167, %160 : vector<1x32xf32>
    %cst_35 = arith.constant 9.99999971E-10 : f32
    %169 = vector.broadcast %cst_35 : f32 to vector<1x1xf32>
    %170 = arith.addf %163, %169 : vector<1x1xf32>
    %171 = math.rsqrt %170 : vector<1x1xf32>
    %172 = vector.broadcast %171 : vector<1x1xf32> to vector<1x32xf32>
    %173 = arith.mulf %168, %172 : vector<1x32xf32>
    %174 = vector.extract_strided_slice %5 {offsets = [0, 0], sizes = [8, 32], strides = [1, 1]} : vector<8x96xf32> to vector<8x32xf32>
    %cst_36 = arith.constant dense<0.000000e+00> : vector<8x1xf32>
    %175 = tpu.matmul %174, %135, %cst_36 {dimension_numbers = #tpu.dot_dimension_numbers<[1], [1], [0], [0], [0, 0, 1, 0], [], []>} : vector<8x32xf32>, vector<1x32xf32>, vector<8x1xf32> -> vector<8x1xf32>
    %176 = tpu.iota {dimensions = array<i32: 1>} : vector<1x3xi32>
    %c0_i32_37 = arith.constant 0 : i32
    %177 = vector.broadcast %c0_i32_37 : i32 to vector<1x3xi32>
    %178 = arith.cmpi eq, %176, %177 : vector<1x3xi32>
    %179 = arith.extui %178 : vector<1x3xi1> to vector<1x3xi32>
    %180 = arith.sitofp %179 : vector<1x3xi32> to vector<1x3xf32>
    %181 = vector.broadcast %175 : vector<8x1xf32> to vector<8x3xf32>
    %182 = vector.broadcast %180 : vector<1x3xf32> to vector<8x3xf32>
    %183 = arith.mulf %181, %182 : vector<8x3xf32>
    %184 = arith.addf %106, %183 : vector<8x3xf32>
    %185 = vector.extract_strided_slice %5 {offsets = [0, 32], sizes = [8, 32], strides = [1, 1]} : vector<8x96xf32> to vector<8x32xf32>
    %cst_38 = arith.constant dense<0.000000e+00> : vector<8x1xf32>
    %186 = tpu.matmul %185, %154, %cst_38 {dimension_numbers = #tpu.dot_dimension_numbers<[1], [1], [0], [0], [0, 0, 1, 0], [], []>} : vector<8x32xf32>, vector<1x32xf32>, vector<8x1xf32> -> vector<8x1xf32>
    %187 = tpu.iota {dimensions = array<i32: 1>} : vector<1x3xi32>
    %c1_i32_39 = arith.constant 1 : i32
    %188 = vector.broadcast %c1_i32_39 : i32 to vector<1x3xi32>
    %189 = arith.cmpi eq, %187, %188 : vector<1x3xi32>
    %190 = arith.extui %189 : vector<1x3xi1> to vector<1x3xi32>
    %191 = arith.sitofp %190 : vector<1x3xi32> to vector<1x3xf32>
    %192 = vector.broadcast %186 : vector<8x1xf32> to vector<8x3xf32>
    %193 = vector.broadcast %191 : vector<1x3xf32> to vector<8x3xf32>
    %194 = arith.mulf %192, %193 : vector<8x3xf32>
    %195 = arith.addf %184, %194 : vector<8x3xf32>
    %196 = vector.extract_strided_slice %5 {offsets = [0, 64], sizes = [8, 32], strides = [1, 1]} : vector<8x96xf32> to vector<8x32xf32>
    %cst_40 = arith.constant dense<0.000000e+00> : vector<8x1xf32>
    %197 = tpu.matmul %196, %173, %cst_40 {dimension_numbers = #tpu.dot_dimension_numbers<[1], [1], [0], [0], [0, 0, 1, 0], [], []>} : vector<8x32xf32>, vector<1x32xf32>, vector<8x1xf32> -> vector<8x1xf32>
    %198 = tpu.iota {dimensions = array<i32: 1>} : vector<1x3xi32>
    %c2_i32_41 = arith.constant 2 : i32
    %199 = vector.broadcast %c2_i32_41 : i32 to vector<1x3xi32>
    %200 = arith.cmpi eq, %198, %199 : vector<1x3xi32>
    %201 = arith.extui %200 : vector<1x3xi1> to vector<1x3xi32>
    %202 = arith.sitofp %201 : vector<1x3xi32> to vector<1x3xf32>
    %203 = vector.broadcast %197 : vector<8x1xf32> to vector<8x3xf32>
    %204 = vector.broadcast %202 : vector<1x3xf32> to vector<8x3xf32>
    %205 = arith.mulf %203, %204 : vector<8x3xf32>
    %206 = arith.addf %195, %205 : vector<8x3xf32>
    %cst_42 = arith.constant dense<0xFF800000> : vector<8xf32>
    %207 = vector.multi_reduction <maximumf>, %206, %cst_42 [1] : vector<8x3xf32> to vector<8xf32>
    %208 = vector.shape_cast %207 : vector<8xf32> to vector<8x1xf32>
    %209 = vector.broadcast %208 : vector<8x1xf32> to vector<8x3xf32>
    %210 = arith.subf %206, %209 : vector<8x3xf32>
    %211 = math.exp %210 : vector<8x3xf32>
    %cst_43 = arith.constant dense<0.000000e+00> : vector<8xf32>
    %212 = vector.multi_reduction <add>, %211, %cst_43 [1] : vector<8x3xf32> to vector<8xf32>
    %213 = vector.shape_cast %212 : vector<8xf32> to vector<8x1xf32>
    %214 = tpu.reciprocal %213 {approx = true} : vector<8x1xf32> -> vector<8x1xf32>
    %215 = vector.broadcast %214 : vector<8x1xf32> to vector<8x3xf32>
    %216 = arith.mulf %211, %215 : vector<8x3xf32>
    %217 = vector.extract_strided_slice %5 {offsets = [0, 0], sizes = [8, 32], strides = [1, 1]} : vector<8x96xf32> to vector<8x32xf32>
    %218 = vector.extract_strided_slice %216 {offsets = [0, 0], sizes = [8, 1], strides = [1, 1]} : vector<8x3xf32> to vector<8x1xf32>
    %219 = vector.broadcast %218 : vector<8x1xf32> to vector<8x32xf32>
    %220 = arith.mulf %219, %217 : vector<8x32xf32>
    %cst_44 = arith.constant dense<0.000000e+00> : vector<32xf32>
    %221 = vector.multi_reduction <add>, %220, %cst_44 [0] : vector<8x32xf32> to vector<32xf32>
    %222 = vector.shape_cast %221 : vector<32xf32> to vector<1x32xf32>
    %223 = arith.mulf %222, %222 : vector<1x32xf32>
    %cst_45 = arith.constant dense<0.000000e+00> : vector<1xf32>
    %224 = vector.multi_reduction <add>, %223, %cst_45 [1] : vector<1x32xf32> to vector<1xf32>
    %225 = vector.shape_cast %224 : vector<1xf32> to vector<1x1xf32>
    %cst_46 = arith.constant 1.000000e+00 : f32
    %226 = vector.broadcast %cst_46 : f32 to vector<1x1xf32>
    %227 = arith.addf %226, %225 : vector<1x1xf32>
    %228 = arith.divf %225, %227 : vector<1x1xf32>
    %229 = vector.broadcast %228 : vector<1x1xf32> to vector<1x32xf32>
    %230 = arith.mulf %229, %222 : vector<1x32xf32>
    %cst_47 = arith.constant 9.99999971E-10 : f32
    %231 = vector.broadcast %cst_47 : f32 to vector<1x1xf32>
    %232 = arith.addf %225, %231 : vector<1x1xf32>
    %233 = math.rsqrt %232 : vector<1x1xf32>
    %234 = vector.broadcast %233 : vector<1x1xf32> to vector<1x32xf32>
    %235 = arith.mulf %230, %234 : vector<1x32xf32>
    %236 = vector.extract_strided_slice %5 {offsets = [0, 32], sizes = [8, 32], strides = [1, 1]} : vector<8x96xf32> to vector<8x32xf32>
    %237 = vector.extract_strided_slice %216 {offsets = [0, 1], sizes = [8, 1], strides = [1, 1]} : vector<8x3xf32> to vector<8x1xf32>
    %238 = vector.broadcast %237 : vector<8x1xf32> to vector<8x32xf32>
    %239 = arith.mulf %238, %236 : vector<8x32xf32>
    %cst_48 = arith.constant dense<0.000000e+00> : vector<32xf32>
    %240 = vector.multi_reduction <add>, %239, %cst_48 [0] : vector<8x32xf32> to vector<32xf32>
    %241 = vector.shape_cast %240 : vector<32xf32> to vector<1x32xf32>
    %242 = arith.mulf %241, %241 : vector<1x32xf32>
    %cst_49 = arith.constant dense<0.000000e+00> : vector<1xf32>
    %243 = vector.multi_reduction <add>, %242, %cst_49 [1] : vector<1x32xf32> to vector<1xf32>
    %244 = vector.shape_cast %243 : vector<1xf32> to vector<1x1xf32>
    %cst_50 = arith.constant 1.000000e+00 : f32
    %245 = vector.broadcast %cst_50 : f32 to vector<1x1xf32>
    %246 = arith.addf %245, %244 : vector<1x1xf32>
    %247 = arith.divf %244, %246 : vector<1x1xf32>
    %248 = vector.broadcast %247 : vector<1x1xf32> to vector<1x32xf32>
    %249 = arith.mulf %248, %241 : vector<1x32xf32>
    %cst_51 = arith.constant 9.99999971E-10 : f32
    %250 = vector.broadcast %cst_51 : f32 to vector<1x1xf32>
    %251 = arith.addf %244, %250 : vector<1x1xf32>
    %252 = math.rsqrt %251 : vector<1x1xf32>
    %253 = vector.broadcast %252 : vector<1x1xf32> to vector<1x32xf32>
    %254 = arith.mulf %249, %253 : vector<1x32xf32>
    %255 = vector.extract_strided_slice %5 {offsets = [0, 64], sizes = [8, 32], strides = [1, 1]} : vector<8x96xf32> to vector<8x32xf32>
    %256 = vector.extract_strided_slice %216 {offsets = [0, 2], sizes = [8, 1], strides = [1, 1]} : vector<8x3xf32> to vector<8x1xf32>
    %257 = vector.broadcast %256 : vector<8x1xf32> to vector<8x32xf32>
    %258 = arith.mulf %257, %255 : vector<8x32xf32>
    %cst_52 = arith.constant dense<0.000000e+00> : vector<32xf32>
    %259 = vector.multi_reduction <add>, %258, %cst_52 [0] : vector<8x32xf32> to vector<32xf32>
    %260 = vector.shape_cast %259 : vector<32xf32> to vector<1x32xf32>
    %261 = arith.mulf %260, %260 : vector<1x32xf32>
    %cst_53 = arith.constant dense<0.000000e+00> : vector<1xf32>
    %262 = vector.multi_reduction <add>, %261, %cst_53 [1] : vector<1x32xf32> to vector<1xf32>
    %263 = vector.shape_cast %262 : vector<1xf32> to vector<1x1xf32>
    %cst_54 = arith.constant 1.000000e+00 : f32
    %264 = vector.broadcast %cst_54 : f32 to vector<1x1xf32>
    %265 = arith.addf %264, %263 : vector<1x1xf32>
    %266 = arith.divf %263, %265 : vector<1x1xf32>
    %267 = vector.broadcast %266 : vector<1x1xf32> to vector<1x32xf32>
    %268 = arith.mulf %267, %260 : vector<1x32xf32>
    %cst_55 = arith.constant 9.99999971E-10 : f32
    %269 = vector.broadcast %cst_55 : f32 to vector<1x1xf32>
    %270 = arith.addf %263, %269 : vector<1x1xf32>
    %271 = math.rsqrt %270 : vector<1x1xf32>
    %272 = vector.broadcast %271 : vector<1x1xf32> to vector<1x32xf32>
    %273 = arith.mulf %268, %272 : vector<1x32xf32>
    %274 = arith.addf %235, %254 : vector<1x32xf32>
    %275 = arith.addf %274, %273 : vector<1x32xf32>
    %c0_i32_56 = arith.constant 0 : i32
    %276 = vector.broadcast %c0_i32_56 : i32 to vector<2x1xi32>
    %277 = arith.cmpi eq, %3, %276 : vector<2x1xi32>
    %cst_57 = arith.constant 0.000000e+00 : f32
    %278 = vector.shape_cast %277 : vector<2x1xi1> to vector<2x1xi1>
    %279 = vector.broadcast %278 : vector<2x1xi1> to vector<2x32xi1>
    %280 = vector.shape_cast %275 : vector<1x32xf32> to vector<1x32xf32>
    %281 = vector.broadcast %280 : vector<1x32xf32> to vector<2x32xf32>
    %282 = vector.broadcast %cst_57 : f32 to vector<2x32xf32>
    %283 = arith.select %279, %281, %282 : vector<2x32xi1>, vector<2x32xf32>
    %284 = arith.addf %4, %283 : vector<2x32xf32>
    %285 = vector.extract_strided_slice %2 {offsets = [8, 0], sizes = [8, 96], strides = [1, 1]} : vector<16x96xf32> to vector<8x96xf32>
    %cst_58 = arith.constant 0.000000e+00 : f32
    %286 = vector.broadcast %cst_58 : f32 to vector<8x3xf32>
    %cst_59 = arith.constant dense<0xFF800000> : vector<8xf32>
    %287 = vector.multi_reduction <maximumf>, %286, %cst_59 [1] : vector<8x3xf32> to vector<8xf32>
    %288 = vector.shape_cast %287 : vector<8xf32> to vector<8x1xf32>
    %289 = vector.broadcast %288 : vector<8x1xf32> to vector<8x3xf32>
    %290 = arith.subf %286, %289 : vector<8x3xf32>
    %291 = math.exp %290 : vector<8x3xf32>
    %cst_60 = arith.constant dense<0.000000e+00> : vector<8xf32>
    %292 = vector.multi_reduction <add>, %291, %cst_60 [1] : vector<8x3xf32> to vector<8xf32>
    %293 = vector.shape_cast %292 : vector<8xf32> to vector<8x1xf32>
    %294 = tpu.reciprocal %293 {approx = true} : vector<8x1xf32> -> vector<8x1xf32>
    %295 = vector.broadcast %294 : vector<8x1xf32> to vector<8x3xf32>
    %296 = arith.mulf %291, %295 : vector<8x3xf32>
    %297 = vector.extract_strided_slice %285 {offsets = [0, 0], sizes = [8, 32], strides = [1, 1]} : vector<8x96xf32> to vector<8x32xf32>
    %298 = vector.extract_strided_slice %296 {offsets = [0, 0], sizes = [8, 1], strides = [1, 1]} : vector<8x3xf32> to vector<8x1xf32>
    %299 = vector.broadcast %298 : vector<8x1xf32> to vector<8x32xf32>
    %300 = arith.mulf %299, %297 : vector<8x32xf32>
    %cst_61 = arith.constant dense<0.000000e+00> : vector<32xf32>
    %301 = vector.multi_reduction <add>, %300, %cst_61 [0] : vector<8x32xf32> to vector<32xf32>
    %302 = vector.shape_cast %301 : vector<32xf32> to vector<1x32xf32>
    %303 = arith.mulf %302, %302 : vector<1x32xf32>
    %cst_62 = arith.constant dense<0.000000e+00> : vector<1xf32>
    %304 = vector.multi_reduction <add>, %303, %cst_62 [1] : vector<1x32xf32> to vector<1xf32>
    %305 = vector.shape_cast %304 : vector<1xf32> to vector<1x1xf32>
    %cst_63 = arith.constant 1.000000e+00 : f32
    %306 = vector.broadcast %cst_63 : f32 to vector<1x1xf32>
    %307 = arith.addf %306, %305 : vector<1x1xf32>
    %308 = arith.divf %305, %307 : vector<1x1xf32>
    %309 = vector.broadcast %308 : vector<1x1xf32> to vector<1x32xf32>
    %310 = arith.mulf %309, %302 : vector<1x32xf32>
    %cst_64 = arith.constant 9.99999971E-10 : f32
    %311 = vector.broadcast %cst_64 : f32 to vector<1x1xf32>
    %312 = arith.addf %305, %311 : vector<1x1xf32>
    %313 = math.rsqrt %312 : vector<1x1xf32>
    %314 = vector.broadcast %313 : vector<1x1xf32> to vector<1x32xf32>
    %315 = arith.mulf %310, %314 : vector<1x32xf32>
    %316 = vector.extract_strided_slice %285 {offsets = [0, 32], sizes = [8, 32], strides = [1, 1]} : vector<8x96xf32> to vector<8x32xf32>
    %317 = vector.extract_strided_slice %296 {offsets = [0, 1], sizes = [8, 1], strides = [1, 1]} : vector<8x3xf32> to vector<8x1xf32>
    %318 = vector.broadcast %317 : vector<8x1xf32> to vector<8x32xf32>
    %319 = arith.mulf %318, %316 : vector<8x32xf32>
    %cst_65 = arith.constant dense<0.000000e+00> : vector<32xf32>
    %320 = vector.multi_reduction <add>, %319, %cst_65 [0] : vector<8x32xf32> to vector<32xf32>
    %321 = vector.shape_cast %320 : vector<32xf32> to vector<1x32xf32>
    %322 = arith.mulf %321, %321 : vector<1x32xf32>
    %cst_66 = arith.constant dense<0.000000e+00> : vector<1xf32>
    %323 = vector.multi_reduction <add>, %322, %cst_66 [1] : vector<1x32xf32> to vector<1xf32>
    %324 = vector.shape_cast %323 : vector<1xf32> to vector<1x1xf32>
    %cst_67 = arith.constant 1.000000e+00 : f32
    %325 = vector.broadcast %cst_67 : f32 to vector<1x1xf32>
    %326 = arith.addf %325, %324 : vector<1x1xf32>
    %327 = arith.divf %324, %326 : vector<1x1xf32>
    %328 = vector.broadcast %327 : vector<1x1xf32> to vector<1x32xf32>
    %329 = arith.mulf %328, %321 : vector<1x32xf32>
    %cst_68 = arith.constant 9.99999971E-10 : f32
    %330 = vector.broadcast %cst_68 : f32 to vector<1x1xf32>
    %331 = arith.addf %324, %330 : vector<1x1xf32>
    %332 = math.rsqrt %331 : vector<1x1xf32>
    %333 = vector.broadcast %332 : vector<1x1xf32> to vector<1x32xf32>
    %334 = arith.mulf %329, %333 : vector<1x32xf32>
    %335 = vector.extract_strided_slice %285 {offsets = [0, 64], sizes = [8, 32], strides = [1, 1]} : vector<8x96xf32> to vector<8x32xf32>
    %336 = vector.extract_strided_slice %296 {offsets = [0, 2], sizes = [8, 1], strides = [1, 1]} : vector<8x3xf32> to vector<8x1xf32>
    %337 = vector.broadcast %336 : vector<8x1xf32> to vector<8x32xf32>
    %338 = arith.mulf %337, %335 : vector<8x32xf32>
    %cst_69 = arith.constant dense<0.000000e+00> : vector<32xf32>
    %339 = vector.multi_reduction <add>, %338, %cst_69 [0] : vector<8x32xf32> to vector<32xf32>
    %340 = vector.shape_cast %339 : vector<32xf32> to vector<1x32xf32>
    %341 = arith.mulf %340, %340 : vector<1x32xf32>
    %cst_70 = arith.constant dense<0.000000e+00> : vector<1xf32>
    %342 = vector.multi_reduction <add>, %341, %cst_70 [1] : vector<1x32xf32> to vector<1xf32>
    %343 = vector.shape_cast %342 : vector<1xf32> to vector<1x1xf32>
    %cst_71 = arith.constant 1.000000e+00 : f32
    %344 = vector.broadcast %cst_71 : f32 to vector<1x1xf32>
    %345 = arith.addf %344, %343 : vector<1x1xf32>
    %346 = arith.divf %343, %345 : vector<1x1xf32>
    %347 = vector.broadcast %346 : vector<1x1xf32> to vector<1x32xf32>
    %348 = arith.mulf %347, %340 : vector<1x32xf32>
    %cst_72 = arith.constant 9.99999971E-10 : f32
    %349 = vector.broadcast %cst_72 : f32 to vector<1x1xf32>
    %350 = arith.addf %343, %349 : vector<1x1xf32>
    %351 = math.rsqrt %350 : vector<1x1xf32>
    %352 = vector.broadcast %351 : vector<1x1xf32> to vector<1x32xf32>
    %353 = arith.mulf %348, %352 : vector<1x32xf32>
    %354 = vector.extract_strided_slice %285 {offsets = [0, 0], sizes = [8, 32], strides = [1, 1]} : vector<8x96xf32> to vector<8x32xf32>
    %cst_73 = arith.constant dense<0.000000e+00> : vector<8x1xf32>
    %355 = tpu.matmul %354, %315, %cst_73 {dimension_numbers = #tpu.dot_dimension_numbers<[1], [1], [0], [0], [0, 0, 1, 0], [], []>} : vector<8x32xf32>, vector<1x32xf32>, vector<8x1xf32> -> vector<8x1xf32>
    %356 = tpu.iota {dimensions = array<i32: 1>} : vector<1x3xi32>
    %c0_i32_74 = arith.constant 0 : i32
    %357 = vector.broadcast %c0_i32_74 : i32 to vector<1x3xi32>
    %358 = arith.cmpi eq, %356, %357 : vector<1x3xi32>
    %359 = arith.extui %358 : vector<1x3xi1> to vector<1x3xi32>
    %360 = arith.sitofp %359 : vector<1x3xi32> to vector<1x3xf32>
    %361 = vector.broadcast %355 : vector<8x1xf32> to vector<8x3xf32>
    %362 = vector.broadcast %360 : vector<1x3xf32> to vector<8x3xf32>
    %363 = arith.mulf %361, %362 : vector<8x3xf32>
    %364 = arith.addf %286, %363 : vector<8x3xf32>
    %365 = vector.extract_strided_slice %285 {offsets = [0, 32], sizes = [8, 32], strides = [1, 1]} : vector<8x96xf32> to vector<8x32xf32>
    %cst_75 = arith.constant dense<0.000000e+00> : vector<8x1xf32>
    %366 = tpu.matmul %365, %334, %cst_75 {dimension_numbers = #tpu.dot_dimension_numbers<[1], [1], [0], [0], [0, 0, 1, 0], [], []>} : vector<8x32xf32>, vector<1x32xf32>, vector<8x1xf32> -> vector<8x1xf32>
    %367 = tpu.iota {dimensions = array<i32: 1>} : vector<1x3xi32>
    %c1_i32_76 = arith.constant 1 : i32
    %368 = vector.broadcast %c1_i32_76 : i32 to vector<1x3xi32>
    %369 = arith.cmpi eq, %367, %368 : vector<1x3xi32>
    %370 = arith.extui %369 : vector<1x3xi1> to vector<1x3xi32>
    %371 = arith.sitofp %370 : vector<1x3xi32> to vector<1x3xf32>
    %372 = vector.broadcast %366 : vector<8x1xf32> to vector<8x3xf32>
    %373 = vector.broadcast %371 : vector<1x3xf32> to vector<8x3xf32>
    %374 = arith.mulf %372, %373 : vector<8x3xf32>
    %375 = arith.addf %364, %374 : vector<8x3xf32>
    %376 = vector.extract_strided_slice %285 {offsets = [0, 64], sizes = [8, 32], strides = [1, 1]} : vector<8x96xf32> to vector<8x32xf32>
    %cst_77 = arith.constant dense<0.000000e+00> : vector<8x1xf32>
    %377 = tpu.matmul %376, %353, %cst_77 {dimension_numbers = #tpu.dot_dimension_numbers<[1], [1], [0], [0], [0, 0, 1, 0], [], []>} : vector<8x32xf32>, vector<1x32xf32>, vector<8x1xf32> -> vector<8x1xf32>
    %378 = tpu.iota {dimensions = array<i32: 1>} : vector<1x3xi32>
    %c2_i32_78 = arith.constant 2 : i32
    %379 = vector.broadcast %c2_i32_78 : i32 to vector<1x3xi32>
    %380 = arith.cmpi eq, %378, %379 : vector<1x3xi32>
    %381 = arith.extui %380 : vector<1x3xi1> to vector<1x3xi32>
    %382 = arith.sitofp %381 : vector<1x3xi32> to vector<1x3xf32>
    %383 = vector.broadcast %377 : vector<8x1xf32> to vector<8x3xf32>
    %384 = vector.broadcast %382 : vector<1x3xf32> to vector<8x3xf32>
    %385 = arith.mulf %383, %384 : vector<8x3xf32>
    %386 = arith.addf %375, %385 : vector<8x3xf32>
    %cst_79 = arith.constant dense<0xFF800000> : vector<8xf32>
    %387 = vector.multi_reduction <maximumf>, %386, %cst_79 [1] : vector<8x3xf32> to vector<8xf32>
    %388 = vector.shape_cast %387 : vector<8xf32> to vector<8x1xf32>
    %389 = vector.broadcast %388 : vector<8x1xf32> to vector<8x3xf32>
    %390 = arith.subf %386, %389 : vector<8x3xf32>
    %391 = math.exp %390 : vector<8x3xf32>
    %cst_80 = arith.constant dense<0.000000e+00> : vector<8xf32>
    %392 = vector.multi_reduction <add>, %391, %cst_80 [1] : vector<8x3xf32> to vector<8xf32>
    %393 = vector.shape_cast %392 : vector<8xf32> to vector<8x1xf32>
    %394 = tpu.reciprocal %393 {approx = true} : vector<8x1xf32> -> vector<8x1xf32>
    %395 = vector.broadcast %394 : vector<8x1xf32> to vector<8x3xf32>
    %396 = arith.mulf %391, %395 : vector<8x3xf32>
    %397 = vector.extract_strided_slice %285 {offsets = [0, 0], sizes = [8, 32], strides = [1, 1]} : vector<8x96xf32> to vector<8x32xf32>
    %398 = vector.extract_strided_slice %396 {offsets = [0, 0], sizes = [8, 1], strides = [1, 1]} : vector<8x3xf32> to vector<8x1xf32>
    %399 = vector.broadcast %398 : vector<8x1xf32> to vector<8x32xf32>
    %400 = arith.mulf %399, %397 : vector<8x32xf32>
    %cst_81 = arith.constant dense<0.000000e+00> : vector<32xf32>
    %401 = vector.multi_reduction <add>, %400, %cst_81 [0] : vector<8x32xf32> to vector<32xf32>
    %402 = vector.shape_cast %401 : vector<32xf32> to vector<1x32xf32>
    %403 = arith.mulf %402, %402 : vector<1x32xf32>
    %cst_82 = arith.constant dense<0.000000e+00> : vector<1xf32>
    %404 = vector.multi_reduction <add>, %403, %cst_82 [1] : vector<1x32xf32> to vector<1xf32>
    %405 = vector.shape_cast %404 : vector<1xf32> to vector<1x1xf32>
    %cst_83 = arith.constant 1.000000e+00 : f32
    %406 = vector.broadcast %cst_83 : f32 to vector<1x1xf32>
    %407 = arith.addf %406, %405 : vector<1x1xf32>
    %408 = arith.divf %405, %407 : vector<1x1xf32>
    %409 = vector.broadcast %408 : vector<1x1xf32> to vector<1x32xf32>
    %410 = arith.mulf %409, %402 : vector<1x32xf32>
    %cst_84 = arith.constant 9.99999971E-10 : f32
    %411 = vector.broadcast %cst_84 : f32 to vector<1x1xf32>
    %412 = arith.addf %405, %411 : vector<1x1xf32>
    %413 = math.rsqrt %412 : vector<1x1xf32>
    %414 = vector.broadcast %413 : vector<1x1xf32> to vector<1x32xf32>
    %415 = arith.mulf %410, %414 : vector<1x32xf32>
    %416 = vector.extract_strided_slice %285 {offsets = [0, 32], sizes = [8, 32], strides = [1, 1]} : vector<8x96xf32> to vector<8x32xf32>
    %417 = vector.extract_strided_slice %396 {offsets = [0, 1], sizes = [8, 1], strides = [1, 1]} : vector<8x3xf32> to vector<8x1xf32>
    %418 = vector.broadcast %417 : vector<8x1xf32> to vector<8x32xf32>
    %419 = arith.mulf %418, %416 : vector<8x32xf32>
    %cst_85 = arith.constant dense<0.000000e+00> : vector<32xf32>
    %420 = vector.multi_reduction <add>, %419, %cst_85 [0] : vector<8x32xf32> to vector<32xf32>
    %421 = vector.shape_cast %420 : vector<32xf32> to vector<1x32xf32>
    %422 = arith.mulf %421, %421 : vector<1x32xf32>
    %cst_86 = arith.constant dense<0.000000e+00> : vector<1xf32>
    %423 = vector.multi_reduction <add>, %422, %cst_86 [1] : vector<1x32xf32> to vector<1xf32>
    %424 = vector.shape_cast %423 : vector<1xf32> to vector<1x1xf32>
    %cst_87 = arith.constant 1.000000e+00 : f32
    %425 = vector.broadcast %cst_87 : f32 to vector<1x1xf32>
    %426 = arith.addf %425, %424 : vector<1x1xf32>
    %427 = arith.divf %424, %426 : vector<1x1xf32>
    %428 = vector.broadcast %427 : vector<1x1xf32> to vector<1x32xf32>
    %429 = arith.mulf %428, %421 : vector<1x32xf32>
    %cst_88 = arith.constant 9.99999971E-10 : f32
    %430 = vector.broadcast %cst_88 : f32 to vector<1x1xf32>
    %431 = arith.addf %424, %430 : vector<1x1xf32>
    %432 = math.rsqrt %431 : vector<1x1xf32>
    %433 = vector.broadcast %432 : vector<1x1xf32> to vector<1x32xf32>
    %434 = arith.mulf %429, %433 : vector<1x32xf32>
    %435 = vector.extract_strided_slice %285 {offsets = [0, 64], sizes = [8, 32], strides = [1, 1]} : vector<8x96xf32> to vector<8x32xf32>
    %436 = vector.extract_strided_slice %396 {offsets = [0, 2], sizes = [8, 1], strides = [1, 1]} : vector<8x3xf32> to vector<8x1xf32>
    %437 = vector.broadcast %436 : vector<8x1xf32> to vector<8x32xf32>
    %438 = arith.mulf %437, %435 : vector<8x32xf32>
    %cst_89 = arith.constant dense<0.000000e+00> : vector<32xf32>
    %439 = vector.multi_reduction <add>, %438, %cst_89 [0] : vector<8x32xf32> to vector<32xf32>
    %440 = vector.shape_cast %439 : vector<32xf32> to vector<1x32xf32>
    %441 = arith.mulf %440, %440 : vector<1x32xf32>
    %cst_90 = arith.constant dense<0.000000e+00> : vector<1xf32>
    %442 = vector.multi_reduction <add>, %441, %cst_90 [1] : vector<1x32xf32> to vector<1xf32>
    %443 = vector.shape_cast %442 : vector<1xf32> to vector<1x1xf32>
    %cst_91 = arith.constant 1.000000e+00 : f32
    %444 = vector.broadcast %cst_91 : f32 to vector<1x1xf32>
    %445 = arith.addf %444, %443 : vector<1x1xf32>
    %446 = arith.divf %443, %445 : vector<1x1xf32>
    %447 = vector.broadcast %446 : vector<1x1xf32> to vector<1x32xf32>
    %448 = arith.mulf %447, %440 : vector<1x32xf32>
    %cst_92 = arith.constant 9.99999971E-10 : f32
    %449 = vector.broadcast %cst_92 : f32 to vector<1x1xf32>
    %450 = arith.addf %443, %449 : vector<1x1xf32>
    %451 = math.rsqrt %450 : vector<1x1xf32>
    %452 = vector.broadcast %451 : vector<1x1xf32> to vector<1x32xf32>
    %453 = arith.mulf %448, %452 : vector<1x32xf32>
    %454 = vector.extract_strided_slice %285 {offsets = [0, 0], sizes = [8, 32], strides = [1, 1]} : vector<8x96xf32> to vector<8x32xf32>
    %cst_93 = arith.constant dense<0.000000e+00> : vector<8x1xf32>
    %455 = tpu.matmul %454, %415, %cst_93 {dimension_numbers = #tpu.dot_dimension_numbers<[1], [1], [0], [0], [0, 0, 1, 0], [], []>} : vector<8x32xf32>, vector<1x32xf32>, vector<8x1xf32> -> vector<8x1xf32>
    %456 = tpu.iota {dimensions = array<i32: 1>} : vector<1x3xi32>
    %c0_i32_94 = arith.constant 0 : i32
    %457 = vector.broadcast %c0_i32_94 : i32 to vector<1x3xi32>
    %458 = arith.cmpi eq, %456, %457 : vector<1x3xi32>
    %459 = arith.extui %458 : vector<1x3xi1> to vector<1x3xi32>
    %460 = arith.sitofp %459 : vector<1x3xi32> to vector<1x3xf32>
    %461 = vector.broadcast %455 : vector<8x1xf32> to vector<8x3xf32>
    %462 = vector.broadcast %460 : vector<1x3xf32> to vector<8x3xf32>
    %463 = arith.mulf %461, %462 : vector<8x3xf32>
    %464 = arith.addf %386, %463 : vector<8x3xf32>
    %465 = vector.extract_strided_slice %285 {offsets = [0, 32], sizes = [8, 32], strides = [1, 1]} : vector<8x96xf32> to vector<8x32xf32>
    %cst_95 = arith.constant dense<0.000000e+00> : vector<8x1xf32>
    %466 = tpu.matmul %465, %434, %cst_95 {dimension_numbers = #tpu.dot_dimension_numbers<[1], [1], [0], [0], [0, 0, 1, 0], [], []>} : vector<8x32xf32>, vector<1x32xf32>, vector<8x1xf32> -> vector<8x1xf32>
    %467 = tpu.iota {dimensions = array<i32: 1>} : vector<1x3xi32>
    %c1_i32_96 = arith.constant 1 : i32
    %468 = vector.broadcast %c1_i32_96 : i32 to vector<1x3xi32>
    %469 = arith.cmpi eq, %467, %468 : vector<1x3xi32>
    %470 = arith.extui %469 : vector<1x3xi1> to vector<1x3xi32>
    %471 = arith.sitofp %470 : vector<1x3xi32> to vector<1x3xf32>
    %472 = vector.broadcast %466 : vector<8x1xf32> to vector<8x3xf32>
    %473 = vector.broadcast %471 : vector<1x3xf32> to vector<8x3xf32>
    %474 = arith.mulf %472, %473 : vector<8x3xf32>
    %475 = arith.addf %464, %474 : vector<8x3xf32>
    %476 = vector.extract_strided_slice %285 {offsets = [0, 64], sizes = [8, 32], strides = [1, 1]} : vector<8x96xf32> to vector<8x32xf32>
    %cst_97 = arith.constant dense<0.000000e+00> : vector<8x1xf32>
    %477 = tpu.matmul %476, %453, %cst_97 {dimension_numbers = #tpu.dot_dimension_numbers<[1], [1], [0], [0], [0, 0, 1, 0], [], []>} : vector<8x32xf32>, vector<1x32xf32>, vector<8x1xf32> -> vector<8x1xf32>
    %478 = tpu.iota {dimensions = array<i32: 1>} : vector<1x3xi32>
    %c2_i32_98 = arith.constant 2 : i32
    %479 = vector.broadcast %c2_i32_98 : i32 to vector<1x3xi32>
    %480 = arith.cmpi eq, %478, %479 : vector<1x3xi32>
    %481 = arith.extui %480 : vector<1x3xi1> to vector<1x3xi32>
    %482 = arith.sitofp %481 : vector<1x3xi32> to vector<1x3xf32>
    %483 = vector.broadcast %477 : vector<8x1xf32> to vector<8x3xf32>
    %484 = vector.broadcast %482 : vector<1x3xf32> to vector<8x3xf32>
    %485 = arith.mulf %483, %484 : vector<8x3xf32>
    %486 = arith.addf %475, %485 : vector<8x3xf32>
    %cst_99 = arith.constant dense<0xFF800000> : vector<8xf32>
    %487 = vector.multi_reduction <maximumf>, %486, %cst_99 [1] : vector<8x3xf32> to vector<8xf32>
    %488 = vector.shape_cast %487 : vector<8xf32> to vector<8x1xf32>
    %489 = vector.broadcast %488 : vector<8x1xf32> to vector<8x3xf32>
    %490 = arith.subf %486, %489 : vector<8x3xf32>
    %491 = math.exp %490 : vector<8x3xf32>
    %cst_100 = arith.constant dense<0.000000e+00> : vector<8xf32>
    %492 = vector.multi_reduction <add>, %491, %cst_100 [1] : vector<8x3xf32> to vector<8xf32>
    %493 = vector.shape_cast %492 : vector<8xf32> to vector<8x1xf32>
    %494 = tpu.reciprocal %493 {approx = true} : vector<8x1xf32> -> vector<8x1xf32>
    %495 = vector.broadcast %494 : vector<8x1xf32> to vector<8x3xf32>
    %496 = arith.mulf %491, %495 : vector<8x3xf32>
    %497 = vector.extract_strided_slice %285 {offsets = [0, 0], sizes = [8, 32], strides = [1, 1]} : vector<8x96xf32> to vector<8x32xf32>
    %498 = vector.extract_strided_slice %496 {offsets = [0, 0], sizes = [8, 1], strides = [1, 1]} : vector<8x3xf32> to vector<8x1xf32>
    %499 = vector.broadcast %498 : vector<8x1xf32> to vector<8x32xf32>
    %500 = arith.mulf %499, %497 : vector<8x32xf32>
    %cst_101 = arith.constant dense<0.000000e+00> : vector<32xf32>
    %501 = vector.multi_reduction <add>, %500, %cst_101 [0] : vector<8x32xf32> to vector<32xf32>
    %502 = vector.shape_cast %501 : vector<32xf32> to vector<1x32xf32>
    %503 = arith.mulf %502, %502 : vector<1x32xf32>
    %cst_102 = arith.constant dense<0.000000e+00> : vector<1xf32>
    %504 = vector.multi_reduction <add>, %503, %cst_102 [1] : vector<1x32xf32> to vector<1xf32>
    %505 = vector.shape_cast %504 : vector<1xf32> to vector<1x1xf32>
    %cst_103 = arith.constant 1.000000e+00 : f32
    %506 = vector.broadcast %cst_103 : f32 to vector<1x1xf32>
    %507 = arith.addf %506, %505 : vector<1x1xf32>
    %508 = arith.divf %505, %507 : vector<1x1xf32>
    %509 = vector.broadcast %508 : vector<1x1xf32> to vector<1x32xf32>
    %510 = arith.mulf %509, %502 : vector<1x32xf32>
    %cst_104 = arith.constant 9.99999971E-10 : f32
    %511 = vector.broadcast %cst_104 : f32 to vector<1x1xf32>
    %512 = arith.addf %505, %511 : vector<1x1xf32>
    %513 = math.rsqrt %512 : vector<1x1xf32>
    %514 = vector.broadcast %513 : vector<1x1xf32> to vector<1x32xf32>
    %515 = arith.mulf %510, %514 : vector<1x32xf32>
    %516 = vector.extract_strided_slice %285 {offsets = [0, 32], sizes = [8, 32], strides = [1, 1]} : vector<8x96xf32> to vector<8x32xf32>
    %517 = vector.extract_strided_slice %496 {offsets = [0, 1], sizes = [8, 1], strides = [1, 1]} : vector<8x3xf32> to vector<8x1xf32>
    %518 = vector.broadcast %517 : vector<8x1xf32> to vector<8x32xf32>
    %519 = arith.mulf %518, %516 : vector<8x32xf32>
    %cst_105 = arith.constant dense<0.000000e+00> : vector<32xf32>
    %520 = vector.multi_reduction <add>, %519, %cst_105 [0] : vector<8x32xf32> to vector<32xf32>
    %521 = vector.shape_cast %520 : vector<32xf32> to vector<1x32xf32>
    %522 = arith.mulf %521, %521 : vector<1x32xf32>
    %cst_106 = arith.constant dense<0.000000e+00> : vector<1xf32>
    %523 = vector.multi_reduction <add>, %522, %cst_106 [1] : vector<1x32xf32> to vector<1xf32>
    %524 = vector.shape_cast %523 : vector<1xf32> to vector<1x1xf32>
    %cst_107 = arith.constant 1.000000e+00 : f32
    %525 = vector.broadcast %cst_107 : f32 to vector<1x1xf32>
    %526 = arith.addf %525, %524 : vector<1x1xf32>
    %527 = arith.divf %524, %526 : vector<1x1xf32>
    %528 = vector.broadcast %527 : vector<1x1xf32> to vector<1x32xf32>
    %529 = arith.mulf %528, %521 : vector<1x32xf32>
    %cst_108 = arith.constant 9.99999971E-10 : f32
    %530 = vector.broadcast %cst_108 : f32 to vector<1x1xf32>
    %531 = arith.addf %524, %530 : vector<1x1xf32>
    %532 = math.rsqrt %531 : vector<1x1xf32>
    %533 = vector.broadcast %532 : vector<1x1xf32> to vector<1x32xf32>
    %534 = arith.mulf %529, %533 : vector<1x32xf32>
    %535 = vector.extract_strided_slice %285 {offsets = [0, 64], sizes = [8, 32], strides = [1, 1]} : vector<8x96xf32> to vector<8x32xf32>
    %536 = vector.extract_strided_slice %496 {offsets = [0, 2], sizes = [8, 1], strides = [1, 1]} : vector<8x3xf32> to vector<8x1xf32>
    %537 = vector.broadcast %536 : vector<8x1xf32> to vector<8x32xf32>
    %538 = arith.mulf %537, %535 : vector<8x32xf32>
    %cst_109 = arith.constant dense<0.000000e+00> : vector<32xf32>
    %539 = vector.multi_reduction <add>, %538, %cst_109 [0] : vector<8x32xf32> to vector<32xf32>
    %540 = vector.shape_cast %539 : vector<32xf32> to vector<1x32xf32>
    %541 = arith.mulf %540, %540 : vector<1x32xf32>
    %cst_110 = arith.constant dense<0.000000e+00> : vector<1xf32>
    %542 = vector.multi_reduction <add>, %541, %cst_110 [1] : vector<1x32xf32> to vector<1xf32>
    %543 = vector.shape_cast %542 : vector<1xf32> to vector<1x1xf32>
    %cst_111 = arith.constant 1.000000e+00 : f32
    %544 = vector.broadcast %cst_111 : f32 to vector<1x1xf32>
    %545 = arith.addf %544, %543 : vector<1x1xf32>
    %546 = arith.divf %543, %545 : vector<1x1xf32>
    %547 = vector.broadcast %546 : vector<1x1xf32> to vector<1x32xf32>
    %548 = arith.mulf %547, %540 : vector<1x32xf32>
    %cst_112 = arith.constant 9.99999971E-10 : f32
    %549 = vector.broadcast %cst_112 : f32 to vector<1x1xf32>
    %550 = arith.addf %543, %549 : vector<1x1xf32>
    %551 = math.rsqrt %550 : vector<1x1xf32>
    %552 = vector.broadcast %551 : vector<1x1xf32> to vector<1x32xf32>
    %553 = arith.mulf %548, %552 : vector<1x32xf32>
    %554 = arith.addf %515, %534 : vector<1x32xf32>
    %555 = arith.addf %554, %553 : vector<1x32xf32>
    %c1_i32_113 = arith.constant 1 : i32
    %556 = vector.broadcast %c1_i32_113 : i32 to vector<2x1xi32>
    %557 = arith.cmpi eq, %3, %556 : vector<2x1xi32>
    %cst_114 = arith.constant 0.000000e+00 : f32
    %558 = vector.shape_cast %557 : vector<2x1xi1> to vector<2x1xi1>
    %559 = vector.broadcast %558 : vector<2x1xi1> to vector<2x32xi1>
    %560 = vector.shape_cast %555 : vector<1x32xf32> to vector<1x32xf32>
    %561 = vector.broadcast %560 : vector<1x32xf32> to vector<2x32xf32>
    %562 = vector.broadcast %cst_114 : f32 to vector<2x32xf32>
    %563 = arith.select %559, %561, %562 : vector<2x32xi1>, vector<2x32xf32>
    %564 = arith.addf %284, %563 : vector<2x32xf32>
    %c0_115 = arith.constant 0 : index
    %c0_116 = arith.constant 0 : index
    %565 = vector.load %arg3[%c0_115, %c0_116] : memref<32x4xf32, #tpu.memory_space<vmem>>, vector<32x4xf32>
    %cst_117 = arith.constant dense<0.000000e+00> : vector<2x4xf32>
    %566 = tpu.matmul %564, %565, %cst_117 {dimension_numbers = #tpu.dot_dimension_numbers<[1], [0], [0], [1], [0, 0, 1, 1], [], []>} : vector<2x32xf32>, vector<32x4xf32>, vector<2x4xf32> -> vector<2x4xf32>
    %c0_118 = arith.constant 0 : index
    %c0_119 = arith.constant 0 : index
    %567 = vector.load %arg4[%c0_118, %c0_119] : memref<1x4xf32, #tpu.memory_space<vmem>>, vector<1x4xf32>
    %568 = vector.broadcast %567 : vector<1x4xf32> to vector<2x4xf32>
    %569 = arith.addf %566, %568 : vector<2x4xf32>
    %cst_120 = arith.constant dense<0xFF800000> : vector<2xf32>
    %570 = vector.multi_reduction <maximumf>, %569, %cst_120 [1] : vector<2x4xf32> to vector<2xf32>
    %571 = vector.shape_cast %570 : vector<2xf32> to vector<2x1xf32>
    %572 = vector.broadcast %571 : vector<2x1xf32> to vector<2x4xf32>
    %573 = arith.subf %569, %572 : vector<2x4xf32>
    %574 = math.exp %573 : vector<2x4xf32>
    %cst_121 = arith.constant dense<0.000000e+00> : vector<2xf32>
    %575 = vector.multi_reduction <add>, %574, %cst_121 [1] : vector<2x4xf32> to vector<2xf32>
    %576 = vector.shape_cast %575 : vector<2xf32> to vector<2x1xf32>
    %577 = math.log %576 : vector<2x1xf32>
    %578 = vector.broadcast %571 : vector<2x1xf32> to vector<2x4xf32>
    %579 = arith.subf %569, %578 : vector<2x4xf32>
    %580 = vector.broadcast %577 : vector<2x1xf32> to vector<2x4xf32>
    %581 = arith.subf %579, %580 : vector<2x4xf32>
    %c0_122 = arith.constant 0 : index
    %c0_123 = arith.constant 0 : index
    %582 = vector.load %arg5[%c0_122, %c0_123] : memref<2x4xf32, #tpu.memory_space<vmem>>, vector<2x4xf32>
    tpu.vector_store %arg5[%c0_122, %c0_123], %581 {strides = array<i32>} : memref<2x4xf32, #tpu.memory_space<vmem>>, vector<2x4xf32>,
    return
  }
  func.func @transform_0(%arg0: i32) -> (i32, i32) {
    %c0_i32 = arith.constant 0 : i32
    %c0_i32_0 = arith.constant 0 : i32
    %c0_i32_1 = arith.constant 0 : i32
    return %c0_i32, %c0_i32_0 : i32, i32
  }
  func.func @transform_1(%arg0: i32) -> (i32, i32) {
    %c0_i32 = arith.constant 0 : i32
    %c0_i32_0 = arith.constant 0 : i32
    %c0_i32_1 = arith.constant 0 : i32
    return %c0_i32, %c0_i32_0 : i32, i32
  }
  func.func @transform_2(%arg0: i32) -> (i32, i32) {
    %c0_i32 = arith.constant 0 : i32
    %c0_i32_0 = arith.constant 0 : i32
    %c0_i32_1 = arith.constant 0 : i32
    return %c0_i32, %c0_i32_0 : i32, i32
  }
  func.func @transform_3(%arg0: i32) -> (i32, i32) {
    %c0_i32 = arith.constant 0 : i32
    %c0_i32_0 = arith.constant 0 : i32
    %c0_i32_1 = arith.constant 0 : i32
    return %c0_i32, %c0_i32_0 : i32, i32
  }
  func.func @transform_4(%arg0: i32) -> (i32, i32) {
    %c0_i32 = arith.constant 0 : i32
    %c0_i32_0 = arith.constant 0 : i32
    %c0_i32_1 = arith.constant 0 : i32
    return %c0_i32, %c0_i32_0 : i32, i32
  }
}

</mosaic_0001>

<llo_original>
// kernel: eshgat_forward.5
$region0: #{eshgat_forward.5}
  #allocation0 [shape = 'u32[]', space=smem, size = 0x4, offset = 0x4, fixed_abs, tag = 'smem constant byte address 0x4 - core index']
  #allocation1 [shape = 'u32[144,128]{1,0:T(1,128)}', space=vmem, size = 0x12000, scoped, tag = 'internal scratch']
  %s0 = inlined_call_operand.vmem [shape: f32[2,8,32], index: 0, kind: input, shape index: {}]
  %s1 = inlined_call_operand.vmem [shape: f32[2,8,8], index: 1, kind: input, shape index: {}]
  %s2 = inlined_call_operand.vmem [shape: f32[32,32], index: 2, kind: input, shape index: {}]
  %s3 = inlined_call_operand.vmem [shape: f32[1,32], index: 3, kind: input, shape index: {}]
  %s4 = inlined_call_operand.vmem [shape: f32[32,32], index: 4, kind: input, shape index: {}]
  %s5 = inlined_call_operand.vmem [shape: f32[1,32], index: 5, kind: input, shape index: {}]
  %s6 = inlined_call_operand.vmem [shape: f32[32,32], index: 6, kind: input, shape index: {}]
  %s7 = inlined_call_operand.vmem [shape: f32[1,32], index: 7, kind: input, shape index: {}]
  %s8 = inlined_call_operand.vmem [shape: f32[2,8,32], index: 8, kind: output, shape index: {}]
  %s9 = sld [smem:[#allocation0]]
  $region65: #{eshgat_forward.5} parent=0
    _
  %s11 = ssub.s32 1, %s9
  %s12 = scalar_select 0, %s11, %s9
  loop: start=0, step=1, limit=4
  $region2: #{eshgat_forward.5} parent=0 // loop_pre_header
    _
  $region3: #{eshgat_forward.5} parent=0 // loop_header
    %s14 = sphi 0, %s18
    %p15 = scmp.ge.s32.totalorder %s14, 4
    %s24 = sphi 0, %s26
    %s27 = sphi 0, %s24
    %s28 = sphi 0, %s27
    %s44 = sphi 0, %s28
    %s50 = sphi 0, %s52
    %s53 = sphi 0, %s50
    %s54 = sphi 0, %s53
    %s70 = sphi 0, %s54
    %s74 = sphi 0, %s74
    %s76 = sphi 0, %s74
    %s77 = sphi 0, %s76
    %s91 = sphi 0, %s77
    %s95 = sphi 0, %s95
    %s97 = sphi 0, %s95
    %s98 = sphi 0, %s97
    %s112 = sphi 0, %s98
    %s116 = sphi 0, %s116
    %s118 = sphi 0, %s116
    %s119 = sphi 0, %s118
    %s133 = sphi 0, %s119
    %s137 = sphi 0, %s137
    %s139 = sphi 0, %s137
    %s140 = sphi 0, %s139
    %s154 = sphi 0, %s140
    %s158 = sphi 0, %s158
    %s160 = sphi 0, %s158
    %s161 = sphi 0, %s160
    %s175 = sphi 0, %s161
    %s179 = sphi 0, %s179
    %s181 = sphi 0, %s179
    %s182 = sphi 0, %s181
    %s196 = sphi 0, %s182
    %s202 = sphi 0, %s204
    %s205 = sphi 0, %s202
    %s206 = sphi 0, %s205
    %s222 = sphi 0, %s206
  $region4: #{eshgat_forward.5} parent=0 // loop_header_branch
    %17 = sbr.rel (%p15) target = $region8
  $region5: #{eshgat_forward.5} parent=0 // loop_body
    %s19 = ssub.s32 %s14, 1
    %s20 = ssub.s32 %s14, 2
    %s21 = sadd.s32 %s14, 1
    %s22 = ssub.s32 %s14, %s21
    %p23 = scmp.eq.s32.totalorder %s22, 0
    %s25 = sadd.s32 %s24, 1
    %s26 = scalar_select %p23, %s24, %s25
    %p29 = pneg %p23
    %p30 = scmp.eq.s32.totalorder %s14, 1
    %p31 = por %p29, %p30
    %p32 = scmp.ne.s32.totalorder %s24, %s27
    %p33 = scmp.eq.s32.totalorder %s14, 0
    %p34 = por %p32, %p33
    %p35 = scmp.ne.s32.totalorder %s24, %s27
    %p36 = scmp.eq.s32.totalorder %s19, 1
    %p37 = por %p35, %p36
    %p38 = scmp.ne.s32.totalorder %s27, %s28
    %p39 = scmp.eq.s32.totalorder %s19, 0
    %p40 = por %p38, %p39
    %p41 = scmp.ne.s32.totalorder %s27, %s28
    %p42 = scmp.eq.s32.totalorder %s20, 1
    %p43 = por %p41, %p42
    %p45 = scmp.ne.s32.totalorder %s28, %s44
    %p46 = scmp.eq.s32.totalorder %s20, 0
    %p47 = por %p45, %p46
    %s48 = ssub.s32 %s14, %s21
    %p49 = scmp.eq.s32.totalorder %s48, 0
    %s51 = sadd.s32 %s50, 1
    %s52 = scalar_select %p49, %s50, %s51
    %p55 = pneg %p49
    %p56 = scmp.eq.s32.totalorder %s14, 1
    %p57 = por %p55, %p56
    %p58 = scmp.ne.s32.totalorder %s50, %s53
    %p59 = scmp.eq.s32.totalorder %s14, 0
    %p60 = por %p58, %p59
    %p61 = scmp.ne.s32.totalorder %s50, %s53
    %p62 = scmp.eq.s32.totalorder %s19, 1
    %p63 = por %p61, %p62
    %p64 = scmp.ne.s32.totalorder %s53, %s54
    %p65 = scmp.eq.s32.totalorder %s19, 0
    %p66 = por %p64, %p65
    %p67 = scmp.ne.s32.totalorder %s53, %s54
    %p68 = scmp.eq.s32.totalorder %s20, 1
    %p69 = por %p67, %p68
    %p71 = scmp.ne.s32.totalorder %s54, %s70
    %p72 = scmp.eq.s32.totalorder %s20, 0
    %p73 = por %p71, %p72
    %s75 = sadd.s32 %s74, 1
    %p78 = scmp.eq.s32.totalorder %s14, 1
    %p79 = scmp.ne.s32.totalorder %s74, %s76
    %p80 = scmp.eq.s32.totalorder %s14, 0
    %p81 = por %p79, %p80
    %p82 = scmp.ne.s32.totalorder %s74, %s76
    %p83 = scmp.eq.s32.totalorder %s19, 1
    %p84 = por %p82, %p83
    %p85 = scmp.ne.s32.totalorder %s76, %s77
    %p86 = scmp.eq.s32.totalorder %s19, 0
    %p87 = por %p85, %p86
    %p88 = scmp.ne.s32.totalorder %s76, %s77
    %p89 = scmp.eq.s32.totalorder %s20, 1
    %p90 = por %p88, %p89
    %p92 = scmp.ne.s32.totalorder %s77, %s91
    %p93 = scmp.eq.s32.totalorder %s20, 0
    %p94 = por %p92, %p93
    %s96 = sadd.s32 %s95, 1
    %p99 = scmp.eq.s32.totalorder %s14, 1
    %p100 = scmp.ne.s32.totalorder %s95, %s97
    %p101 = scmp.eq.s32.totalorder %s14, 0
    %p102 = por %p100, %p101
    %p103 = scmp.ne.s32.totalorder %s95, %s97
    %p104 = scmp.eq.s32.totalorder %s19, 1
    %p105 = por %p103, %p104
    %p106 = scmp.ne.s32.totalorder %s97, %s98
    %p107 = scmp.eq.s32.totalorder %s19, 0
    %p108 = por %p106, %p107
    %p109 = scmp.ne.s32.totalorder %s97, %s98
    %p110 = scmp.eq.s32.totalorder %s20, 1
    %p111 = por %p109, %p110
    %p113 = scmp.ne.s32.totalorder %s98, %s112
    %p114 = scmp.eq.s32.totalorder %s20, 0
    %p115 = por %p113, %p114
    %s117 = sadd.s32 %s116, 1
    %p120 = scmp.eq.s32.totalorder %s14, 1
    %p121 = scmp.ne.s32.totalorder %s116, %s118
    %p122 = scmp.eq.s32.totalorder %s14, 0
    %p123 = por %p121, %p122
    %p124 = scmp.ne.s32.totalorder %s116, %s118
    %p125 = scmp.eq.s32.totalorder %s19, 1
    %p126 = por %p124, %p125
    %p127 = scmp.ne.s32.totalorder %s118, %s119
    %p128 = scmp.eq.s32.totalorder %s19, 0
    %p129 = por %p127, %p128
    %p130 = scmp.ne.s32.totalorder %s118, %s119
    %p131 = scmp.eq.s32.totalorder %s20, 1
    %p132 = por %p130, %p131
    %p134 = scmp.ne.s32.totalorder %s119, %s133
    %p135 = scmp.eq.s32.totalorder %s20, 0
    %p136 = por %p134, %p135
    %s138 = sadd.s32 %s137, 1
    %p141 = scmp.eq.s32.totalorder %s14, 1
    %p142 = scmp.ne.s32.totalorder %s137, %s139
    %p143 = scmp.eq.s32.totalorder %s14, 0
    %p144 = por %p142, %p143
    %p145 = scmp.ne.s32.totalorder %s137, %s139
    %p146 = scmp.eq.s32.totalorder %s19, 1
    %p147 = por %p145, %p146
    %p148 = scmp.ne.s32.totalorder %s139, %s140
    %p149 = scmp.eq.s32.totalorder %s19, 0
    %p150 = por %p148, %p149
    %p151 = scmp.ne.s32.totalorder %s139, %s140
    %p152 = scmp.eq.s32.totalorder %s20, 1
    %p153 = por %p151, %p152
    %p155 = scmp.ne.s32.totalorder %s140, %s154
    %p156 = scmp.eq.s32.totalorder %s20, 0
    %p157 = por %p155, %p156
    %s159 = sadd.s32 %s158, 1
    %p162 = scmp.eq.s32.totalorder %s14, 1
    %p163 = scmp.ne.s32.totalorder %s158, %s160
    %p164 = scmp.eq.s32.totalorder %s14, 0
    %p165 = por %p163, %p164
    %p166 = scmp.ne.s32.totalorder %s158, %s160
    %p167 = scmp.eq.s32.totalorder %s19, 1
    %p168 = por %p166, %p167
    %p169 = scmp.ne.s32.totalorder %s160, %s161
    %p170 = scmp.eq.s32.totalorder %s19, 0
    %p171 = por %p169, %p170
    %p172 = scmp.ne.s32.totalorder %s160, %s161
    %p173 = scmp.eq.s32.totalorder %s20, 1
    %p174 = por %p172, %p173
    %p176 = scmp.ne.s32.totalorder %s161, %s175
    %p177 = scmp.eq.s32.totalorder %s20, 0
    %p178 = por %p176, %p177
    %s180 = sadd.s32 %s179, 1
    %p183 = scmp.eq.s32.totalorder %s14, 1
    %p184 = scmp.ne.s32.totalorder %s179, %s181
    %p185 = scmp.eq.s32.totalorder %s14, 0
    %p186 = por %p184, %p185
    %p187 = scmp.ne.s32.totalorder %s179, %s181
    %p188 = scmp.eq.s32.totalorder %s19, 1
    %p189 = por %p187, %p188
    %p190 = scmp.ne.s32.totalorder %s181, %s182
    %p191 = scmp.eq.s32.totalorder %s19, 0
    %p192 = por %p190, %p191
    %p193 = scmp.ne.s32.totalorder %s181, %s182
    %p194 = scmp.eq.s32.totalorder %s20, 1
    %p195 = por %p193, %p194
    %p197 = scmp.ne.s32.totalorder %s182, %s196
    %p198 = scmp.eq.s32.totalorder %s20, 0
    %p199 = por %p197, %p198
    %s200 = ssub.s32 %s14, %s21
    %p201 = scmp.eq.s32.totalorder %s200, 0
    %s203 = sadd.s32 %s202, 1
    %s204 = scalar_select %p201, %s202, %s203
    %p207 = pneg %p201
    %p208 = scmp.eq.s32.totalorder %s14, 1
    %p209 = por %p207, %p208
    %p210 = scmp.ne.s32.totalorder %s202, %s205
    %p211 = scmp.eq.s32.totalorder %s14, 0
    %p212 = por %p210, %p211
    %p213 = scmp.ne.s32.totalorder %s202, %s205
    %p214 = scmp.eq.s32.totalorder %s19, 1
    %p215 = por %p213, %p214
    %p216 = scmp.ne.s32.totalorder %s205, %s206
    %p217 = scmp.eq.s32.totalorder %s19, 0
    %p218 = por %p216, %p217
    %p219 = scmp.ne.s32.totalorder %s205, %s206
    %p220 = scmp.eq.s32.totalorder %s20, 1
    %p221 = por %p219, %p220
    %p223 = scmp.ne.s32.totalorder %s206, %s222
    %p224 = scmp.eq.s32.totalorder %s20, 0
    %p225 = por %p223, %p224
    %p226 = scmp.le.s32.totalorder 1, %s14
    %p227 = scmp.lt.s32.totalorder %s14, 3
    %p228 = pnand %p226, %p227
    %p229 = pneg %p228
    // Predicated region
    $region9: #{eshgat_forward.5} parent=5 // pred_check
      _
    $region10: #{eshgat_forward.5} parent=5 // pred_check_branch
      %231 = sbr.rel (%p228) target = $region12
    $region11: #{eshgat_forward.5} parent=5 // pred_region
      %s232 = ssub.s32 %s14, 1
      // Predicated region
      $region13: #{eshgat_forward.5} parent=11 // pred_check
        %p233 = pneg %p87
      $region14: #{eshgat_forward.5} parent=11 // pred_check_branch
        %235 = sbr.rel (%p233) target = $region16
      $region15: #{eshgat_forward.5} parent=11 // pred_region
        _
      $region16: #{eshgat_forward.5} parent=11 // pred_fallthru
        _
      // Predicated region
      $region17: #{eshgat_forward.5} parent=11 // pred_check
        %p236 = pneg %p108
      $region18: #{eshgat_forward.5} parent=11 // pred_check_branch
        %238 = sbr.rel (%p236) target = $region20
      $region19: #{eshgat_forward.5} parent=11 // pred_region
        _
      $region20: #{eshgat_forward.5} parent=11 // pred_fallthru
        _
      // Predicated region
      $region21: #{eshgat_forward.5} parent=11 // pred_check
        %p239 = pneg %p129
      $region22: #{eshgat_forward.5} parent=11 // pred_check_branch
        %241 = sbr.rel (%p239) target = $region24
      $region23: #{eshgat_forward.5} parent=11 // pred_region
        _
      $region24: #{eshgat_forward.5} parent=11 // pred_fallthru
        _
      // Predicated region
      $region25: #{eshgat_forward.5} parent=11 // pred_check
        %p242 = pneg %p150
      $region26: #{eshgat_forward.5} parent=11 // pred_check_branch
        %244 = sbr.rel (%p242) target = $region28
      $region27: #{eshgat_forward.5} parent=11 // pred_region
        _
      $region28: #{eshgat_forward.5} parent=11 // pred_fallthru
        _
      // Predicated region
      $region29: #{eshgat_forward.5} parent=11 // pred_check
        %p245 = pneg %p171
      $region30: #{eshgat_forward.5} parent=11 // pred_check_branch
        %247 = sbr.rel (%p245) target = $region32
      $region31: #{eshgat_forward.5} parent=11 // pred_region
        _
      $region32: #{eshgat_forward.5} parent=11 // pred_fallthru
        _
      // Predicated region
      $region33: #{eshgat_forward.5} parent=11 // pred_check
        %p248 = pneg %p192
      $region34: #{eshgat_forward.5} parent=11 // pred_check_branch
        %250 = sbr.rel (%p248) target = $region36
      $region35: #{eshgat_forward.5} parent=11 // pred_region
        _
      $region36: #{eshgat_forward.5} parent=11 // pred_fallthru
        _
    $region12: #{eshgat_forward.5} parent=5 // pred_fallthru
      _
    %p251 = scmp.lt.s32.totalorder %s14, 2
    // Predicated region
    $region37: #{eshgat_forward.5} parent=5 // pred_check
      %p252 = pneg %p251
    $region38: #{eshgat_forward.5} parent=5 // pred_check_branch
      %254 = sbr.rel (%p252) target = $region40
    $region39: #{eshgat_forward.5} parent=5 // pred_region
      // Predicated region
      $region41: #{eshgat_forward.5} parent=39 // pred_check
        %p255 = pneg %p34
      $region42: #{eshgat_forward.5} parent=39 // pred_check_branch
        %257 = sbr.rel (%p255) target = $region44
      $region43: #{eshgat_forward.5} parent=39 // pred_region
        %p258 = scmp.lt.s32.totalorder %s14, 1
        %s259 = scalar_select %p258, %s14, 1
        %s260 = smul.addr %s259, 8
        %s261 = scalar_lea.vmem %s0, %s260
      $region44: #{eshgat_forward.5} parent=39 // pred_fallthru
        _
      // Predicated region
      $region45: #{eshgat_forward.5} parent=39 // pred_check
        %p262 = pneg %p60
      $region46: #{eshgat_forward.5} parent=39 // pred_check_branch
        %264 = sbr.rel (%p262) target = $region48
      $region47: #{eshgat_forward.5} parent=39 // pred_region
        %p265 = scmp.lt.s32.totalorder %s14, 1
        %s266 = scalar_select %p265, %s14, 1
        %s267 = smul.addr %s266, 8
        %s268 = scalar_lea.vmem %s1, %s267
      $region48: #{eshgat_forward.5} parent=39 // pred_fallthru
        _
    $region40: #{eshgat_forward.5} parent=5 // pred_fallthru
      _
    %p269 = scmp.le.s32.totalorder 1, %s14
    %p270 = scmp.lt.s32.totalorder %s14, 3
    %p271 = pnand %p269, %p270
    %p272 = pneg %p271
    // Predicated region
    $region49: #{eshgat_forward.5} parent=5 // pred_check
      _
    $region50: #{eshgat_forward.5} parent=5 // pred_check_branch
      %274 = sbr.rel (%p271) target = $region52
    $region51: #{eshgat_forward.5} parent=5 // pred_region
      %s275 = ssub.s32 %s14, 1
      %p276 = scmp.lt.s32.totalorder %s19, 1
      %s277 = scalar_select %p276, %s19, 1
      %s278 = smul.addr %s277, 8
      %s279 = scalar_lea.vmem %s0, %s278
      %p280 = pneg %p40
      %p281 = pneg %p37
      %p282 = scmp.lt.s32.totalorder %s19, 1
      %s283 = scalar_select %p282, %s19, 1
      %s284 = smul.addr %s283, 8
      %s285 = scalar_lea.vmem %s1, %s284
      %p286 = pneg %p66
      %p287 = pneg %p63
      %p288 = pneg %p87
      %p289 = pneg %p84
      %p290 = pneg %p108
      %p291 = pneg %p105
      %p292 = pneg %p129
      %p293 = pneg %p126
      %p294 = pneg %p150
      %p295 = pneg %p147
      %p296 = pneg %p171
      %p297 = pneg %p168
      %p298 = pneg %p192
      %p299 = pneg %p189
      %p300 = pneg %p218
      %p301 = pneg %p215
      %p302 = scmp.lt.s32.totalorder %s19, 1
      %s303 = scalar_select %p302, %s19, 1
      %s304 = smul.addr %s303, 8
      %s305 = scalar_lea.vmem %s8, %s304
      %p306 = scmp.lt.s32.totalorder %s19, 1
      %s307 = scalar_select %p306, %s19, 1
      %s308 = smul.addr %s307, 8
      %s309 = scalar_lea.vmem %s0, %s308
      %p310 = scmp.lt.s32.totalorder %s19, 1
      %s311 = scalar_select %p310, %s19, 1
      %s312 = smul.addr %s311, 8
      %s313 = scalar_lea.vmem %s1, %s312
      %p314 = scmp.lt.s32.totalorder %s19, 1
      %s315 = scalar_select %p314, %s19, 1
      %s316 = smul.addr %s315, 8
      %s317 = scalar_lea.vmem %s8, %s316
      %v318 = vld [vmem:[%s309] sm:$0xff]
      %v319 = vld [vmem:[%s313] sm:$0xff]
      %v320 = vld [vmem:[%s2] sm:$0xff]
      %v321 = vld [vmem:[%s2 + $0x8] sm:$0xff]
      %v322 = vld [vmem:[%s2 + $0x10] sm:$0xff]
      %v323 = vld [vmem:[%s2 + $0x18] sm:$0xff]
      %vm324 = vcmask 261120
      %v326 = vsel %vm324, %v318, 0
      %328 = vmatprep.subr.mxu0 0.0
      %329 = vmatpush1.msra.mxu0 %v320
      %330 = vmatprep.subr.mxu0 0.0
      %331 = vmatpush1.msra.mxu0 %v321
      %332 = vmatprep.subr.mxu0 0.0
      %333 = vmatpush1.msra.mxu0 %v322
      %334 = vmatprep.subr.mxu0 0.0
      %335 = vmatpush1.msra.mxu0 %v323
      %336 = vmatprep.subr.mxu0 0.0
      %337 = vmatpush1.msra.mxu0 0.0
      %338 = vmatprep.subr.mxu0 0.0
      %339 = vmatpush1.msra.mxu0 0.0
      %340 = vmatprep.subr.mxu0 0.0
      %341 = vmatpush1.msra.mxu0 0.0
      %342 = vmatprep.subr.mxu0 0.0
      %343 = vmatpush1.msra.mxu0 0.0
      %344 = vmatprep.subr.mxu0 0.0
      %345 = vmatpush1.msra.mxu0 0.0
      %346 = vmatprep.subr.mxu0 0.0
      %347 = vmatpush1.msra.mxu0 0.0
      %348 = vmatprep.subr.mxu0 0.0
      %349 = vmatpush1.msra.mxu0 0.0
      %350 = vmatprep.subr.mxu0 0.0
      %351 = vmatpush1.msra.mxu0 0.0
      %352 = vmatprep.subr.mxu0 0.0
      %353 = vmatpush1.msra.mxu0 0.0
      %354 = vmatprep.subr.mxu0 0.0
      %355 = vmatpush1.msra.mxu0 0.0
      %356 = vmatprep.subr.mxu0 0.0
      %357 = vmatpush1.msra.mxu0 0.0
      %358 = vmatprep.subr.mxu0 0.0
      %359 = vmatpush1.msra.mxu0 0.0
      %360 = vmatprep.subr.mxu0 0.0
      %361 = vmatpush1.msra.mxu0 0.0
      %362 = vmatprep.subr.mxu0 0.0
      %363 = vmatpush1.msra.mxu0 0.0
      %364 = vmatprep.subr.mxu0 0.0
      %365 = vmatpush1.msra.mxu0 0.0
      %366 = vmatprep.subr.mxu0 0.0
      %367 = vmatpush1.msra.mxu0 0.0
      %368 = vmatprep.subr.mxu0 0.0
      %369 = vmatpush1.msra.mxu0 0.0
      %370 = vmatprep.subr.mxu0 0.0
      %371 = vmatpush1.msra.mxu0 0.0
      %372 = vmatprep.subr.mxu0 0.0
      %373 = vmatpush1.msra.mxu0 0.0
      %374 = vmatprep.subr.mxu0 0.0
      %375 = vmatpush1.msra.mxu0 0.0
      %376 = vmatprep.subr.mxu0 0.0
      %377 = vmatpush1.msra.mxu0 0.0
      %378 = vmatprep.subr.mxu0 0.0
      %379 = vmatpush1.msra.mxu0 0.0
      %380 = vmatprep.subr.mxu0 0.0
      %381 = vmatpush1.msra.mxu0 0.0
      %382 = vmatprep.subr.mxu0 0.0
      %383 = vmatpush1.msra.mxu0 0.0
      %384 = vmatprep.subr.mxu0 0.0
      %385 = vmatpush1.msra.mxu0 0.0
      %386 = vmatprep.subr.mxu0 0.0
      %387 = vmatpush1.msra.mxu0 0.0
      %388 = vmatprep.subr.mxu0 0.0
      %389 = vmatpush1.msra.mxu0 0.0
      %390 = vmatprep.subr.mxu0 0.0
      %391 = vmatpush1.msra.mxu0 0.0
      %392 = vmatprep.mubr.f32.mxu0 0.0
      %393 = vmatmul.mubr.f32.gmra.mrb[0].mxu0 %v326
      %v394 = vpop.f32.mrb[0].mxu0
      %v395 = vadd.f32 0.0, %v394
      %v396 = vpop.f32.mrb[0].mxu0
      %397 = vdwg.mxu0
      %v398 = vld [vmem:[%s3] sm:$0x1]
      %v400 = vlaneseq
      %v401 = vshrl.u32 %v400, 7
      %v402 = vsub.s32 0, %v401
      %v403 = vrot.slane %v398, %v402
      %vm405 = vcmask 64512
      %v407 = vsel %vm405, %v319, 0
      %409 = vmatprep.subr.mxu0 0.0
      %410 = vmatpush1.msra.mxu0 %v395
      %411 = vmatprep.subr.mxu0 0.0
      %412 = vmatpush1.msra.mxu0 0.0
      %413 = vmatprep.subr.mxu0 0.0
      %414 = vmatpush1.msra.mxu0 0.0
      %415 = vmatprep.subr.mxu0 0.0
      %416 = vmatpush1.msra.mxu0 0.0
      %417 = vmatprep.subr.mxu0 0.0
      %418 = vmatpush1.msra.mxu0 0.0
      %419 = vmatprep.subr.mxu0 0.0
      %420 = vmatpush1.msra.mxu0 0.0
      %421 = vmatprep.subr.mxu0 0.0
      %422 = vmatpush1.msra.mxu0 0.0
      %423 = vmatprep.subr.mxu0 0.0
      %424 = vmatpush1.msra.mxu0 0.0
      %425 = vmatprep.subr.mxu0 0.0
      %426 = vmatpush1.msra.mxu0 0.0
      %427 = vmatprep.subr.mxu0 0.0
      %428 = vmatpush1.msra.mxu0 0.0
      %429 = vmatprep.subr.mxu0 0.0
      %430 = vmatpush1.msra.mxu0 0.0
      %431 = vmatprep.subr.mxu0 0.0
      %432 = vmatpush1.msra.mxu0 0.0
      %433 = vmatprep.subr.mxu0 0.0
      %434 = vmatpush1.msra.mxu0 0.0
      %435 = vmatprep.subr.mxu0 0.0
      %436 = vmatpush1.msra.mxu0 0.0
      %437 = vmatprep.subr.mxu0 0.0
      %438 = vmatpush1.msra.mxu0 0.0
      %439 = vmatprep.subr.mxu0 0.0
      %440 = vmatpush1.msra.mxu0 0.0
      %441 = vmatprep.subr.mxu0 0.0
      %442 = vmatpush1.msra.mxu0 0.0
      %443 = vmatprep.subr.mxu0 0.0
      %444 = vmatpush1.msra.mxu0 0.0
      %445 = vmatprep.subr.mxu0 0.0
      %446 = vmatpush1.msra.mxu0 0.0
      %447 = vmatprep.subr.mxu0 0.0
      %448 = vmatpush1.msra.mxu0 0.0
      %449 = vmatprep.subr.mxu0 0.0
      %450 = vmatpush1.msra.mxu0 0.0
      %451 = vmatprep.subr.mxu0 0.0
      %452 = vmatpush1.msra.mxu0 0.0
      %453 = vmatprep.subr.mxu0 0.0
      %454 = vmatpush1.msra.mxu0 0.0
      %455 = vmatprep.subr.mxu0 0.0
      %456 = vmatpush1.msra.mxu0 0.0
      %457 = vmatprep.subr.mxu0 0.0
      %458 = vmatpush1.msra.mxu0 0.0
      %459 = vmatprep.subr.mxu0 0.0
      %460 = vmatpush1.msra.mxu0 0.0
      %461 = vmatprep.subr.mxu0 0.0
      %462 = vmatpush1.msra.mxu0 0.0
      %463 = vmatprep.subr.mxu0 0.0
      %464 = vmatpush1.msra.mxu0 0.0
      %465 = vmatprep.subr.mxu0 0.0
      %466 = vmatpush1.msra.mxu0 0.0
      %467 = vmatprep.subr.mxu0 0.0
      %468 = vmatpush1.msra.mxu0 0.0
      %469 = vmatprep.subr.mxu0 0.0
      %470 = vmatpush1.msra.mxu0 0.0
      %471 = vmatprep.subr.mxu0 0.0
      %472 = vmatpush1.msra.mxu0 0.0
      %473 = vmatprep.mubr.f32.mxu0 0.0
      %474 = vmatmul.mubr.f32.gmra.mrb[0].mxu0 %v407
      %v475 = vpop.f32.mrb[0].mxu0
      %v476 = vadd.f32 %v403, %v475
      %v477 = vpop.f32.mrb[0].mxu0
      %478 = vdwg.mxu0
      %v479 = vmax.f32 %v476, 0.0
      %v480 = vld [vmem:[%s4] sm:$0xff]
      %v481 = vld [vmem:[%s4 + $0x8] sm:$0xff]
      %v482 = vld [vmem:[%s4 + $0x10] sm:$0xff]
      %v483 = vld [vmem:[%s4 + $0x18] sm:$0xff]
      %v485 = vsel %vm324, %v479, 0
      %487 = vmatprep.subr.mxu0 0.0
      %488 = vmatpush1.msra.mxu0 %v480
      %489 = vmatprep.subr.mxu0 0.0
      %490 = vmatpush1.msra.mxu0 %v481
      %491 = vmatprep.subr.mxu0 0.0
      %492 = vmatpush1.msra.mxu0 %v482
      %493 = vmatprep.subr.mxu0 0.0
      %494 = vmatpush1.msra.mxu0 %v483
      %495 = vmatprep.subr.mxu0 0.0
      %496 = vmatpush1.msra.mxu0 0.0
      %497 = vmatprep.subr.mxu0 0.0
      %498 = vmatpush1.msra.mxu0 0.0
      %499 = vmatprep.subr.mxu0 0.0
      %500 = vmatpush1.msra.mxu0 0.0
      %501 = vmatprep.subr.mxu0 0.0
      %502 = vmatpush1.msra.mxu0 0.0
      %503 = vmatprep.subr.mxu0 0.0
      %504 = vmatpush1.msra.mxu0 0.0
      %505 = vmatprep.subr.mxu0 0.0
      %506 = vmatpush1.msra.mxu0 0.0
      %507 = vmatprep.subr.mxu0 0.0
      %508 = vmatpush1.msra.mxu0 0.0
      %509 = vmatprep.subr.mxu0 0.0
      %510 = vmatpush1.msra.mxu0 0.0
      %511 = vmatprep.subr.mxu0 0.0
      %512 = vmatpush1.msra.mxu0 0.0
      %513 = vmatprep.subr.mxu0 0.0
      %514 = vmatpush1.msra.mxu0 0.0
      %515 = vmatprep.subr.mxu0 0.0
      %516 = vmatpush1.msra.mxu0 0.0
      %517 = vmatprep.subr.mxu0 0.0
      %518 = vmatpush1.msra.mxu0 0.0
      %519 = vmatprep.subr.mxu0 0.0
      %520 = vmatpush1.msra.mxu0 0.0
      %521 = vmatprep.subr.mxu0 0.0
      %522 = vmatpush1.msra.mxu0 0.0
      %523 = vmatprep.subr.mxu0 0.0
      %524 = vmatpush1.msra.mxu0 0.0
      %525 = vmatprep.subr.mxu0 0.0
      %526 = vmatpush1.msra.mxu0 0.0
      %527 = vmatprep.subr.mxu0 0.0
      %528 = vmatpush1.msra.mxu0 0.0
      %529 = vmatprep.subr.mxu0 0.0
      %530 = vmatpush1.msra.mxu0 0.0
      %531 = vmatprep.subr.mxu0 0.0
      %532 = vmatpush1.msra.mxu0 0.0
      %533 = vmatprep.subr.mxu0 0.0
      %534 = vmatpush1.msra.mxu0 0.0
      %535 = vmatprep.subr.mxu0 0.0
      %536 = vmatpush1.msra.mxu0 0.0
      %537 = vmatprep.subr.mxu0 0.0
      %538 = vmatpush1.msra.mxu0 0.0
      %539 = vmatprep.subr.mxu0 0.0
      %540 = vmatpush1.msra.mxu0 0.0
      %541 = vmatprep.subr.mxu0 0.0
      %542 = vmatpush1.msra.mxu0 0.0
      %543 = vmatprep.subr.mxu0 0.0
      %544 = vmatpush1.msra.mxu0 0.0
      %545 = vmatprep.subr.mxu0 0.0
      %546 = vmatpush1.msra.mxu0 0.0
      %547 = vmatprep.subr.mxu0 0.0
      %548 = vmatpush1.msra.mxu0 0.0
      %549 = vmatprep.subr.mxu0 0.0
      %550 = vmatpush1.msra.mxu0 0.0
      %551 = vmatprep.mubr.f32.mxu0 0.0
      %552 = vmatmul.mubr.f32.gmra.mrb[0].mxu0 %v485
      %v553 = vpop.f32.mrb[0].mxu0
      %v554 = vadd.f32 0.0, %v553
      %v555 = vpop.f32.mrb[0].mxu0
      %556 = vdwg.mxu0
      %v557 = vld [vmem:[%s5] sm:$0x1]
      %v559 = vlaneseq
      %v560 = vshrl.u32 %v559, 7
      %v561 = vsub.s32 0, %v560
      %v562 = vrot.slane %v557, %v561
      %564 = vmatprep.subr.mxu0 0.0
      %565 = vmatpush1.msra.mxu0 %v554
      %566 = vmatprep.subr.mxu0 0.0
      %567 = vmatpush1.msra.mxu0 0.0
      %568 = vmatprep.subr.mxu0 0.0
      %569 = vmatpush1.msra.mxu0 0.0
      %570 = vmatprep.subr.mxu0 0.0
      %571 = vmatpush1.msra.mxu0 0.0
      %572 = vmatprep.subr.mxu0 0.0
      %573 = vmatpush1.msra.mxu0 0.0
      %574 = vmatprep.subr.mxu0 0.0
      %575 = vmatpush1.msra.mxu0 0.0
      %576 = vmatprep.subr.mxu0 0.0
      %577 = vmatpush1.msra.mxu0 0.0
      %578 = vmatprep.subr.mxu0 0.0
      %579 = vmatpush1.msra.mxu0 0.0
      %580 = vmatprep.subr.mxu0 0.0
      %581 = vmatpush1.msra.mxu0 0.0
      %582 = vmatprep.subr.mxu0 0.0
      %583 = vmatpush1.msra.mxu0 0.0
      %584 = vmatprep.subr.mxu0 0.0
      %585 = vmatpush1.msra.mxu0 0.0
      %586 = vmatprep.subr.mxu0 0.0
      %587 = vmatpush1.msra.mxu0 0.0
      %588 = vmatprep.subr.mxu0 0.0
      %589 = vmatpush1.msra.mxu0 0.0
      %590 = vmatprep.subr.mxu0 0.0
      %591 = vmatpush1.msra.mxu0 0.0
      %592 = vmatprep.subr.mxu0 0.0
      %593 = vmatpush1.msra.mxu0 0.0
      %594 = vmatprep.subr.mxu0 0.0
      %595 = vmatpush1.msra.mxu0 0.0
      %596 = vmatprep.subr.mxu0 0.0
      %597 = vmatpush1.msra.mxu0 0.0
      %598 = vmatprep.subr.mxu0 0.0
      %599 = vmatpush1.msra.mxu0 0.0
      %600 = vmatprep.subr.mxu0 0.0
      %601 = vmatpush1.msra.mxu0 0.0
      %602 = vmatprep.subr.mxu0 0.0
      %603 = vmatpush1.msra.mxu0 0.0
      %604 = vmatprep.subr.mxu0 0.0
      %605 = vmatpush1.msra.mxu0 0.0
      %606 = vmatprep.subr.mxu0 0.0
      %607 = vmatpush1.msra.mxu0 0.0
      %608 = vmatprep.subr.mxu0 0.0
      %609 = vmatpush1.msra.mxu0 0.0
      %610 = vmatprep.subr.mxu0 0.0
      %611 = vmatpush1.msra.mxu0 0.0
      %612 = vmatprep.subr.mxu0 0.0
      %613 = vmatpush1.msra.mxu0 0.0
      %614 = vmatprep.subr.mxu0 0.0
      %615 = vmatpush1.msra.mxu0 0.0
      %616 = vmatprep.subr.mxu0 0.0
      %617 = vmatpush1.msra.mxu0 0.0
      %618 = vmatprep.subr.mxu0 0.0
      %619 = vmatpush1.msra.mxu0 0.0
      %620 = vmatprep.subr.mxu0 0.0
      %621 = vmatpush1.msra.mxu0 0.0
      %622 = vmatprep.subr.mxu0 0.0
      %623 = vmatpush1.msra.mxu0 0.0
      %624 = vmatprep.subr.mxu0 0.0
      %625 = vmatpush1.msra.mxu0 0.0
      %626 = vmatprep.subr.mxu0 0.0
      %627 = vmatpush1.msra.mxu0 0.0
      %628 = vmatprep.mubr.f32.mxu0 0.0
      %629 = vmatmul.mubr.f32.gmra.mrb[0].mxu0 %v407
      %v630 = vpop.f32.mrb[0].mxu0
      %v631 = vadd.f32 %v562, %v630
      %v632 = vpop.f32.mrb[0].mxu0
      %633 = vdwg.mxu0
      %v635 = vsel %vm324, %v631, 0
      %637 = vmatprep.subr.mxu0 0.0
      %638 = vmatpush1.xpose.msra.mxu0 %v635
      %639 = vmatprep.subr.mxu0 0.0
      %640 = vmatpush1.xpose.msra.mxu0 0.0
      %641 = vmatprep.subr.mxu0 0.0
      %642 = vmatpush1.xpose.msra.mxu0 0.0
      %643 = vmatprep.subr.mxu0 0.0
      %644 = vmatpush1.xpose.msra.mxu0 0.0
      %645 = vmatprep.subr.mxu0 0.0
      %646 = vmatpush1.xpose.msra.mxu0 0.0
      %647 = vmatprep.subr.mxu0 0.0
      %648 = vmatpush1.xpose.msra.mxu0 0.0
      %649 = vmatprep.subr.mxu0 0.0
      %650 = vmatpush1.xpose.msra.mxu0 0.0
      %651 = vmatprep.subr.mxu0 0.0
      %652 = vmatpush1.xpose.msra.mxu0 0.0
      %653 = vmatprep.subr.mxu0 0.0
      %654 = vmatpush1.xpose.msra.mxu0 0.0
      %655 = vmatprep.subr.mxu0 0.0
      %656 = vmatpush1.xpose.msra.mxu0 0.0
      %657 = vmatprep.subr.mxu0 0.0
      %658 = vmatpush1.xpose.msra.mxu0 0.0
      %659 = vmatprep.subr.mxu0 0.0
      %660 = vmatpush1.xpose.msra.mxu0 0.0
      %661 = vmatprep.subr.mxu0 0.0
      %662 = vmatpush1.xpose.msra.mxu0 0.0
      %663 = vmatprep.subr.mxu0 0.0
      %664 = vmatpush1.xpose.msra.mxu0 0.0
      %665 = vmatprep.subr.mxu0 0.0
      %666 = vmatpush1.xpose.msra.mxu0 0.0
      %667 = vmatprep.subr.mxu0 0.0
      %668 = vmatpush1.xpose.msra.mxu0 0.0
      %669 = vmatprep.subr.mxu0 0.0
      %670 = vmatpush1.xpose.msra.mxu0 0.0
      %671 = vmatprep.subr.mxu0 0.0
      %672 = vmatpush1.xpose.msra.mxu0 0.0
      %673 = vmatprep.subr.mxu0 0.0
      %674 = vmatpush1.xpose.msra.mxu0 0.0
      %675 = vmatprep.subr.mxu0 0.0
      %676 = vmatpush1.xpose.msra.mxu0 0.0
      %677 = vmatprep.subr.mxu0 0.0
      %678 = vmatpush1.xpose.msra.mxu0 0.0
      %679 = vmatprep.subr.mxu0 0.0
      %680 = vmatpush1.xpose.msra.mxu0 0.0
      %681 = vmatprep.subr.mxu0 0.0
      %682 = vmatpush1.xpose.msra.mxu0 0.0
      %683 = vmatprep.subr.mxu0 0.0
      %684 = vmatpush1.xpose.msra.mxu0 0.0
      %685 = vmatprep.subr.mxu0 0.0
      %686 = vmatpush1.xpose.msra.mxu0 0.0
      %687 = vmatprep.subr.mxu0 0.0
      %688 = vmatpush1.xpose.msra.mxu0 0.0
      %689 = vmatprep.subr.mxu0 0.0
      %690 = vmatpush1.xpose.msra.mxu0 0.0
      %691 = vmatprep.subr.mxu0 0.0
      %692 = vmatpush1.xpose.msra.mxu0 0.0
      %693 = vmatprep.subr.mxu0 0.0
      %694 = vmatpush1.xpose.msra.mxu0 0.0
      %695 = vmatprep.subr.mxu0 0.0
      %696 = vmatpush1.xpose.msra.mxu0 0.0
      %697 = vmatprep.subr.mxu0 0.0
      %698 = vmatpush1.xpose.msra.mxu0 0.0
      %699 = vmatprep.subr.mxu0 0.0
      %700 = vmatpush1.xpose.msra.mxu0 0.0
      %701 = vmatprep.mubr.f32.mxu0 0.0
      %702 = vmatmul.mubr.f32.gmra.mrb[0].mxu0 %v635
      %v703 = vpop.f32.mrb[0].mxu0
      %v704 = vadd.f32 0.0, %v703
      %v705 = vpop.f32.mrb[0].mxu0
      %706 = vdwg.mxu0
      %v707 = vxor.u32 %v704, 2147483648
      %v708 = vmul.f32 %v707, 1.442695
      %v709 = vpow.pop %v708
      %v710 = vadd.f32 %v709, 1.0
      %v711 = vrcp.pop %v710
      %v712 = vmul.f32 1.0, %v711
      %v713 = vld [vmem:[%s6] sm:$0xff]
      %v714 = vld [vmem:[%s6 + $0x8] sm:$0xff]
      %v715 = vld [vmem:[%s6 + $0x10] sm:$0xff]
      %v716 = vld [vmem:[%s6 + $0x18] sm:$0xff]
      %717 = vmatprep.subr.mxu0 0.0
      %718 = vmatpush1.msra.mxu0 %v713
      %719 = vmatprep.subr.mxu0 0.0
      %720 = vmatpush1.msra.mxu0 %v714
      %721 = vmatprep.subr.mxu0 0.0
      %722 = vmatpush1.msra.mxu0 %v715
      %723 = vmatprep.subr.mxu0 0.0
      %724 = vmatpush1.msra.mxu0 %v716
      %725 = vmatprep.subr.mxu0 0.0
      %726 = vmatpush1.msra.mxu0 0.0
      %727 = vmatprep.subr.mxu0 0.0
      %728 = vmatpush1.msra.mxu0 0.0
      %729 = vmatprep.subr.mxu0 0.0
      %730 = vmatpush1.msra.mxu0 0.0
      %731 = vmatprep.subr.mxu0 0.0
      %732 = vmatpush1.msra.mxu0 0.0
      %733 = vmatprep.subr.mxu0 0.0
      %734 = vmatpush1.msra.mxu0 0.0
      %735 = vmatprep.subr.mxu0 0.0
      %736 = vmatpush1.msra.mxu0 0.0
      %737 = vmatprep.subr.mxu0 0.0
      %738 = vmatpush1.msra.mxu0 0.0
      %739 = vmatprep.subr.mxu0 0.0
      %740 = vmatpush1.msra.mxu0 0.0
      %741 = vmatprep.subr.mxu0 0.0
      %742 = vmatpush1.msra.mxu0 0.0
      %743 = vmatprep.subr.mxu0 0.0
      %744 = vmatpush1.msra.mxu0 0.0
      %745 = vmatprep.subr.mxu0 0.0
      %746 = vmatpush1.msra.mxu0 0.0
      %747 = vmatprep.subr.mxu0 0.0
      %748 = vmatpush1.msra.mxu0 0.0
      %749 = vmatprep.subr.mxu0 0.0
      %750 = vmatpush1.msra.mxu0 0.0
      %751 = vmatprep.subr.mxu0 0.0
      %752 = vmatpush1.msra.mxu0 0.0
      %753 = vmatprep.subr.mxu0 0.0
      %754 = vmatpush1.msra.mxu0 0.0
      %755 = vmatprep.subr.mxu0 0.0
      %756 = vmatpush1.msra.mxu0 0.0
      %757 = vmatprep.subr.mxu0 0.0
      %758 = vmatpush1.msra.mxu0 0.0
      %759 = vmatprep.subr.mxu0 0.0
      %760 = vmatpush1.msra.mxu0 0.0
      %761 = vmatprep.subr.mxu0 0.0
      %762 = vmatpush1.msra.mxu0 0.0
      %763 = vmatprep.subr.mxu0 0.0
      %764 = vmatpush1.msra.mxu0 0.0
      %765 = vmatprep.subr.mxu0 0.0
      %766 = vmatpush1.msra.mxu0 0.0
      %767 = vmatprep.subr.mxu0 0.0
      %768 = vmatpush1.msra.mxu0 0.0
      %769 = vmatprep.subr.mxu0 0.0
      %770 = vmatpush1.msra.mxu0 0.0
      %771 = vmatprep.subr.mxu0 0.0
      %772 = vmatpush1.msra.mxu0 0.0
      %773 = vmatprep.subr.mxu0 0.0
      %774 = vmatpush1.msra.mxu0 0.0
      %775 = vmatprep.subr.mxu0 0.0
      %776 = vmatpush1.msra.mxu0 0.0
      %777 = vmatprep.subr.mxu0 0.0
      %778 = vmatpush1.msra.mxu0 0.0
      %779 = vmatprep.subr.mxu0 0.0
      %780 = vmatpush1.msra.mxu0 0.0
      %781 = vmatprep.mubr.f32.mxu0 0.0
      %782 = vmatmul.mubr.f32.gmra.mrb[0].mxu0 %v326
      %v783 = vpop.f32.mrb[0].mxu0
      %v784 = vadd.f32 0.0, %v783
      %v785 = vpop.f32.mrb[0].mxu0
      %786 = vdwg.mxu0
      %v787 = vld [vmem:[%s7] sm:$0x1]
      %v789 = vlaneseq
      %v790 = vshrl.u32 %v789, 7
      %v791 = vsub.s32 0, %v790
      %v792 = vrot.slane %v787, %v791
      %v795 = vsel %vm405, %v712, 0
      %797 = vmatprep.subr.mxu0 0.0
      %798 = vmatpush1.msra.mxu0 %v784
      %799 = vmatprep.subr.mxu0 0.0
      %800 = vmatpush1.msra.mxu0 0.0
      %801 = vmatprep.subr.mxu0 0.0
      %802 = vmatpush1.msra.mxu0 0.0
      %803 = vmatprep.subr.mxu0 0.0
      %804 = vmatpush1.msra.mxu0 0.0
      %805 = vmatprep.subr.mxu0 0.0
      %806 = vmatpush1.msra.mxu0 0.0
      %807 = vmatprep.subr.mxu0 0.0
      %808 = vmatpush1.msra.mxu0 0.0
      %809 = vmatprep.subr.mxu0 0.0
      %810 = vmatpush1.msra.mxu0 0.0
      %811 = vmatprep.subr.mxu0 0.0
      %812 = vmatpush1.msra.mxu0 0.0
      %813 = vmatprep.subr.mxu0 0.0
      %814 = vmatpush1.msra.mxu0 0.0
      %815 = vmatprep.subr.mxu0 0.0
      %816 = vmatpush1.msra.mxu0 0.0
      %817 = vmatprep.subr.mxu0 0.0
      %818 = vmatpush1.msra.mxu0 0.0
      %819 = vmatprep.subr.mxu0 0.0
      %820 = vmatpush1.msra.mxu0 0.0
      %821 = vmatprep.subr.mxu0 0.0
      %822 = vmatpush1.msra.mxu0 0.0
      %823 = vmatprep.subr.mxu0 0.0
      %824 = vmatpush1.msra.mxu0 0.0
      %825 = vmatprep.subr.mxu0 0.0
      %826 = vmatpush1.msra.mxu0 0.0
      %827 = vmatprep.subr.mxu0 0.0
      %828 = vmatpush1.msra.mxu0 0.0
      %829 = vmatprep.subr.mxu0 0.0
      %830 = vmatpush1.msra.mxu0 0.0
      %831 = vmatprep.subr.mxu0 0.0
      %832 = vmatpush1.msra.mxu0 0.0
      %833 = vmatprep.subr.mxu0 0.0
      %834 = vmatpush1.msra.mxu0 0.0
      %835 = vmatprep.subr.mxu0 0.0
      %836 = vmatpush1.msra.mxu0 0.0
      %837 = vmatprep.subr.mxu0 0.0
      %838 = vmatpush1.msra.mxu0 0.0
      %839 = vmatprep.subr.mxu0 0.0
      %840 = vmatpush1.msra.mxu0 0.0
      %841 = vmatprep.subr.mxu0 0.0
      %842 = vmatpush1.msra.mxu0 0.0
      %843 = vmatprep.subr.mxu0 0.0
      %844 = vmatpush1.msra.mxu0 0.0
      %845 = vmatprep.subr.mxu0 0.0
      %846 = vmatpush1.msra.mxu0 0.0
      %847 = vmatprep.subr.mxu0 0.0
      %848 = vmatpush1.msra.mxu0 0.0
      %849 = vmatprep.subr.mxu0 0.0
      %850 = vmatpush1.msra.mxu0 0.0
      %851 = vmatprep.subr.mxu0 0.0
      %852 = vmatpush1.msra.mxu0 0.0
      %853 = vmatprep.subr.mxu0 0.0
      %854 = vmatpush1.msra.mxu0 0.0
      %855 = vmatprep.subr.mxu0 0.0
      %856 = vmatpush1.msra.mxu0 0.0
      %857 = vmatprep.subr.mxu0 0.0
      %858 = vmatpush1.msra.mxu0 0.0
      %859 = vmatprep.subr.mxu0 0.0
      %860 = vmatpush1.msra.mxu0 0.0
      %861 = vmatprep.mubr.f32.mxu0 0.0
      %862 = vmatmul.mubr.f32.gmra.mrb[0].mxu0 %v795
      %v863 = vpop.f32.mrb[0].mxu0
      %v864 = vadd.f32 %v792, %v863
      %v865 = vpop.f32.mrb[0].mxu0
      %866 = vdwg.mxu0
      %867 = vst.msk [vmem:[%s317] sm:$0xff] %vm324, %v864
      %p868 = scmp.lt.s32.totalorder %s19, 1
      %s869 = scalar_select %p868, %s19, 1
      %s870 = smul.addr %s869, 8
      %s871 = scalar_lea.vmem %s8, %s870
      // Predicated region
      $region53: #{eshgat_forward.5} parent=51 // pred_check
        %p872 = pneg %p215
      $region54: #{eshgat_forward.5} parent=51 // pred_check_branch
        %874 = sbr.rel (%p872) target = $region56
      $region55: #{eshgat_forward.5} parent=51 // pred_region
        _
      $region56: #{eshgat_forward.5} parent=51 // pred_fallthru
        _
    $region52: #{eshgat_forward.5} parent=5 // pred_fallthru
      _
    %p875 = scmp.le.s32.totalorder 2, %s14
    // Predicated region
    $region57: #{eshgat_forward.5} parent=5 // pred_check
      %p876 = pneg %p875
    $region58: #{eshgat_forward.5} parent=5 // pred_check_branch
      %878 = sbr.rel (%p876) target = $region60
    $region59: #{eshgat_forward.5} parent=5 // pred_region
      %s879 = ssub.s32 %s14, 2
      // Predicated region
      $region61: #{eshgat_forward.5} parent=59 // pred_check
        %p880 = pneg %p221
      $region62: #{eshgat_forward.5} parent=59 // pred_check_branch
        %882 = sbr.rel (%p880) target = $region64
      $region63: #{eshgat_forward.5} parent=59 // pred_region
        %p883 = scmp.lt.s32.totalorder %s20, 1
        %s884 = scalar_select %p883, %s20, 1
        %s885 = smul.addr %s884, 8
        %s886 = scalar_lea.vmem %s8, %s885
      $region64: #{eshgat_forward.5} parent=59 // pred_fallthru
        _
    $region60: #{eshgat_forward.5} parent=5 // pred_fallthru
      _
  $region6: #{eshgat_forward.5} parent=0 // loop_footer
    %s18 = sadd.s32 1, %s14
  $region7: #{eshgat_forward.5} parent=0 // loop_footer_branch
    %13 = sbr.rel target = $region3
  $region8: #{eshgat_forward.5} parent=0 // loop_exit
    _

// kernel: eshgat_forward.6
$region0: #{eshgat_forward.6}
  #allocation0 [shape = 'u32[]', space=smem, size = 0x4, offset = 0x4, fixed_abs, tag = 'smem constant byte address 0x4 - core index']
  #allocation1 [shape = 'u32[144,128]{1,0:T(1,128)}', space=vmem, size = 0x12000, scoped, tag = 'internal scratch']
  %s0 = inlined_call_operand.vmem [shape: f32[2,8,32], index: 0, kind: input, shape index: {}]
  %s1 = inlined_call_operand.vmem [shape: f32[2,8,8], index: 1, kind: input, shape index: {}]
  %s2 = inlined_call_operand.vmem [shape: f32[32,32], index: 2, kind: input, shape index: {}]
  %s3 = inlined_call_operand.vmem [shape: f32[1,32], index: 3, kind: input, shape index: {}]
  %s4 = inlined_call_operand.vmem [shape: f32[32,32], index: 4, kind: input, shape index: {}]
  %s5 = inlined_call_operand.vmem [shape: f32[1,32], index: 5, kind: input, shape index: {}]
  %s6 = inlined_call_operand.vmem [shape: f32[32,32], index: 6, kind: input, shape index: {}]
  %s7 = inlined_call_operand.vmem [shape: f32[1,32], index: 7, kind: input, shape index: {}]
  %s8 = inlined_call_operand.vmem [shape: f32[32,32], index: 8, kind: input, shape index: {}]
  %s9 = inlined_call_operand.vmem [shape: f32[1,32], index: 9, kind: input, shape index: {}]
  %s10 = inlined_call_operand.vmem [shape: f32[32,32], index: 10, kind: input, shape index: {}]
  %s11 = inlined_call_operand.vmem [shape: f32[1,32], index: 11, kind: input, shape index: {}]
  %s12 = inlined_call_operand.vmem [shape: f32[2,8,32], index: 12, kind: output, shape index: {}]
  %s13 = sld [smem:[#allocation0]]
  $region81: #{eshgat_forward.6} parent=0
    _
  %s15 = ssub.s32 1, %s13
  %s16 = scalar_select 0, %s15, %s13
  loop: start=0, step=1, limit=4
  $region2: #{eshgat_forward.6} parent=0 // loop_pre_header
    _
  $region3: #{eshgat_forward.6} parent=0 // loop_header
    %s18 = sphi 0, %s22
    %p19 = scmp.ge.s32.totalorder %s18, 4
    %s28 = sphi 0, %s30
    %s31 = sphi 0, %s28
    %s32 = sphi 0, %s31
    %s48 = sphi 0, %s32
    %s54 = sphi 0, %s56
    %s57 = sphi 0, %s54
    %s58 = sphi 0, %s57
    %s74 = sphi 0, %s58
    %s78 = sphi 0, %s78
    %s80 = sphi 0, %s78
    %s81 = sphi 0, %s80
    %s95 = sphi 0, %s81
    %s99 = sphi 0, %s99
    %s101 = sphi 0, %s99
    %s102 = sphi 0, %s101
    %s116 = sphi 0, %s102
    %s120 = sphi 0, %s120
    %s122 = sphi 0, %s120
    %s123 = sphi 0, %s122
    %s137 = sphi 0, %s123
    %s141 = sphi 0, %s141
    %s143 = sphi 0, %s141
    %s144 = sphi 0, %s143
    %s158 = sphi 0, %s144
    %s162 = sphi 0, %s162
    %s164 = sphi 0, %s162
    %s165 = sphi 0, %s164
    %s179 = sphi 0, %s165
    %s183 = sphi 0, %s183
    %s185 = sphi 0, %s183
    %s186 = sphi 0, %s185
    %s200 = sphi 0, %s186
    %s204 = sphi 0, %s204
    %s206 = sphi 0, %s204
    %s207 = sphi 0, %s206
    %s221 = sphi 0, %s207
    %s225 = sphi 0, %s225
    %s227 = sphi 0, %s225
    %s228 = sphi 0, %s227
    %s242 = sphi 0, %s228
    %s246 = sphi 0, %s246
    %s248 = sphi 0, %s246
    %s249 = sphi 0, %s248
    %s263 = sphi 0, %s249
    %s267 = sphi 0, %s267
    %s269 = sphi 0, %s267
    %s270 = sphi 0, %s269
    %s284 = sphi 0, %s270
    %s290 = sphi 0, %s292
    %s293 = sphi 0, %s290
    %s294 = sphi 0, %s293
    %s310 = sphi 0, %s294
  $region4: #{eshgat_forward.6} parent=0 // loop_header_branch
    %21 = sbr.rel (%p19) target = $region8
  $region5: #{eshgat_forward.6} parent=0 // loop_body
    %s23 = ssub.s32 %s18, 1
    %s24 = ssub.s32 %s18, 2
    %s25 = sadd.s32 %s18, 1
    %s26 = ssub.s32 %s18, %s25
    %p27 = scmp.eq.s32.totalorder %s26, 0
    %s29 = sadd.s32 %s28, 1
    %s30 = scalar_select %p27, %s28, %s29
    %p33 = pneg %p27
    %p34 = scmp.eq.s32.totalorder %s18, 1
    %p35 = por %p33, %p34
    %p36 = scmp.ne.s32.totalorder %s28, %s31
    %p37 = scmp.eq.s32.totalorder %s18, 0
    %p38 = por %p36, %p37
    %p39 = scmp.ne.s32.totalorder %s28, %s31
    %p40 = scmp.eq.s32.totalorder %s23, 1
    %p41 = por %p39, %p40
    %p42 = scmp.ne.s32.totalorder %s31, %s32
    %p43 = scmp.eq.s32.totalorder %s23, 0
    %p44 = por %p42, %p43
    %p45 = scmp.ne.s32.totalorder %s31, %s32
    %p46 = scmp.eq.s32.totalorder %s24, 1
    %p47 = por %p45, %p46
    %p49 = scmp.ne.s32.totalorder %s32, %s48
    %p50 = scmp.eq.s32.totalorder %s24, 0
    %p51 = por %p49, %p50
    %s52 = ssub.s32 %s18, %s25
    %p53 = scmp.eq.s32.totalorder %s52, 0
    %s55 = sadd.s32 %s54, 1
    %s56 = scalar_select %p53, %s54, %s55
    %p59 = pneg %p53
    %p60 = scmp.eq.s32.totalorder %s18, 1
    %p61 = por %p59, %p60
    %p62 = scmp.ne.s32.totalorder %s54, %s57
    %p63 = scmp.eq.s32.totalorder %s18, 0
    %p64 = por %p62, %p63
    %p65 = scmp.ne.s32.totalorder %s54, %s57
    %p66 = scmp.eq.s32.totalorder %s23, 1
    %p67 = por %p65, %p66
    %p68 = scmp.ne.s32.totalorder %s57, %s58
    %p69 = scmp.eq.s32.totalorder %s23, 0
    %p70 = por %p68, %p69
    %p71 = scmp.ne.s32.totalorder %s57, %s58
    %p72 = scmp.eq.s32.totalorder %s24, 1
    %p73 = por %p71, %p72
    %p75 = scmp.ne.s32.totalorder %s58, %s74
    %p76 = scmp.eq.s32.totalorder %s24, 0
    %p77 = por %p75, %p76
    %s79 = sadd.s32 %s78, 1
    %p82 = scmp.eq.s32.totalorder %s18, 1
    %p83 = scmp.ne.s32.totalorder %s78, %s80
    %p84 = scmp.eq.s32.totalorder %s18, 0
    %p85 = por %p83, %p84
    %p86 = scmp.ne.s32.totalorder %s78, %s80
    %p87 = scmp.eq.s32.totalorder %s23, 1
    %p88 = por %p86, %p87
    %p89 = scmp.ne.s32.totalorder %s80, %s81
    %p90 = scmp.eq.s32.totalorder %s23, 0
    %p91 = por %p89, %p90
    %p92 = scmp.ne.s32.totalorder %s80, %s81
    %p93 = scmp.eq.s32.totalorder %s24, 1
    %p94 = por %p92, %p93
    %p96 = scmp.ne.s32.totalorder %s81, %s95
    %p97 = scmp.eq.s32.totalorder %s24, 0
    %p98 = por %p96, %p97
    %s100 = sadd.s32 %s99, 1
    %p103 = scmp.eq.s32.totalorder %s18, 1
    %p104 = scmp.ne.s32.totalorder %s99, %s101
    %p105 = scmp.eq.s32.totalorder %s18, 0
    %p106 = por %p104, %p105
    %p107 = scmp.ne.s32.totalorder %s99, %s101
    %p108 = scmp.eq.s32.totalorder %s23, 1
    %p109 = por %p107, %p108
    %p110 = scmp.ne.s32.totalorder %s101, %s102
    %p111 = scmp.eq.s32.totalorder %s23, 0
    %p112 = por %p110, %p111
    %p113 = scmp.ne.s32.totalorder %s101, %s102
    %p114 = scmp.eq.s32.totalorder %s24, 1
    %p115 = por %p113, %p114
    %p117 = scmp.ne.s32.totalorder %s102, %s116
    %p118 = scmp.eq.s32.totalorder %s24, 0
    %p119 = por %p117, %p118
    %s121 = sadd.s32 %s120, 1
    %p124 = scmp.eq.s32.totalorder %s18, 1
    %p125 = scmp.ne.s32.totalorder %s120, %s122
    %p126 = scmp.eq.s32.totalorder %s18, 0
    %p127 = por %p125, %p126
    %p128 = scmp.ne.s32.totalorder %s120, %s122
    %p129 = scmp.eq.s32.totalorder %s23, 1
    %p130 = por %p128, %p129
    %p131 = scmp.ne.s32.totalorder %s122, %s123
    %p132 = scmp.eq.s32.totalorder %s23, 0
    %p133 = por %p131, %p132
    %p134 = scmp.ne.s32.totalorder %s122, %s123
    %p135 = scmp.eq.s32.totalorder %s24, 1
    %p136 = por %p134, %p135
    %p138 = scmp.ne.s32.totalorder %s123, %s137
    %p139 = scmp.eq.s32.totalorder %s24, 0
    %p140 = por %p138, %p139
    %s142 = sadd.s32 %s141, 1
    %p145 = scmp.eq.s32.totalorder %s18, 1
    %p146 = scmp.ne.s32.totalorder %s141, %s143
    %p147 = scmp.eq.s32.totalorder %s18, 0
    %p148 = por %p146, %p147
    %p149 = scmp.ne.s32.totalorder %s141, %s143
    %p150 = scmp.eq.s32.totalorder %s23, 1
    %p151 = por %p149, %p150
    %p152 = scmp.ne.s32.totalorder %s143, %s144
    %p153 = scmp.eq.s32.totalorder %s23, 0
    %p154 = por %p152, %p153
    %p155 = scmp.ne.s32.totalorder %s143, %s144
    %p156 = scmp.eq.s32.totalorder %s24, 1
    %p157 = por %p155, %p156
    %p159 = scmp.ne.s32.totalorder %s144, %s158
    %p160 = scmp.eq.s32.totalorder %s24, 0
    %p161 = por %p159, %p160
    %s163 = sadd.s32 %s162, 1
    %p166 = scmp.eq.s32.totalorder %s18, 1
    %p167 = scmp.ne.s32.totalorder %s162, %s164
    %p168 = scmp.eq.s32.totalorder %s18, 0
    %p169 = por %p167, %p168
    %p170 = scmp.ne.s32.totalorder %s162, %s164
    %p171 = scmp.eq.s32.totalorder %s23, 1
    %p172 = por %p170, %p171
    %p173 = scmp.ne.s32.totalorder %s164, %s165
    %p174 = scmp.eq.s32.totalorder %s23, 0
    %p175 = por %p173, %p174
    %p176 = scmp.ne.s32.totalorder %s164, %s165
    %p177 = scmp.eq.s32.totalorder %s24, 1
    %p178 = por %p176, %p177
    %p180 = scmp.ne.s32.totalorder %s165, %s179
    %p181 = scmp.eq.s32.totalorder %s24, 0
    %p182 = por %p180, %p181
    %s184 = sadd.s32 %s183, 1
    %p187 = scmp.eq.s32.totalorder %s18, 1
    %p188 = scmp.ne.s32.totalorder %s183, %s185
    %p189 = scmp.eq.s32.totalorder %s18, 0
    %p190 = por %p188, %p189
    %p191 = scmp.ne.s32.totalorder %s183, %s185
    %p192 = scmp.eq.s32.totalorder %s23, 1
    %p193 = por %p191, %p192
    %p194 = scmp.ne.s32.totalorder %s185, %s186
    %p195 = scmp.eq.s32.totalorder %s23, 0
    %p196 = por %p194, %p195
    %p197 = scmp.ne.s32.totalorder %s185, %s186
    %p198 = scmp.eq.s32.totalorder %s24, 1
    %p199 = por %p197, %p198
    %p201 = scmp.ne.s32.totalorder %s186, %s200
    %p202 = scmp.eq.s32.totalorder %s24, 0
    %p203 = por %p201, %p202
    %s205 = sadd.s32 %s204, 1
    %p208 = scmp.eq.s32.totalorder %s18, 1
    %p209 = scmp.ne.s32.totalorder %s204, %s206
    %p210 = scmp.eq.s32.totalorder %s18, 0
    %p211 = por %p209, %p210
    %p212 = scmp.ne.s32.totalorder %s204, %s206
    %p213 = scmp.eq.s32.totalorder %s23, 1
    %p214 = por %p212, %p213
    %p215 = scmp.ne.s32.totalorder %s206, %s207
    %p216 = scmp.eq.s32.totalorder %s23, 0
    %p217 = por %p215, %p216
    %p218 = scmp.ne.s32.totalorder %s206, %s207
    %p219 = scmp.eq.s32.totalorder %s24, 1
    %p220 = por %p218, %p219
    %p222 = scmp.ne.s32.totalorder %s207, %s221
    %p223 = scmp.eq.s32.totalorder %s24, 0
    %p224 = por %p222, %p223
    %s226 = sadd.s32 %s225, 1
    %p229 = scmp.eq.s32.totalorder %s18, 1
    %p230 = scmp.ne.s32.totalorder %s225, %s227
    %p231 = scmp.eq.s32.totalorder %s18, 0
    %p232 = por %p230, %p231
    %p233 = scmp.ne.s32.totalorder %s225, %s227
    %p234 = scmp.eq.s32.totalorder %s23, 1
    %p235 = por %p233, %p234
    %p236 = scmp.ne.s32.totalorder %s227, %s228
    %p237 = scmp.eq.s32.totalorder %s23, 0
    %p238 = por %p236, %p237
    %p239 = scmp.ne.s32.totalorder %s227, %s228
    %p240 = scmp.eq.s32.totalorder %s24, 1
    %p241 = por %p239, %p240
    %p243 = scmp.ne.s32.totalorder %s228, %s242
    %p244 = scmp.eq.s32.totalorder %s24, 0
    %p245 = por %p243, %p244
    %s247 = sadd.s32 %s246, 1
    %p250 = scmp.eq.s32.totalorder %s18, 1
    %p251 = scmp.ne.s32.totalorder %s246, %s248
    %p252 = scmp.eq.s32.totalorder %s18, 0
    %p253 = por %p251, %p252
    %p254 = scmp.ne.s32.totalorder %s246, %s248
    %p255 = scmp.eq.s32.totalorder %s23, 1
    %p256 = por %p254, %p255
    %p257 = scmp.ne.s32.totalorder %s248, %s249
    %p258 = scmp.eq.s32.totalorder %s23, 0
    %p259 = por %p257, %p258
    %p260 = scmp.ne.s32.totalorder %s248, %s249
    %p261 = scmp.eq.s32.totalorder %s24, 1
    %p262 = por %p260, %p261
    %p264 = scmp.ne.s32.totalorder %s249, %s263
    %p265 = scmp.eq.s32.totalorder %s24, 0
    %p266 = por %p264, %p265
    %s268 = sadd.s32 %s267, 1
    %p271 = scmp.eq.s32.totalorder %s18, 1
    %p272 = scmp.ne.s32.totalorder %s267, %s269
    %p273 = scmp.eq.s32.totalorder %s18, 0
    %p274 = por %p272, %p273
    %p275 = scmp.ne.s32.totalorder %s267, %s269
    %p276 = scmp.eq.s32.totalorder %s23, 1
    %p277 = por %p275, %p276
    %p278 = scmp.ne.s32.totalorder %s269, %s270
    %p279 = scmp.eq.s32.totalorder %s23, 0
    %p280 = por %p278, %p279
    %p281 = scmp.ne.s32.totalorder %s269, %s270
    %p282 = scmp.eq.s32.totalorder %s24, 1
    %p283 = por %p281, %p282
    %p285 = scmp.ne.s32.totalorder %s270, %s284
    %p286 = scmp.eq.s32.totalorder %s24, 0
    %p287 = por %p285, %p286
    %s288 = ssub.s32 %s18, %s25
    %p289 = scmp.eq.s32.totalorder %s288, 0
    %s291 = sadd.s32 %s290, 1
    %s292 = scalar_select %p289, %s290, %s291
    %p295 = pneg %p289
    %p296 = scmp.eq.s32.totalorder %s18, 1
    %p297 = por %p295, %p296
    %p298 = scmp.ne.s32.totalorder %s290, %s293
    %p299 = scmp.eq.s32.totalorder %s18, 0
    %p300 = por %p298, %p299
    %p301 = scmp.ne.s32.totalorder %s290, %s293
    %p302 = scmp.eq.s32.totalorder %s23, 1
    %p303 = por %p301, %p302
    %p304 = scmp.ne.s32.totalorder %s293, %s294
    %p305 = scmp.eq.s32.totalorder %s23, 0
    %p306 = por %p304, %p305
    %p307 = scmp.ne.s32.totalorder %s293, %s294
    %p308 = scmp.eq.s32.totalorder %s24, 1
    %p309 = por %p307, %p308
    %p311 = scmp.ne.s32.totalorder %s294, %s310
    %p312 = scmp.eq.s32.totalorder %s24, 0
    %p313 = por %p311, %p312
    %p314 = scmp.le.s32.totalorder 1, %s18
    %p315 = scmp.lt.s32.totalorder %s18, 3
    %p316 = pnand %p314, %p315
    %p317 = pneg %p316
    // Predicated region
    $region9: #{eshgat_forward.6} parent=5 // pred_check
      _
    $region10: #{eshgat_forward.6} parent=5 // pred_check_branch
      %319 = sbr.rel (%p316) target = $region12
    $region11: #{eshgat_forward.6} parent=5 // pred_region
      %s320 = ssub.s32 %s18, 1
      // Predicated region
      $region13: #{eshgat_forward.6} parent=11 // pred_check
        %p321 = pneg %p91
      $region14: #{eshgat_forward.6} parent=11 // pred_check_branch
        %323 = sbr.rel (%p321) target = $region16
      $region15: #{eshgat_forward.6} parent=11 // pred_region
        _
      $region16: #{eshgat_forward.6} parent=11 // pred_fallthru
        _
      // Predicated region
      $region17: #{eshgat_forward.6} parent=11 // pred_check
        %p324 = pneg %p112
      $region18: #{eshgat_forward.6} parent=11 // pred_check_branch
        %326 = sbr.rel (%p324) target = $region20
      $region19: #{eshgat_forward.6} parent=11 // pred_region
        _
      $region20: #{eshgat_forward.6} parent=11 // pred_fallthru
        _
      // Predicated region
      $region21: #{eshgat_forward.6} parent=11 // pred_check
        %p327 = pneg %p133
      $region22: #{eshgat_forward.6} parent=11 // pred_check_branch
        %329 = sbr.rel (%p327) target = $region24
      $region23: #{eshgat_forward.6} parent=11 // pred_region
        _
      $region24: #{eshgat_forward.6} parent=11 // pred_fallthru
        _
      // Predicated region
      $region25: #{eshgat_forward.6} parent=11 // pred_check
        %p330 = pneg %p154
      $region26: #{eshgat_forward.6} parent=11 // pred_check_branch
        %332 = sbr.rel (%p330) target = $region28
      $region27: #{eshgat_forward.6} parent=11 // pred_region
        _
      $region28: #{eshgat_forward.6} parent=11 // pred_fallthru
        _
      // Predicated region
      $region29: #{eshgat_forward.6} parent=11 // pred_check
        %p333 = pneg %p175
      $region30: #{eshgat_forward.6} parent=11 // pred_check_branch
        %335 = sbr.rel (%p333) target = $region32
      $region31: #{eshgat_forward.6} parent=11 // pred_region
        _
      $region32: #{eshgat_forward.6} parent=11 // pred_fallthru
        _
      // Predicated region
      $region33: #{eshgat_forward.6} parent=11 // pred_check
        %p336 = pneg %p196
      $region34: #{eshgat_forward.6} parent=11 // pred_check_branch
        %338 = sbr.rel (%p336) target = $region36
      $region35: #{eshgat_forward.6} parent=11 // pred_region
        _
      $region36: #{eshgat_forward.6} parent=11 // pred_fallthru
        _
      // Predicated region
      $region37: #{eshgat_forward.6} parent=11 // pred_check
        %p339 = pneg %p217
      $region38: #{eshgat_forward.6} parent=11 // pred_check_branch
        %341 = sbr.rel (%p339) target = $region40
      $region39: #{eshgat_forward.6} parent=11 // pred_region
        _
      $region40: #{eshgat_forward.6} parent=11 // pred_fallthru
        _
      // Predicated region
      $region41: #{eshgat_forward.6} parent=11 // pred_check
        %p342 = pneg %p238
      $region42: #{eshgat_forward.6} parent=11 // pred_check_branch
        %344 = sbr.rel (%p342) target = $region44
      $region43: #{eshgat_forward.6} parent=11 // pred_region
        _
      $region44: #{eshgat_forward.6} parent=11 // pred_fallthru
        _
      // Predicated region
      $region45: #{eshgat_forward.6} parent=11 // pred_check
        %p345 = pneg %p259
      $region46: #{eshgat_forward.6} parent=11 // pred_check_branch
        %347 = sbr.rel (%p345) target = $region48
      $region47: #{eshgat_forward.6} parent=11 // pred_region
        _
      $region48: #{eshgat_forward.6} parent=11 // pred_fallthru
        _
      // Predicated region
      $region49: #{eshgat_forward.6} parent=11 // pred_check
        %p348 = pneg %p280
      $region50: #{eshgat_forward.6} parent=11 // pred_check_branch
        %350 = sbr.rel (%p348) target = $region52
      $region51: #{eshgat_forward.6} parent=11 // pred_region
        _
      $region52: #{eshgat_forward.6} parent=11 // pred_fallthru
        _
    $region12: #{eshgat_forward.6} parent=5 // pred_fallthru
      _
    %p351 = scmp.lt.s32.totalorder %s18, 2
    // Predicated region
    $region53: #{eshgat_forward.6} parent=5 // pred_check
      %p352 = pneg %p351
    $region54: #{eshgat_forward.6} parent=5 // pred_check_branch
      %354 = sbr.rel (%p352) target = $region56
    $region55: #{eshgat_forward.6} parent=5 // pred_region
      // Predicated region
      $region57: #{eshgat_forward.6} parent=55 // pred_check
        %p355 = pneg %p38
      $region58: #{eshgat_forward.6} parent=55 // pred_check_branch
        %357 = sbr.rel (%p355) target = $region60
      $region59: #{eshgat_forward.6} parent=55 // pred_region
        %p358 = scmp.lt.s32.totalorder %s18, 1
        %s359 = scalar_select %p358, %s18, 1
        %s360 = smul.addr %s359, 8
        %s361 = scalar_lea.vmem %s0, %s360
      $region60: #{eshgat_forward.6} parent=55 // pred_fallthru
        _
      // Predicated region
      $region61: #{eshgat_forward.6} parent=55 // pred_check
        %p362 = pneg %p64
      $region62: #{eshgat_forward.6} parent=55 // pred_check_branch
        %364 = sbr.rel (%p362) target = $region64
      $region63: #{eshgat_forward.6} parent=55 // pred_region
        %p365 = scmp.lt.s32.totalorder %s18, 1
        %s366 = scalar_select %p365, %s18, 1
        %s367 = smul.addr %s366, 8
        %s368 = scalar_lea.vmem %s1, %s367
      $region64: #{eshgat_forward.6} parent=55 // pred_fallthru
        _
    $region56: #{eshgat_forward.6} parent=5 // pred_fallthru
      _
    %p369 = scmp.le.s32.totalorder 1, %s18
    %p370 = scmp.lt.s32.totalorder %s18, 3
    %p371 = pnand %p369, %p370
    %p372 = pneg %p371
    // Predicated region
    $region65: #{eshgat_forward.6} parent=5 // pred_check
      _
    $region66: #{eshgat_forward.6} parent=5 // pred_check_branch
      %374 = sbr.rel (%p371) target = $region68
    $region67: #{eshgat_forward.6} parent=5 // pred_region
      %s375 = ssub.s32 %s18, 1
      %p376 = scmp.lt.s32.totalorder %s23, 1
      %s377 = scalar_select %p376, %s23, 1
      %s378 = smul.addr %s377, 8
      %s379 = scalar_lea.vmem %s0, %s378
      %p380 = pneg %p44
      %p381 = pneg %p41
      %p382 = scmp.lt.s32.totalorder %s23, 1
      %s383 = scalar_select %p382, %s23, 1
      %s384 = smul.addr %s383, 8
      %s385 = scalar_lea.vmem %s1, %s384
      %p386 = pneg %p70
      %p387 = pneg %p67
      %p388 = pneg %p91
      %p389 = pneg %p88
      %p390 = pneg %p112
      %p391 = pneg %p109
      %p392 = pneg %p133
      %p393 = pneg %p130
      %p394 = pneg %p154
      %p395 = pneg %p151
      %p396 = pneg %p175
      %p397 = pneg %p172
      %p398 = pneg %p196
      %p399 = pneg %p193
      %p400 = pneg %p217
      %p401 = pneg %p214
      %p402 = pneg %p238
      %p403 = pneg %p235
      %p404 = pneg %p259
      %p405 = pneg %p256
      %p406 = pneg %p280
      %p407 = pneg %p277
      %p408 = pneg %p306
      %p409 = pneg %p303
      %p410 = scmp.lt.s32.totalorder %s23, 1
      %s411 = scalar_select %p410, %s23, 1
      %s412 = smul.addr %s411, 8
      %s413 = scalar_lea.vmem %s12, %s412
      %p414 = scmp.lt.s32.totalorder %s23, 1
      %s415 = scalar_select %p414, %s23, 1
      %s416 = smul.addr %s415, 8
      %s417 = scalar_lea.vmem %s0, %s416
      %p418 = scmp.lt.s32.totalorder %s23, 1
      %s419 = scalar_select %p418, %s23, 1
      %s420 = smul.addr %s419, 8
      %s421 = scalar_lea.vmem %s1, %s420
      %p422 = scmp.lt.s32.totalorder %s23, 1
      %s423 = scalar_select %p422, %s23, 1
      %s424 = smul.addr %s423, 8
      %s425 = scalar_lea.vmem %s12, %s424
      %v426 = vld [vmem:[%s417] sm:$0xff]
      %v427 = vld [vmem:[%s421] sm:$0xff]
      %v428 = vld [vmem:[%s2] sm:$0xff]
      %v429 = vld [vmem:[%s2 + $0x8] sm:$0xff]
      %v430 = vld [vmem:[%s2 + $0x10] sm:$0xff]
      %v431 = vld [vmem:[%s2 + $0x18] sm:$0xff]
      %vm432 = vcmask 261120
      %v434 = vsel %vm432, %v426, 0
      %436 = vmatprep.subr.mxu0 0.0
      %437 = vmatpush1.msra.mxu0 %v428
      %438 = vmatprep.subr.mxu0 0.0
      %439 = vmatpush1.msra.mxu0 %v429
      %440 = vmatprep.subr.mxu0 0.0
      %441 = vmatpush1.msra.mxu0 %v430
      %442 = vmatprep.subr.mxu0 0.0
      %443 = vmatpush1.msra.mxu0 %v431
      %444 = vmatprep.subr.mxu0 0.0
      %445 = vmatpush1.msra.mxu0 0.0
      %446 = vmatprep.subr.mxu0 0.0
      %447 = vmatpush1.msra.mxu0 0.0
      %448 = vmatprep.subr.mxu0 0.0
      %449 = vmatpush1.msra.mxu0 0.0
      %450 = vmatprep.subr.mxu0 0.0
      %451 = vmatpush1.msra.mxu0 0.0
      %452 = vmatprep.subr.mxu0 0.0
      %453 = vmatpush1.msra.mxu0 0.0
      %454 = vmatprep.subr.mxu0 0.0
      %455 = vmatpush1.msra.mxu0 0.0
      %456 = vmatprep.subr.mxu0 0.0
      %457 = vmatpush1.msra.mxu0 0.0
      %458 = vmatprep.subr.mxu0 0.0
      %459 = vmatpush1.msra.mxu0 0.0
      %460 = vmatprep.subr.mxu0 0.0
      %461 = vmatpush1.msra.mxu0 0.0
      %462 = vmatprep.subr.mxu0 0.0
      %463 = vmatpush1.msra.mxu0 0.0
      %464 = vmatprep.subr.mxu0 0.0
      %465 = vmatpush1.msra.mxu0 0.0
      %466 = vmatprep.subr.mxu0 0.0
      %467 = vmatpush1.msra.mxu0 0.0
      %468 = vmatprep.subr.mxu0 0.0
      %469 = vmatpush1.msra.mxu0 0.0
      %470 = vmatprep.subr.mxu0 0.0
      %471 = vmatpush1.msra.mxu0 0.0
      %472 = vmatprep.subr.mxu0 0.0
      %473 = vmatpush1.msra.mxu0 0.0
      %474 = vmatprep.subr.mxu0 0.0
      %475 = vmatpush1.msra.mxu0 0.0
      %476 = vmatprep.subr.mxu0 0.0
      %477 = vmatpush1.msra.mxu0 0.0
      %478 = vmatprep.subr.mxu0 0.0
      %479 = vmatpush1.msra.mxu0 0.0
      %480 = vmatprep.subr.mxu0 0.0
      %481 = vmatpush1.msra.mxu0 0.0
      %482 = vmatprep.subr.mxu0 0.0
      %483 = vmatpush1.msra.mxu0 0.0
      %484 = vmatprep.subr.mxu0 0.0
      %485 = vmatpush1.msra.mxu0 0.0
      %486 = vmatprep.subr.mxu0 0.0
      %487 = vmatpush1.msra.mxu0 0.0
      %488 = vmatprep.subr.mxu0 0.0
      %489 = vmatpush1.msra.mxu0 0.0
      %490 = vmatprep.subr.mxu0 0.0
      %491 = vmatpush1.msra.mxu0 0.0
      %492 = vmatprep.subr.mxu0 0.0
      %493 = vmatpush1.msra.mxu0 0.0
      %494 = vmatprep.subr.mxu0 0.0
      %495 = vmatpush1.msra.mxu0 0.0
      %496 = vmatprep.subr.mxu0 0.0
      %497 = vmatpush1.msra.mxu0 0.0
      %498 = vmatprep.subr.mxu0 0.0
      %499 = vmatpush1.msra.mxu0 0.0
      %500 = vmatprep.mubr.f32.mxu0 0.0
      %501 = vmatmul.mubr.f32.gmra.mrb[0].mxu0 %v434
      %v502 = vpop.f32.mrb[0].mxu0
      %v503 = vadd.f32 0.0, %v502
      %v504 = vpop.f32.mrb[0].mxu0
      %505 = vdwg.mxu0
      %v506 = vld [vmem:[%s3] sm:$0x1]
      %v508 = vlaneseq
      %v509 = vshrl.u32 %v508, 7
      %v510 = vsub.s32 0, %v509
      %v511 = vrot.slane %v506, %v510
      %vm513 = vcmask 64512
      %v515 = vsel %vm513, %v427, 0
      %517 = vmatprep.subr.mxu0 0.0
      %518 = vmatpush1.msra.mxu0 %v503
      %519 = vmatprep.subr.mxu0 0.0
      %520 = vmatpush1.msra.mxu0 0.0
      %521 = vmatprep.subr.mxu0 0.0
      %522 = vmatpush1.msra.mxu0 0.0
      %523 = vmatprep.subr.mxu0 0.0
      %524 = vmatpush1.msra.mxu0 0.0
      %525 = vmatprep.subr.mxu0 0.0
      %526 = vmatpush1.msra.mxu0 0.0
      %527 = vmatprep.subr.mxu0 0.0
      %528 = vmatpush1.msra.mxu0 0.0
      %529 = vmatprep.subr.mxu0 0.0
      %530 = vmatpush1.msra.mxu0 0.0
      %531 = vmatprep.subr.mxu0 0.0
      %532 = vmatpush1.msra.mxu0 0.0
      %533 = vmatprep.subr.mxu0 0.0
      %534 = vmatpush1.msra.mxu0 0.0
      %535 = vmatprep.subr.mxu0 0.0
      %536 = vmatpush1.msra.mxu0 0.0
      %537 = vmatprep.subr.mxu0 0.0
      %538 = vmatpush1.msra.mxu0 0.0
      %539 = vmatprep.subr.mxu0 0.0
      %540 = vmatpush1.msra.mxu0 0.0
      %541 = vmatprep.subr.mxu0 0.0
      %542 = vmatpush1.msra.mxu0 0.0
      %543 = vmatprep.subr.mxu0 0.0
      %544 = vmatpush1.msra.mxu0 0.0
      %545 = vmatprep.subr.mxu0 0.0
      %546 = vmatpush1.msra.mxu0 0.0
      %547 = vmatprep.subr.mxu0 0.0
      %548 = vmatpush1.msra.mxu0 0.0
      %549 = vmatprep.subr.mxu0 0.0
      %550 = vmatpush1.msra.mxu0 0.0
      %551 = vmatprep.subr.mxu0 0.0
      %552 = vmatpush1.msra.mxu0 0.0
      %553 = vmatprep.subr.mxu0 0.0
      %554 = vmatpush1.msra.mxu0 0.0
      %555 = vmatprep.subr.mxu0 0.0
      %556 = vmatpush1.msra.mxu0 0.0
      %557 = vmatprep.subr.mxu0 0.0
      %558 = vmatpush1.msra.mxu0 0.0
      %559 = vmatprep.subr.mxu0 0.0
      %560 = vmatpush1.msra.mxu0 0.0
      %561 = vmatprep.subr.mxu0 0.0
      %562 = vmatpush1.msra.mxu0 0.0
      %563 = vmatprep.subr.mxu0 0.0
      %564 = vmatpush1.msra.mxu0 0.0
      %565 = vmatprep.subr.mxu0 0.0
      %566 = vmatpush1.msra.mxu0 0.0
      %567 = vmatprep.subr.mxu0 0.0
      %568 = vmatpush1.msra.mxu0 0.0
      %569 = vmatprep.subr.mxu0 0.0
      %570 = vmatpush1.msra.mxu0 0.0
      %571 = vmatprep.subr.mxu0 0.0
      %572 = vmatpush1.msra.mxu0 0.0
      %573 = vmatprep.subr.mxu0 0.0
      %574 = vmatpush1.msra.mxu0 0.0
      %575 = vmatprep.subr.mxu0 0.0
      %576 = vmatpush1.msra.mxu0 0.0
      %577 = vmatprep.subr.mxu0 0.0
      %578 = vmatpush1.msra.mxu0 0.0
      %579 = vmatprep.subr.mxu0 0.0
      %580 = vmatpush1.msra.mxu0 0.0
      %581 = vmatprep.mubr.f32.mxu0 0.0
      %582 = vmatmul.mubr.f32.gmra.mrb[0].mxu0 %v515
      %v583 = vpop.f32.mrb[0].mxu0
      %v584 = vadd.f32 %v511, %v583
      %v585 = vpop.f32.mrb[0].mxu0
      %586 = vdwg.mxu0
      %v587 = vmax.f32 %v584, 0.0
      %v588 = vld [vmem:[%s4] sm:$0xff]
      %v589 = vld [vmem:[%s4 + $0x8] sm:$0xff]
      %v590 = vld [vmem:[%s4 + $0x10] sm:$0xff]
      %v591 = vld [vmem:[%s4 + $0x18] sm:$0xff]
      %v593 = vsel %vm432, %v587, 0
      %595 = vmatprep.subr.mxu0 0.0
      %596 = vmatpush1.msra.mxu0 %v588
      %597 = vmatprep.subr.mxu0 0.0
      %598 = vmatpush1.msra.mxu0 %v589
      %599 = vmatprep.subr.mxu0 0.0
      %600 = vmatpush1.msra.mxu0 %v590
      %601 = vmatprep.subr.mxu0 0.0
      %602 = vmatpush1.msra.mxu0 %v591
      %603 = vmatprep.subr.mxu0 0.0
      %604 = vmatpush1.msra.mxu0 0.0
      %605 = vmatprep.subr.mxu0 0.0
      %606 = vmatpush1.msra.mxu0 0.0
      %607 = vmatprep.subr.mxu0 0.0
      %608 = vmatpush1.msra.mxu0 0.0
      %609 = vmatprep.subr.mxu0 0.0
      %610 = vmatpush1.msra.mxu0 0.0
      %611 = vmatprep.subr.mxu0 0.0
      %612 = vmatpush1.msra.mxu0 0.0
      %613 = vmatprep.subr.mxu0 0.0
      %614 = vmatpush1.msra.mxu0 0.0
      %615 = vmatprep.subr.mxu0 0.0
      %616 = vmatpush1.msra.mxu0 0.0
      %617 = vmatprep.subr.mxu0 0.0
      %618 = vmatpush1.msra.mxu0 0.0
      %619 = vmatprep.subr.mxu0 0.0
      %620 = vmatpush1.msra.mxu0 0.0
      %621 = vmatprep.subr.mxu0 0.0
      %622 = vmatpush1.msra.mxu0 0.0
      %623 = vmatprep.subr.mxu0 0.0
      %624 = vmatpush1.msra.mxu0 0.0
      %625 = vmatprep.subr.mxu0 0.0
      %626 = vmatpush1.msra.mxu0 0.0
      %627 = vmatprep.subr.mxu0 0.0
      %628 = vmatpush1.msra.mxu0 0.0
      %629 = vmatprep.subr.mxu0 0.0
      %630 = vmatpush1.msra.mxu0 0.0
      %631 = vmatprep.subr.mxu0 0.0
      %632 = vmatpush1.msra.mxu0 0.0
      %633 = vmatprep.subr.mxu0 0.0
      %634 = vmatpush1.msra.mxu0 0.0
      %635 = vmatprep.subr.mxu0 0.0
      %636 = vmatpush1.msra.mxu0 0.0
      %637 = vmatprep.subr.mxu0 0.0
      %638 = vmatpush1.msra.mxu0 0.0
      %639 = vmatprep.subr.mxu0 0.0
      %640 = vmatpush1.msra.mxu0 0.0
      %641 = vmatprep.subr.mxu0 0.0
      %642 = vmatpush1.msra.mxu0 0.0
      %643 = vmatprep.subr.mxu0 0.0
      %644 = vmatpush1.msra.mxu0 0.0
      %645 = vmatprep.subr.mxu0 0.0
      %646 = vmatpush1.msra.mxu0 0.0
      %647 = vmatprep.subr.mxu0 0.0
      %648 = vmatpush1.msra.mxu0 0.0
      %649 = vmatprep.subr.mxu0 0.0
      %650 = vmatpush1.msra.mxu0 0.0
      %651 = vmatprep.subr.mxu0 0.0
      %652 = vmatpush1.msra.mxu0 0.0
      %653 = vmatprep.subr.mxu0 0.0
      %654 = vmatpush1.msra.mxu0 0.0
      %655 = vmatprep.subr.mxu0 0.0
      %656 = vmatpush1.msra.mxu0 0.0
      %657 = vmatprep.subr.mxu0 0.0
      %658 = vmatpush1.msra.mxu0 0.0
      %659 = vmatprep.mubr.f32.mxu0 0.0
      %660 = vmatmul.mubr.f32.gmra.mrb[0].mxu0 %v593
      %v661 = vpop.f32.mrb[0].mxu0
      %v662 = vadd.f32 0.0, %v661
      %v663 = vpop.f32.mrb[0].mxu0
      %664 = vdwg.mxu0
      %v665 = vld [vmem:[%s5] sm:$0x1]
      %v667 = vlaneseq
      %v668 = vshrl.u32 %v667, 7
      %v669 = vsub.s32 0, %v668
      %v670 = vrot.slane %v665, %v669
      %672 = vmatprep.subr.mxu0 0.0
      %673 = vmatpush1.msra.mxu0 %v662
      %674 = vmatprep.subr.mxu0 0.0
      %675 = vmatpush1.msra.mxu0 0.0
      %676 = vmatprep.subr.mxu0 0.0
      %677 = vmatpush1.msra.mxu0 0.0
      %678 = vmatprep.subr.mxu0 0.0
      %679 = vmatpush1.msra.mxu0 0.0
      %680 = vmatprep.subr.mxu0 0.0
      %681 = vmatpush1.msra.mxu0 0.0
      %682 = vmatprep.subr.mxu0 0.0
      %683 = vmatpush1.msra.mxu0 0.0
      %684 = vmatprep.subr.mxu0 0.0
      %685 = vmatpush1.msra.mxu0 0.0
      %686 = vmatprep.subr.mxu0 0.0
      %687 = vmatpush1.msra.mxu0 0.0
      %688 = vmatprep.subr.mxu0 0.0
      %689 = vmatpush1.msra.mxu0 0.0
      %690 = vmatprep.subr.mxu0 0.0
      %691 = vmatpush1.msra.mxu0 0.0
      %692 = vmatprep.subr.mxu0 0.0
      %693 = vmatpush1.msra.mxu0 0.0
      %694 = vmatprep.subr.mxu0 0.0
      %695 = vmatpush1.msra.mxu0 0.0
      %696 = vmatprep.subr.mxu0 0.0
      %697 = vmatpush1.msra.mxu0 0.0
      %698 = vmatprep.subr.mxu0 0.0
      %699 = vmatpush1.msra.mxu0 0.0
      %700 = vmatprep.subr.mxu0 0.0
      %701 = vmatpush1.msra.mxu0 0.0
      %702 = vmatprep.subr.mxu0 0.0
      %703 = vmatpush1.msra.mxu0 0.0
      %704 = vmatprep.subr.mxu0 0.0
      %705 = vmatpush1.msra.mxu0 0.0
      %706 = vmatprep.subr.mxu0 0.0
      %707 = vmatpush1.msra.mxu0 0.0
      %708 = vmatprep.subr.mxu0 0.0
      %709 = vmatpush1.msra.mxu0 0.0
      %710 = vmatprep.subr.mxu0 0.0
      %711 = vmatpush1.msra.mxu0 0.0
      %712 = vmatprep.subr.mxu0 0.0
      %713 = vmatpush1.msra.mxu0 0.0
      %714 = vmatprep.subr.mxu0 0.0
      %715 = vmatpush1.msra.mxu0 0.0
      %716 = vmatprep.subr.mxu0 0.0
      %717 = vmatpush1.msra.mxu0 0.0
      %718 = vmatprep.subr.mxu0 0.0
      %719 = vmatpush1.msra.mxu0 0.0
      %720 = vmatprep.subr.mxu0 0.0
      %721 = vmatpush1.msra.mxu0 0.0
      %722 = vmatprep.subr.mxu0 0.0
      %723 = vmatpush1.msra.mxu0 0.0
      %724 = vmatprep.subr.mxu0 0.0
      %725 = vmatpush1.msra.mxu0 0.0
      %726 = vmatprep.subr.mxu0 0.0
      %727 = vmatpush1.msra.mxu0 0.0
      %728 = vmatprep.subr.mxu0 0.0
      %729 = vmatpush1.msra.mxu0 0.0
      %730 = vmatprep.subr.mxu0 0.0
      %731 = vmatpush1.msra.mxu0 0.0
      %732 = vmatprep.subr.mxu0 0.0
      %733 = vmatpush1.msra.mxu0 0.0
      %734 = vmatprep.subr.mxu0 0.0
      %735 = vmatpush1.msra.mxu0 0.0
      %736 = vmatprep.mubr.f32.mxu0 0.0
      %737 = vmatmul.mubr.f32.gmra.mrb[0].mxu0 %v515
      %v738 = vpop.f32.mrb[0].mxu0
      %v739 = vadd.f32 %v670, %v738
      %v740 = vpop.f32.mrb[0].mxu0
      %741 = vdwg.mxu0
      %v743 = vsel %vm432, %v739, 0
      %745 = vmatprep.subr.mxu0 0.0
      %746 = vmatpush1.xpose.msra.mxu0 %v743
      %747 = vmatprep.subr.mxu0 0.0
      %748 = vmatpush1.xpose.msra.mxu0 0.0
      %749 = vmatprep.subr.mxu0 0.0
      %750 = vmatpush1.xpose.msra.mxu0 0.0
      %751 = vmatprep.subr.mxu0 0.0
      %752 = vmatpush1.xpose.msra.mxu0 0.0
      %753 = vmatprep.subr.mxu0 0.0
      %754 = vmatpush1.xpose.msra.mxu0 0.0
      %755 = vmatprep.subr.mxu0 0.0
      %756 = vmatpush1.xpose.msra.mxu0 0.0
      %757 = vmatprep.subr.mxu0 0.0
      %758 = vmatpush1.xpose.msra.mxu0 0.0
      %759 = vmatprep.subr.mxu0 0.0
      %760 = vmatpush1.xpose.msra.mxu0 0.0
      %761 = vmatprep.subr.mxu0 0.0
      %762 = vmatpush1.xpose.msra.mxu0 0.0
      %763 = vmatprep.subr.mxu0 0.0
      %764 = vmatpush1.xpose.msra.mxu0 0.0
      %765 = vmatprep.subr.mxu0 0.0
      %766 = vmatpush1.xpose.msra.mxu0 0.0
      %767 = vmatprep.subr.mxu0 0.0
      %768 = vmatpush1.xpose.msra.mxu0 0.0
      %769 = vmatprep.subr.mxu0 0.0
      %770 = vmatpush1.xpose.msra.mxu0 0.0
      %771 = vmatprep.subr.mxu0 0.0
      %772 = vmatpush1.xpose.msra.mxu0 0.0
      %773 = vmatprep.subr.mxu0 0.0
      %774 = vmatpush1.xpose.msra.mxu0 0.0
      %775 = vmatprep.subr.mxu0 0.0
      %776 = vmatpush1.xpose.msra.mxu0 0.0
      %777 = vmatprep.subr.mxu0 0.0
      %778 = vmatpush1.xpose.msra.mxu0 0.0
      %779 = vmatprep.subr.mxu0 0.0
      %780 = vmatpush1.xpose.msra.mxu0 0.0
      %781 = vmatprep.subr.mxu0 0.0
      %782 = vmatpush1.xpose.msra.mxu0 0.0
      %783 = vmatprep.subr.mxu0 0.0
      %784 = vmatpush1.xpose.msra.mxu0 0.0
      %785 = vmatprep.subr.mxu0 0.0
      %786 = vmatpush1.xpose.msra.mxu0 0.0
      %787 = vmatprep.subr.mxu0 0.0
      %788 = vmatpush1.xpose.msra.mxu0 0.0
      %789 = vmatprep.subr.mxu0 0.0
      %790 = vmatpush1.xpose.msra.mxu0 0.0
      %791 = vmatprep.subr.mxu0 0.0
      %792 = vmatpush1.xpose.msra.mxu0 0.0
      %793 = vmatprep.subr.mxu0 0.0
      %794 = vmatpush1.xpose.msra.mxu0 0.0
      %795 = vmatprep.subr.mxu0 0.0
      %796 = vmatpush1.xpose.msra.mxu0 0.0
      %797 = vmatprep.subr.mxu0 0.0
      %798 = vmatpush1.xpose.msra.mxu0 0.0
      %799 = vmatprep.subr.mxu0 0.0
      %800 = vmatpush1.xpose.msra.mxu0 0.0
      %801 = vmatprep.subr.mxu0 0.0
      %802 = vmatpush1.xpose.msra.mxu0 0.0
      %803 = vmatprep.subr.mxu0 0.0
      %804 = vmatpush1.xpose.msra.mxu0 0.0
      %805 = vmatprep.subr.mxu0 0.0
      %806 = vmatpush1.xpose.msra.mxu0 0.0
      %807 = vmatprep.subr.mxu0 0.0
      %808 = vmatpush1.xpose.msra.mxu0 0.0
      %809 = vmatprep.mubr.f32.mxu0 0.0
      %810 = vmatmul.mubr.f32.gmra.mrb[0].mxu0 %v743
      %v811 = vpop.f32.mrb[0].mxu0
      %v812 = vadd.f32 0.0, %v811
      %v813 = vpop.f32.mrb[0].mxu0
      %814 = vdwg.mxu0
      %v815 = vxor.u32 %v812, 2147483648
      %v816 = vmul.f32 %v815, 1.442695
      %v817 = vpow.pop %v816
      %v818 = vadd.f32 %v817, 1.0
      %v819 = vrcp.pop %v818
      %v820 = vmul.f32 1.0, %v819
      %v821 = vld [vmem:[%s6] sm:$0xff]
      %v822 = vld [vmem:[%s6 + $0x8] sm:$0xff]
      %v823 = vld [vmem:[%s6 + $0x10] sm:$0xff]
      %v824 = vld [vmem:[%s6 + $0x18] sm:$0xff]
      %825 = vmatprep.subr.mxu0 0.0
      %826 = vmatpush1.msra.mxu0 %v821
      %827 = vmatprep.subr.mxu0 0.0
      %828 = vmatpush1.msra.mxu0 %v822
      %829 = vmatprep.subr.mxu0 0.0
      %830 = vmatpush1.msra.mxu0 %v823
      %831 = vmatprep.subr.mxu0 0.0
      %832 = vmatpush1.msra.mxu0 %v824
      %833 = vmatprep.subr.mxu0 0.0
      %834 = vmatpush1.msra.mxu0 0.0
      %835 = vmatprep.subr.mxu0 0.0
      %836 = vmatpush1.msra.mxu0 0.0
      %837 = vmatprep.subr.mxu0 0.0
      %838 = vmatpush1.msra.mxu0 0.0
      %839 = vmatprep.subr.mxu0 0.0
      %840 = vmatpush1.msra.mxu0 0.0
      %841 = vmatprep.subr.mxu0 0.0
      %842 = vmatpush1.msra.mxu0 0.0
      %843 = vmatprep.subr.mxu0 0.0
      %844 = vmatpush1.msra.mxu0 0.0
      %845 = vmatprep.subr.mxu0 0.0
      %846 = vmatpush1.msra.mxu0 0.0
      %847 = vmatprep.subr.mxu0 0.0
      %848 = vmatpush1.msra.mxu0 0.0
      %849 = vmatprep.subr.mxu0 0.0
      %850 = vmatpush1.msra.mxu0 0.0
      %851 = vmatprep.subr.mxu0 0.0
      %852 = vmatpush1.msra.mxu0 0.0
      %853 = vmatprep.subr.mxu0 0.0
      %854 = vmatpush1.msra.mxu0 0.0
      %855 = vmatprep.subr.mxu0 0.0
      %856 = vmatpush1.msra.mxu0 0.0
      %857 = vmatprep.subr.mxu0 0.0
      %858 = vmatpush1.msra.mxu0 0.0
      %859 = vmatprep.subr.mxu0 0.0
      %860 = vmatpush1.msra.mxu0 0.0
      %861 = vmatprep.subr.mxu0 0.0
      %862 = vmatpush1.msra.mxu0 0.0
      %863 = vmatprep.subr.mxu0 0.0
      %864 = vmatpush1.msra.mxu0 0.0
      %865 = vmatprep.subr.mxu0 0.0
      %866 = vmatpush1.msra.mxu0 0.0
      %867 = vmatprep.subr.mxu0 0.0
      %868 = vmatpush1.msra.mxu0 0.0
      %869 = vmatprep.subr.mxu0 0.0
      %870 = vmatpush1.msra.mxu0 0.0
      %871 = vmatprep.subr.mxu0 0.0
      %872 = vmatpush1.msra.mxu0 0.0
      %873 = vmatprep.subr.mxu0 0.0
      %874 = vmatpush1.msra.mxu0 0.0
      %875 = vmatprep.subr.mxu0 0.0
      %876 = vmatpush1.msra.mxu0 0.0
      %877 = vmatprep.subr.mxu0 0.0
      %878 = vmatpush1.msra.mxu0 0.0
      %879 = vmatprep.subr.mxu0 0.0
      %880 = vmatpush1.msra.mxu0 0.0
      %881 = vmatprep.subr.mxu0 0.0
      %882 = vmatpush1.msra.mxu0 0.0
      %883 = vmatprep.subr.mxu0 0.0
      %884 = vmatpush1.msra.mxu0 0.0
      %885 = vmatprep.subr.mxu0 0.0
      %886 = vmatpush1.msra.mxu0 0.0
      %887 = vmatprep.subr.mxu0 0.0
      %888 = vmatpush1.msra.mxu0 0.0
      %889 = vmatprep.mubr.f32.mxu0 0.0
      %890 = vmatmul.mubr.f32.gmra.mrb[0].mxu0 %v434
      %v891 = vpop.f32.mrb[0].mxu0
      %v892 = vadd.f32 0.0, %v891
      %v893 = vpop.f32.mrb[0].mxu0
      %894 = vdwg.mxu0
      %v895 = vld [vmem:[%s8] sm:$0xff]
      %v896 = vld [vmem:[%s8 + $0x8] sm:$0xff]
      %v897 = vld [vmem:[%s8 + $0x10] sm:$0xff]
      %v898 = vld [vmem:[%s8 + $0x18] sm:$0xff]
      %v899 = vld [vmem:[%s9] sm:$0x1]
      %v901 = vlaneseq
      %v902 = vshrl.u32 %v901, 7
      %v903 = vsub.s32 0, %v902
      %v904 = vrot.slane %v899, %v903
      %906 = vmatprep.subr.mxu0 0.0
      %907 = vmatpush1.msra.mxu0 %v895
      %908 = vmatprep.subr.mxu0 0.0
      %909 = vmatpush1.msra.mxu0 %v896
      %910 = vmatprep.subr.mxu0 0.0
      %911 = vmatpush1.msra.mxu0 %v897
      %912 = vmatprep.subr.mxu0 0.0
      %913 = vmatpush1.msra.mxu0 %v898
      %914 = vmatprep.subr.mxu0 0.0
      %915 = vmatpush1.msra.mxu0 0.0
      %916 = vmatprep.subr.mxu0 0.0
      %917 = vmatpush1.msra.mxu0 0.0
      %918 = vmatprep.subr.mxu0 0.0
      %919 = vmatpush1.msra.mxu0 0.0
      %920 = vmatprep.subr.mxu0 0.0
      %921 = vmatpush1.msra.mxu0 0.0
      %922 = vmatprep.subr.mxu0 0.0
      %923 = vmatpush1.msra.mxu0 0.0
      %924 = vmatprep.subr.mxu0 0.0
      %925 = vmatpush1.msra.mxu0 0.0
      %926 = vmatprep.subr.mxu0 0.0
      %927 = vmatpush1.msra.mxu0 0.0
      %928 = vmatprep.subr.mxu0 0.0
      %929 = vmatpush1.msra.mxu0 0.0
      %930 = vmatprep.subr.mxu0 0.0
      %931 = vmatpush1.msra.mxu0 0.0
      %932 = vmatprep.subr.mxu0 0.0
      %933 = vmatpush1.msra.mxu0 0.0
      %934 = vmatprep.subr.mxu0 0.0
      %935 = vmatpush1.msra.mxu0 0.0
      %936 = vmatprep.subr.mxu0 0.0
      %937 = vmatpush1.msra.mxu0 0.0
      %938 = vmatprep.subr.mxu0 0.0
      %939 = vmatpush1.msra.mxu0 0.0
      %940 = vmatprep.subr.mxu0 0.0
      %941 = vmatpush1.msra.mxu0 0.0
      %942 = vmatprep.subr.mxu0 0.0
      %943 = vmatpush1.msra.mxu0 0.0
      %944 = vmatprep.subr.mxu0 0.0
      %945 = vmatpush1.msra.mxu0 0.0
      %946 = vmatprep.subr.mxu0 0.0
      %947 = vmatpush1.msra.mxu0 0.0
      %948 = vmatprep.subr.mxu0 0.0
      %949 = vmatpush1.msra.mxu0 0.0
      %950 = vmatprep.subr.mxu0 0.0
      %951 = vmatpush1.msra.mxu0 0.0
      %952 = vmatprep.subr.mxu0 0.0
      %953 = vmatpush1.msra.mxu0 0.0
      %954 = vmatprep.subr.mxu0 0.0
      %955 = vmatpush1.msra.mxu0 0.0
      %956 = vmatprep.subr.mxu0 0.0
      %957 = vmatpush1.msra.mxu0 0.0
      %958 = vmatprep.subr.mxu0 0.0
      %959 = vmatpush1.msra.mxu0 0.0
      %960 = vmatprep.subr.mxu0 0.0
      %961 = vmatpush1.msra.mxu0 0.0
      %962 = vmatprep.subr.mxu0 0.0
      %963 = vmatpush1.msra.mxu0 0.0
      %964 = vmatprep.subr.mxu0 0.0
      %965 = vmatpush1.msra.mxu0 0.0
      %966 = vmatprep.subr.mxu0 0.0
      %967 = vmatpush1.msra.mxu0 0.0
      %968 = vmatprep.subr.mxu0 0.0
      %969 = vmatpush1.msra.mxu0 0.0
      %970 = vmatprep.mubr.f32.mxu0 0.0
      %971 = vmatmul.mubr.f32.gmra.mrb[0].mxu0 %v434
      %v972 = vpop.f32.mrb[0].mxu0
      %v973 = vadd.f32 %v904, %v972
      %v974 = vpop.f32.mrb[0].mxu0
      %975 = vdwg.mxu0
      %v976 = vld [vmem:[%s7] sm:$0x1]
      %v978 = vsel %vm432, %v976, 0
      %v981 = vsel %vm432, %v892, 0
      %983 = vmatprep.subr.mxu0 0.0
      %984 = vmatpush1.xpose.msra.mxu0 %v981
      %985 = vmatprep.subr.mxu0 0.0
      %986 = vmatpush1.xpose.msra.mxu0 0.0
      %987 = vmatprep.subr.mxu0 0.0
      %988 = vmatpush1.xpose.msra.mxu0 0.0
      %989 = vmatprep.subr.mxu0 0.0
      %990 = vmatpush1.xpose.msra.mxu0 0.0
      %991 = vmatprep.subr.mxu0 0.0
      %992 = vmatpush1.xpose.msra.mxu0 0.0
      %993 = vmatprep.subr.mxu0 0.0
      %994 = vmatpush1.xpose.msra.mxu0 0.0
      %995 = vmatprep.subr.mxu0 0.0
      %996 = vmatpush1.xpose.msra.mxu0 0.0
      %997 = vmatprep.subr.mxu0 0.0
      %998 = vmatpush1.xpose.msra.mxu0 0.0
      %999 = vmatprep.subr.mxu0 0.0
      %1000 = vmatpush1.xpose.msra.mxu0 0.0
      %1001 = vmatprep.subr.mxu0 0.0
      %1002 = vmatpush1.xpose.msra.mxu0 0.0
      %1003 = vmatprep.subr.mxu0 0.0
      %1004 = vmatpush1.xpose.msra.mxu0 0.0
      %1005 = vmatprep.subr.mxu0 0.0
      %1006 = vmatpush1.xpose.msra.mxu0 0.0
      %1007 = vmatprep.subr.mxu0 0.0
      %1008 = vmatpush1.xpose.msra.mxu0 0.0
      %1009 = vmatprep.subr.mxu0 0.0
      %1010 = vmatpush1.xpose.msra.mxu0 0.0
      %1011 = vmatprep.subr.mxu0 0.0
      %1012 = vmatpush1.xpose.msra.mxu0 0.0
      %1013 = vmatprep.subr.mxu0 0.0
      %1014 = vmatpush1.xpose.msra.mxu0 0.0
      %1015 = vmatprep.subr.mxu0 0.0
      %1016 = vmatpush1.xpose.msra.mxu0 0.0
      %1017 = vmatprep.subr.mxu0 0.0
      %1018 = vmatpush1.xpose.msra.mxu0 0.0
      %1019 = vmatprep.subr.mxu0 0.0
      %1020 = vmatpush1.xpose.msra.mxu0 0.0
      %1021 = vmatprep.subr.mxu0 0.0
      %1022 = vmatpush1.xpose.msra.mxu0 0.0
      %1023 = vmatprep.subr.mxu0 0.0
      %1024 = vmatpush1.xpose.msra.mxu0 0.0
      %1025 = vmatprep.subr.mxu0 0.0
      %1026 = vmatpush1.xpose.msra.mxu0 0.0
      %1027 = vmatprep.subr.mxu0 0.0
      %1028 = vmatpush1.xpose.msra.mxu0 0.0
      %1029 = vmatprep.subr.mxu0 0.0
      %1030 = vmatpush1.xpose.msra.mxu0 0.0
      %1031 = vmatprep.subr.mxu0 0.0
      %1032 = vmatpush1.xpose.msra.mxu0 0.0
      %1033 = vmatprep.subr.mxu0 0.0
      %1034 = vmatpush1.xpose.msra.mxu0 0.0
      %1035 = vmatprep.subr.mxu0 0.0
      %1036 = vmatpush1.xpose.msra.mxu0 0.0
      %1037 = vmatprep.subr.mxu0 0.0
      %1038 = vmatpush1.xpose.msra.mxu0 0.0
      %1039 = vmatprep.subr.mxu0 0.0
      %1040 = vmatpush1.xpose.msra.mxu0 0.0
      %1041 = vmatprep.subr.mxu0 0.0
      %1042 = vmatpush1.xpose.msra.mxu0 0.0
      %1043 = vmatprep.subr.mxu0 0.0
      %1044 = vmatpush1.xpose.msra.mxu0 0.0
      %1045 = vmatprep.subr.mxu0 0.0
      %1046 = vmatpush1.xpose.msra.mxu0 0.0
      %1047 = vmatprep.mubr.f32.mxu0 0.0
      %1048 = vmatmul.mubr.f32.gmra.mrb[0].mxu0 %v978
      %v1049 = vpop.f32.mrb[0].mxu0
      %v1050 = vadd.f32 0.0, %v1049
      %v1051 = vpop.f32.mrb[0].mxu0
      %1052 = vdwg.mxu0
      %vm1053 = vcmp.ge.f32.partialorder %v1050, 0.0
      %v1054 = vmul.f32 %v1050, 0.1
      %v1055 = vsel %vm1053, %v1050, %v1054
      %vm1056 = vcmp.gt.f32.partialorder %v820, 0.0
      %v1057 = vlaneseq
      %v1058 = vshrl.u32 %v1057, 7
      %v1059 = vsub.s32 0, %v1058
      %v1060 = vrot.slane %v1055, %v1059
      %v1061 = vsel %vm1056, %v1060, -1e+09
      %v1062 = vsel %vm513, %v1061, -inf
      %1063 = vmax.xlane.f32.xlu0 %v1062
      %v1064 = vpop.xlane.xlu0 %1063
      %v1065 = vsub.f32 %v1061, %v1064
      %v1066 = vmul.f32 %v1065, 1.442695
      %v1067 = vpow.pop %v1066
      %v1068 = vsel %vm513, %v1067, 0.0
      %1069 = vadd.xlane.f32.xlu0 %v1068
      %v1070 = vpop.xlane.xlu0 %1069
      %v1071 = vrcp.pop %v1070
      %v1072 = vmul.f32 %v1067, %v1071
      %v1074 = vsel %vm513, %v1072, 0
      %1076 = vmatprep.subr.mxu0 0.0
      %1077 = vmatpush1.msra.mxu0 %v973
      %1078 = vmatprep.subr.mxu0 0.0
      %1079 = vmatpush1.msra.mxu0 0.0
      %1080 = vmatprep.subr.mxu0 0.0
      %1081 = vmatpush1.msra.mxu0 0.0
      %1082 = vmatprep.subr.mxu0 0.0
      %1083 = vmatpush1.msra.mxu0 0.0
      %1084 = vmatprep.subr.mxu0 0.0
      %1085 = vmatpush1.msra.mxu0 0.0
      %1086 = vmatprep.subr.mxu0 0.0
      %1087 = vmatpush1.msra.mxu0 0.0
      %1088 = vmatprep.subr.mxu0 0.0
      %1089 = vmatpush1.msra.mxu0 0.0
      %1090 = vmatprep.subr.mxu0 0.0
      %1091 = vmatpush1.msra.mxu0 0.0
      %1092 = vmatprep.subr.mxu0 0.0
      %1093 = vmatpush1.msra.mxu0 0.0
      %1094 = vmatprep.subr.mxu0 0.0
      %1095 = vmatpush1.msra.mxu0 0.0
      %1096 = vmatprep.subr.mxu0 0.0
      %1097 = vmatpush1.msra.mxu0 0.0
      %1098 = vmatprep.subr.mxu0 0.0
      %1099 = vmatpush1.msra.mxu0 0.0
      %1100 = vmatprep.subr.mxu0 0.0
      %1101 = vmatpush1.msra.mxu0 0.0
      %1102 = vmatprep.subr.mxu0 0.0
      %1103 = vmatpush1.msra.mxu0 0.0
      %1104 = vmatprep.subr.mxu0 0.0
      %1105 = vmatpush1.msra.mxu0 0.0
      %1106 = vmatprep.subr.mxu0 0.0
      %1107 = vmatpush1.msra.mxu0 0.0
      %1108 = vmatprep.subr.mxu0 0.0
      %1109 = vmatpush1.msra.mxu0 0.0
      %1110 = vmatprep.subr.mxu0 0.0
      %1111 = vmatpush1.msra.mxu0 0.0
      %1112 = vmatprep.subr.mxu0 0.0
      %1113 = vmatpush1.msra.mxu0 0.0
      %1114 = vmatprep.subr.mxu0 0.0
      %1115 = vmatpush1.msra.mxu0 0.0
      %1116 = vmatprep.subr.mxu0 0.0
      %1117 = vmatpush1.msra.mxu0 0.0
      %1118 = vmatprep.subr.mxu0 0.0
      %1119 = vmatpush1.msra.mxu0 0.0
      %1120 = vmatprep.subr.mxu0 0.0
      %1121 = vmatpush1.msra.mxu0 0.0
      %1122 = vmatprep.subr.mxu0 0.0
      %1123 = vmatpush1.msra.mxu0 0.0
      %1124 = vmatprep.subr.mxu0 0.0
      %1125 = vmatpush1.msra.mxu0 0.0
      %1126 = vmatprep.subr.mxu0 0.0
      %1127 = vmatpush1.msra.mxu0 0.0
      %1128 = vmatprep.subr.mxu0 0.0
      %1129 = vmatpush1.msra.mxu0 0.0
      %1130 = vmatprep.subr.mxu0 0.0
      %1131 = vmatpush1.msra.mxu0 0.0
      %1132 = vmatprep.subr.mxu0 0.0
      %1133 = vmatpush1.msra.mxu0 0.0
      %1134 = vmatprep.subr.mxu0 0.0
      %1135 = vmatpush1.msra.mxu0 0.0
      %1136 = vmatprep.subr.mxu0 0.0
      %1137 = vmatpush1.msra.mxu0 0.0
      %1138 = vmatprep.subr.mxu0 0.0
      %1139 = vmatpush1.msra.mxu0 0.0
      %1140 = vmatprep.mubr.f32.mxu0 0.0
      %1141 = vmatmul.mubr.f32.gmra.mrb[0].mxu0 %v1074
      %v1142 = vpop.f32.mrb[0].mxu0
      %v1143 = vadd.f32 0.0, %v1142
      %v1144 = vpop.f32.mrb[0].mxu0
      %1145 = vdwg.mxu0
      %v1146 = vld [vmem:[%s10] sm:$0xff]
      %v1147 = vld [vmem:[%s10 + $0x8] sm:$0xff]
      %v1148 = vld [vmem:[%s10 + $0x10] sm:$0xff]
      %v1149 = vld [vmem:[%s10 + $0x18] sm:$0xff]
      %v1151 = vsel %vm432, %v1143, 0
      %1153 = vmatprep.subr.mxu0 0.0
      %1154 = vmatpush1.msra.mxu0 %v1146
      %1155 = vmatprep.subr.mxu0 0.0
      %1156 = vmatpush1.msra.mxu0 %v1147
      %1157 = vmatprep.subr.mxu0 0.0
      %1158 = vmatpush1.msra.mxu0 %v1148
      %1159 = vmatprep.subr.mxu0 0.0
      %1160 = vmatpush1.msra.mxu0 %v1149
      %1161 = vmatprep.subr.mxu0 0.0
      %1162 = vmatpush1.msra.mxu0 0.0
      %1163 = vmatprep.subr.mxu0 0.0
      %1164 = vmatpush1.msra.mxu0 0.0
      %1165 = vmatprep.subr.mxu0 0.0
      %1166 = vmatpush1.msra.mxu0 0.0
      %1167 = vmatprep.subr.mxu0 0.0
      %1168 = vmatpush1.msra.mxu0 0.0
      %1169 = vmatprep.subr.mxu0 0.0
      %1170 = vmatpush1.msra.mxu0 0.0
      %1171 = vmatprep.subr.mxu0 0.0
      %1172 = vmatpush1.msra.mxu0 0.0
      %1173 = vmatprep.subr.mxu0 0.0
      %1174 = vmatpush1.msra.mxu0 0.0
      %1175 = vmatprep.subr.mxu0 0.0
      %1176 = vmatpush1.msra.mxu0 0.0
      %1177 = vmatprep.subr.mxu0 0.0
      %1178 = vmatpush1.msra.mxu0 0.0
      %1179 = vmatprep.subr.mxu0 0.0
      %1180 = vmatpush1.msra.mxu0 0.0
      %1181 = vmatprep.subr.mxu0 0.0
      %1182 = vmatpush1.msra.mxu0 0.0
      %1183 = vmatprep.subr.mxu0 0.0
      %1184 = vmatpush1.msra.mxu0 0.0
      %1185 = vmatprep.subr.mxu0 0.0
      %1186 = vmatpush1.msra.mxu0 0.0
      %1187 = vmatprep.subr.mxu0 0.0
      %1188 = vmatpush1.msra.mxu0 0.0
      %1189 = vmatprep.subr.mxu0 0.0
      %1190 = vmatpush1.msra.mxu0 0.0
      %1191 = vmatprep.subr.mxu0 0.0
      %1192 = vmatpush1.msra.mxu0 0.0
      %1193 = vmatprep.subr.mxu0 0.0
      %1194 = vmatpush1.msra.mxu0 0.0
      %1195 = vmatprep.subr.mxu0 0.0
      %1196 = vmatpush1.msra.mxu0 0.0
      %1197 = vmatprep.subr.mxu0 0.0
      %1198 = vmatpush1.msra.mxu0 0.0
      %1199 = vmatprep.subr.mxu0 0.0
      %1200 = vmatpush1.msra.mxu0 0.0
      %1201 = vmatprep.subr.mxu0 0.0
      %1202 = vmatpush1.msra.mxu0 0.0
      %1203 = vmatprep.subr.mxu0 0.0
      %1204 = vmatpush1.msra.mxu0 0.0
      %1205 = vmatprep.subr.mxu0 0.0
      %1206 = vmatpush1.msra.mxu0 0.0
      %1207 = vmatprep.subr.mxu0 0.0
      %1208 = vmatpush1.msra.mxu0 0.0
      %1209 = vmatprep.subr.mxu0 0.0
      %1210 = vmatpush1.msra.mxu0 0.0
      %1211 = vmatprep.subr.mxu0 0.0
      %1212 = vmatpush1.msra.mxu0 0.0
      %1213 = vmatprep.subr.mxu0 0.0
      %1214 = vmatpush1.msra.mxu0 0.0
      %1215 = vmatprep.subr.mxu0 0.0
      %1216 = vmatpush1.msra.mxu0 0.0
      %1217 = vmatprep.mubr.f32.mxu0 0.0
      %1218 = vmatmul.mubr.f32.gmra.mrb[0].mxu0 %v1151
      %v1219 = vpop.f32.mrb[0].mxu0
      %v1220 = vadd.f32 0.0, %v1219
      %v1221 = vpop.f32.mrb[0].mxu0
      %1222 = vdwg.mxu0
      %v1223 = vld [vmem:[%s11] sm:$0x1]
      %v1225 = vsel %vm432, %v1223, 0
      %v1228 = vsel %vm432, %v1220, 0
      %1230 = vmatprep.subr.mxu0 0.0
      %1231 = vmatpush1.xpose.msra.mxu0 %v1228
      %1232 = vmatprep.subr.mxu0 0.0
      %1233 = vmatpush1.xpose.msra.mxu0 0.0
      %1234 = vmatprep.subr.mxu0 0.0
      %1235 = vmatpush1.xpose.msra.mxu0 0.0
      %1236 = vmatprep.subr.mxu0 0.0
      %1237 = vmatpush1.xpose.msra.mxu0 0.0
      %1238 = vmatprep.subr.mxu0 0.0
      %1239 = vmatpush1.xpose.msra.mxu0 0.0
      %1240 = vmatprep.subr.mxu0 0.0
      %1241 = vmatpush1.xpose.msra.mxu0 0.0
      %1242 = vmatprep.subr.mxu0 0.0
      %1243 = vmatpush1.xpose.msra.mxu0 0.0
      %1244 = vmatprep.subr.mxu0 0.0
      %1245 = vmatpush1.xpose.msra.mxu0 0.0
      %1246 = vmatprep.subr.mxu0 0.0
      %1247 = vmatpush1.xpose.msra.mxu0 0.0
      %1248 = vmatprep.subr.mxu0 0.0
      %1249 = vmatpush1.xpose.msra.mxu0 0.0
      %1250 = vmatprep.subr.mxu0 0.0
      %1251 = vmatpush1.xpose.msra.mxu0 0.0
      %1252 = vmatprep.subr.mxu0 0.0
      %1253 = vmatpush1.xpose.msra.mxu0 0.0
      %1254 = vmatprep.subr.mxu0 0.0
      %1255 = vmatpush1.xpose.msra.mxu0 0.0
      %1256 = vmatprep.subr.mxu0 0.0
      %1257 = vmatpush1.xpose.msra.mxu0 0.0
      %1258 = vmatprep.subr.mxu0 0.0
      %1259 = vmatpush1.xpose.msra.mxu0 0.0
      %1260 = vmatprep.subr.mxu0 0.0
      %1261 = vmatpush1.xpose.msra.mxu0 0.0
      %1262 = vmatprep.subr.mxu0 0.0
      %1263 = vmatpush1.xpose.msra.mxu0 0.0
      %1264 = vmatprep.subr.mxu0 0.0
      %1265 = vmatpush1.xpose.msra.mxu0 0.0
      %1266 = vmatprep.subr.mxu0 0.0
      %1267 = vmatpush1.xpose.msra.mxu0 0.0
      %1268 = vmatprep.subr.mxu0 0.0
      %1269 = vmatpush1.xpose.msra.mxu0 0.0
      %1270 = vmatprep.subr.mxu0 0.0
      %1271 = vmatpush1.xpose.msra.mxu0 0.0
      %1272 = vmatprep.subr.mxu0 0.0
      %1273 = vmatpush1.xpose.msra.mxu0 0.0
      %1274 = vmatprep.subr.mxu0 0.0
      %1275 = vmatpush1.xpose.msra.mxu0 0.0
      %1276 = vmatprep.subr.mxu0 0.0
      %1277 = vmatpush1.xpose.msra.mxu0 0.0
      %1278 = vmatprep.subr.mxu0 0.0
      %1279 = vmatpush1.xpose.msra.mxu0 0.0
      %1280 = vmatprep.subr.mxu0 0.0
      %1281 = vmatpush1.xpose.msra.mxu0 0.0
      %1282 = vmatprep.subr.mxu0 0.0
      %1283 = vmatpush1.xpose.msra.mxu0 0.0
      %1284 = vmatprep.subr.mxu0 0.0
      %1285 = vmatpush1.xpose.msra.mxu0 0.0
      %1286 = vmatprep.subr.mxu0 0.0
      %1287 = vmatpush1.xpose.msra.mxu0 0.0
      %1288 = vmatprep.subr.mxu0 0.0
      %1289 = vmatpush1.xpose.msra.mxu0 0.0
      %1290 = vmatprep.subr.mxu0 0.0
      %1291 = vmatpush1.xpose.msra.mxu0 0.0
      %1292 = vmatprep.subr.mxu0 0.0
      %1293 = vmatpush1.xpose.msra.mxu0 0.0
      %1294 = vmatprep.mubr.f32.mxu0 0.0
      %1295 = vmatmul.mubr.f32.gmra.mrb[0].mxu0 %v1225
      %v1296 = vpop.f32.mrb[0].mxu0
      %v1297 = vadd.f32 0.0, %v1296
      %v1298 = vpop.f32.mrb[0].mxu0
      %1299 = vdwg.mxu0
      %vm1300 = vcmp.ge.f32.partialorder %v1297, 0.0
      %v1301 = vmul.f32 %v1297, 0.1
      %v1302 = vsel %vm1300, %v1297, %v1301
      %v1303 = vlaneseq
      %v1304 = vshrl.u32 %v1303, 7
      %v1305 = vsub.s32 0, %v1304
      %v1306 = vrot.slane %v1302, %v1305
      %v1307 = vsel %vm1056, %v1306, -1e+09
      %v1308 = vsel %vm513, %v1307, -inf
      %1309 = vmax.xlane.f32.xlu0 %v1308
      %v1310 = vpop.xlane.xlu0 %1309
      %v1311 = vsub.f32 %v1307, %v1310
      %v1312 = vmul.f32 %v1311, 1.442695
      %v1313 = vpow.pop %v1312
      %v1314 = vsel %vm513, %v1313, 0.0
      %1315 = vadd.xlane.f32.xlu0 %v1314
      %v1316 = vpop.xlane.xlu0 %1315
      %v1317 = vrcp.pop %v1316
      %v1318 = vmul.f32 %v1313, %v1317
      %v1320 = vsel %vm513, %v1318, 0
      %1322 = vmatprep.subr.mxu0 0.0
      %1323 = vmatpush1.msra.mxu0 %v1143
      %1324 = vmatprep.subr.mxu0 0.0
      %1325 = vmatpush1.msra.mxu0 0.0
      %1326 = vmatprep.subr.mxu0 0.0
      %1327 = vmatpush1.msra.mxu0 0.0
      %1328 = vmatprep.subr.mxu0 0.0
      %1329 = vmatpush1.msra.mxu0 0.0
      %1330 = vmatprep.subr.mxu0 0.0
      %1331 = vmatpush1.msra.mxu0 0.0
      %1332 = vmatprep.subr.mxu0 0.0
      %1333 = vmatpush1.msra.mxu0 0.0
      %1334 = vmatprep.subr.mxu0 0.0
      %1335 = vmatpush1.msra.mxu0 0.0
      %1336 = vmatprep.subr.mxu0 0.0
      %1337 = vmatpush1.msra.mxu0 0.0
      %1338 = vmatprep.subr.mxu0 0.0
      %1339 = vmatpush1.msra.mxu0 0.0
      %1340 = vmatprep.subr.mxu0 0.0
      %1341 = vmatpush1.msra.mxu0 0.0
      %1342 = vmatprep.subr.mxu0 0.0
      %1343 = vmatpush1.msra.mxu0 0.0
      %1344 = vmatprep.subr.mxu0 0.0
      %1345 = vmatpush1.msra.mxu0 0.0
      %1346 = vmatprep.subr.mxu0 0.0
      %1347 = vmatpush1.msra.mxu0 0.0
      %1348 = vmatprep.subr.mxu0 0.0
      %1349 = vmatpush1.msra.mxu0 0.0
      %1350 = vmatprep.subr.mxu0 0.0
      %1351 = vmatpush1.msra.mxu0 0.0
      %1352 = vmatprep.subr.mxu0 0.0
      %1353 = vmatpush1.msra.mxu0 0.0
      %1354 = vmatprep.subr.mxu0 0.0
      %1355 = vmatpush1.msra.mxu0 0.0
      %1356 = vmatprep.subr.mxu0 0.0
      %1357 = vmatpush1.msra.mxu0 0.0
      %1358 = vmatprep.subr.mxu0 0.0
      %1359 = vmatpush1.msra.mxu0 0.0
      %1360 = vmatprep.subr.mxu0 0.0
      %1361 = vmatpush1.msra.mxu0 0.0
      %1362 = vmatprep.subr.mxu0 0.0
      %1363 = vmatpush1.msra.mxu0 0.0
      %1364 = vmatprep.subr.mxu0 0.0
      %1365 = vmatpush1.msra.mxu0 0.0
      %1366 = vmatprep.subr.mxu0 0.0
      %1367 = vmatpush1.msra.mxu0 0.0
      %1368 = vmatprep.subr.mxu0 0.0
      %1369 = vmatpush1.msra.mxu0 0.0
      %1370 = vmatprep.subr.mxu0 0.0
      %1371 = vmatpush1.msra.mxu0 0.0
      %1372 = vmatprep.subr.mxu0 0.0
      %1373 = vmatpush1.msra.mxu0 0.0
      %1374 = vmatprep.subr.mxu0 0.0
      %1375 = vmatpush1.msra.mxu0 0.0
      %1376 = vmatprep.subr.mxu0 0.0
      %1377 = vmatpush1.msra.mxu0 0.0
      %1378 = vmatprep.subr.mxu0 0.0
      %1379 = vmatpush1.msra.mxu0 0.0
      %1380 = vmatprep.subr.mxu0 0.0
      %1381 = vmatpush1.msra.mxu0 0.0
      %1382 = vmatprep.subr.mxu0 0.0
      %1383 = vmatpush1.msra.mxu0 0.0
      %1384 = vmatprep.subr.mxu0 0.0
      %1385 = vmatpush1.msra.mxu0 0.0
      %1386 = vmatprep.mubr.f32.mxu0 0.0
      %1387 = vmatmul.mubr.f32.gmra.mrb[0].mxu0 %v1320
      %v1388 = vpop.f32.mrb[0].mxu0
      %v1389 = vadd.f32 0.0, %v1388
      %v1390 = vpop.f32.mrb[0].mxu0
      %1391 = vdwg.mxu0
      %vm1392 = vcmp.gt.f32.partialorder %v1389, 0.0
      %v1393 = vmin.f32 %v1389, 0.0
      %v1394 = vmul.f32 %v1393, 1.442695
      %v1395 = vpow.pop %v1394
      %v1396 = vsub.f32 %v1395, 1.0
      %v1397 = vsel %vm1392, %v1389, %v1396
      %1398 = vst.msk [vmem:[%s425] sm:$0xff] %vm432, %v1397
      %p1399 = scmp.lt.s32.totalorder %s23, 1
      %s1400 = scalar_select %p1399, %s23, 1
      %s1401 = smul.addr %s1400, 8
      %s1402 = scalar_lea.vmem %s12, %s1401
      // Predicated region
      $region69: #{eshgat_forward.6} parent=67 // pred_check
        %p1403 = pneg %p303
      $region70: #{eshgat_forward.6} parent=67 // pred_check_branch
        %1405 = sbr.rel (%p1403) target = $region72
      $region71: #{eshgat_forward.6} parent=67 // pred_region
        _
      $region72: #{eshgat_forward.6} parent=67 // pred_fallthru
        _
    $region68: #{eshgat_forward.6} parent=5 // pred_fallthru
      _
    %p1406 = scmp.le.s32.totalorder 2, %s18
    // Predicated region
    $region73: #{eshgat_forward.6} parent=5 // pred_check
      %p1407 = pneg %p1406
    $region74: #{eshgat_forward.6} parent=5 // pred_check_branch
      %1409 = sbr.rel (%p1407) target = $region76
    $region75: #{eshgat_forward.6} parent=5 // pred_region
      %s1410 = ssub.s32 %s18, 2
      // Predicated region
      $region77: #{eshgat_forward.6} parent=75 // pred_check
        %p1411 = pneg %p309
      $region78: #{eshgat_forward.6} parent=75 // pred_check_branch
        %1413 = sbr.rel (%p1411) target = $region80
      $region79: #{eshgat_forward.6} parent=75 // pred_region
        %p1414 = scmp.lt.s32.totalorder %s24, 1
        %s1415 = scalar_select %p1414, %s24, 1
        %s1416 = smul.addr %s1415, 8
        %s1417 = scalar_lea.vmem %s12, %s1416
      $region80: #{eshgat_forward.6} parent=75 // pred_fallthru
        _
    $region76: #{eshgat_forward.6} parent=5 // pred_fallthru
      _
  $region6: #{eshgat_forward.6} parent=0 // loop_footer
    %s22 = sadd.s32 1, %s18
  $region7: #{eshgat_forward.6} parent=0 // loop_footer_branch
    %17 = sbr.rel target = $region3
  $region8: #{eshgat_forward.6} parent=0 // loop_exit
    _

// kernel: eshgat_forward.4
$region0: #{eshgat_forward.4}
  #allocation0 [shape = 'u32[]', space=smem, size = 0x4, offset = 0x4, fixed_abs, tag = 'smem constant byte address 0x4 - core index']
  #allocation1 [shape = 'u32[144,128]{1,0:T(1,128)}', space=vmem, size = 0x12000, scoped, tag = 'internal scratch']
  %s0 = inlined_call_operand.vmem [shape: f32[16,32], index: 0, kind: input, shape index: {}]
  %s1 = inlined_call_operand.vmem [shape: f32[16,16], index: 1, kind: input, shape index: {}]
  %s2 = inlined_call_operand.vmem [shape: f32[1,32], index: 2, kind: input, shape index: {}]
  %s3 = inlined_call_operand.vmem [shape: f32[1,32], index: 3, kind: input, shape index: {}]
  %s4 = inlined_call_operand.vmem [shape: f32[32,96], index: 4, kind: input, shape index: {}]
  %s5 = inlined_call_operand.vmem [shape: f32[1,96], index: 5, kind: input, shape index: {}]
  %s6 = inlined_call_operand.vmem [shape: f32[32,32], index: 6, kind: input, shape index: {}]
  %s7 = inlined_call_operand.vmem [shape: f32[1,32], index: 7, kind: input, shape index: {}]
  %s8 = inlined_call_operand.vmem [shape: f32[1,32], index: 8, kind: input, shape index: {}]
  %s9 = inlined_call_operand.vmem [shape: f32[1,32], index: 9, kind: input, shape index: {}]
  %s10 = inlined_call_operand.vmem [shape: f32[32,128], index: 10, kind: input, shape index: {}]
  %s11 = inlined_call_operand.vmem [shape: f32[1,128], index: 11, kind: input, shape index: {}]
  %s12 = inlined_call_operand.vmem [shape: f32[128,32], index: 12, kind: input, shape index: {}]
  %s13 = inlined_call_operand.vmem [shape: f32[1,32], index: 13, kind: input, shape index: {}]
  %s14 = inlined_call_operand.vmem [shape: f32[1,32], index: 14, kind: input, shape index: {}]
  %s15 = inlined_call_operand.vmem [shape: f32[1,32], index: 15, kind: input, shape index: {}]
  %s16 = inlined_call_operand.vmem [shape: f32[16,32], index: 16, kind: output, shape index: {}]
  %s17 = sld [smem:[#allocation0]]
  $region74: #{eshgat_forward.4} parent=0
    _
  %s19 = ssub.s32 1, %s17
  %s20 = scalar_select 0, %s19, %s17
  // Predicated region
  $region2: #{eshgat_forward.4} parent=0 // pred_check
    _
  $region3: #{eshgat_forward.4} parent=0 // pred_check_branch
    %22 = sbr.rel (0) target = $region5
  $region4: #{eshgat_forward.4} parent=0 // pred_region
    _
  $region5: #{eshgat_forward.4} parent=0 // pred_fallthru
    _
  // Predicated region
  $region6: #{eshgat_forward.4} parent=0 // pred_check
    _
  $region7: #{eshgat_forward.4} parent=0 // pred_check_branch
    %24 = sbr.rel (0) target = $region9
  $region8: #{eshgat_forward.4} parent=0 // pred_region
    _
  $region9: #{eshgat_forward.4} parent=0 // pred_fallthru
    _
  // Predicated region
  $region10: #{eshgat_forward.4} parent=0 // pred_check
    _
  $region11: #{eshgat_forward.4} parent=0 // pred_check_branch
    %26 = sbr.rel (0) target = $region13
  $region12: #{eshgat_forward.4} parent=0 // pred_region
    _
  $region13: #{eshgat_forward.4} parent=0 // pred_fallthru
    _
  // Predicated region
  $region14: #{eshgat_forward.4} parent=0 // pred_check
    _
  $region15: #{eshgat_forward.4} parent=0 // pred_check_branch
    %28 = sbr.rel (0) target = $region17
  $region16: #{eshgat_forward.4} parent=0 // pred_region
    _
  $region17: #{eshgat_forward.4} parent=0 // pred_fallthru
    _
  // Predicated region
  $region18: #{eshgat_forward.4} parent=0 // pred_check
    _
  $region19: #{eshgat_forward.4} parent=0 // pred_check_branch
    %30 = sbr.rel (0) target = $region21
  $region20: #{eshgat_forward.4} parent=0 // pred_region
    _
  $region21: #{eshgat_forward.4} parent=0 // pred_fallthru
    _
  // Predicated region
  $region22: #{eshgat_forward.4} parent=0 // pred_check
    _
  $region23: #{eshgat_forward.4} parent=0 // pred_check_branch
    %32 = sbr.rel (0) target = $region25
  $region24: #{eshgat_forward.4} parent=0 // pred_region
    _
  $region25: #{eshgat_forward.4} parent=0 // pred_fallthru
    _
  // Predicated region
  $region26: #{eshgat_forward.4} parent=0 // pred_check
    _
  $region27: #{eshgat_forward.4} parent=0 // pred_check_branch
    %34 = sbr.rel (0) target = $region29
  $region28: #{eshgat_forward.4} parent=0 // pred_region
    _
  $region29: #{eshgat_forward.4} parent=0 // pred_fallthru
    _
  // Predicated region
  $region30: #{eshgat_forward.4} parent=0 // pred_check
    _
  $region31: #{eshgat_forward.4} parent=0 // pred_check_branch
    %36 = sbr.rel (0) target = $region33
  $region32: #{eshgat_forward.4} parent=0 // pred_region
    _
  $region33: #{eshgat_forward.4} parent=0 // pred_fallthru
    _
  // Predicated region
  $region34: #{eshgat_forward.4} parent=0 // pred_check
    _
  $region35: #{eshgat_forward.4} parent=0 // pred_check_branch
    %38 = sbr.rel (0) target = $region37
  $region36: #{eshgat_forward.4} parent=0 // pred_region
    _
  $region37: #{eshgat_forward.4} parent=0 // pred_fallthru
    _
  // Predicated region
  $region38: #{eshgat_forward.4} parent=0 // pred_check
    _
  $region39: #{eshgat_forward.4} parent=0 // pred_check_branch
    %40 = sbr.rel (0) target = $region41
  $region40: #{eshgat_forward.4} parent=0 // pred_region
    _
  $region41: #{eshgat_forward.4} parent=0 // pred_fallthru
    _
  // Predicated region
  $region42: #{eshgat_forward.4} parent=0 // pred_check
    _
  $region43: #{eshgat_forward.4} parent=0 // pred_check_branch
    %42 = sbr.rel (0) target = $region45
  $region44: #{eshgat_forward.4} parent=0 // pred_region
    _
  $region45: #{eshgat_forward.4} parent=0 // pred_fallthru
    _
  // Predicated region
  $region46: #{eshgat_forward.4} parent=0 // pred_check
    _
  $region47: #{eshgat_forward.4} parent=0 // pred_check_branch
    %44 = sbr.rel (0) target = $region49
  $region48: #{eshgat_forward.4} parent=0 // pred_region
    _
  $region49: #{eshgat_forward.4} parent=0 // pred_fallthru
    _
  // Predicated region
  $region50: #{eshgat_forward.4} parent=0 // pred_check
    _
  $region51: #{eshgat_forward.4} parent=0 // pred_check_branch
    %46 = sbr.rel (0) target = $region53
  $region52: #{eshgat_forward.4} parent=0 // pred_region
    _
  $region53: #{eshgat_forward.4} parent=0 // pred_fallthru
    _
  // Predicated region
  $region54: #{eshgat_forward.4} parent=0 // pred_check
    _
  $region55: #{eshgat_forward.4} parent=0 // pred_check_branch
    %48 = sbr.rel (0) target = $region57
  $region56: #{eshgat_forward.4} parent=0 // pred_region
    _
  $region57: #{eshgat_forward.4} parent=0 // pred_fallthru
    _
  // Predicated region
  $region58: #{eshgat_forward.4} parent=0 // pred_check
    _
  $region59: #{eshgat_forward.4} parent=0 // pred_check_branch
    %50 = sbr.rel (0) target = $region61
  $region60: #{eshgat_forward.4} parent=0 // pred_region
    _
  $region61: #{eshgat_forward.4} parent=0 // pred_fallthru
    _
  // Predicated region
  $region62: #{eshgat_forward.4} parent=0 // pred_check
    _
  $region63: #{eshgat_forward.4} parent=0 // pred_check_branch
    %52 = sbr.rel (0) target = $region65
  $region64: #{eshgat_forward.4} parent=0 // pred_region
    _
  $region65: #{eshgat_forward.4} parent=0 // pred_fallthru
    _
  %v53 = vld [vmem:[%s0] sm:$0xff]
  %v54 = vld [vmem:[%s0 + $0x8] sm:$0xff]
  %v55 = vld [vmem:[%s2] sm:$0x1]
  %v56 = vld [vmem:[%s3] sm:$0x1]
  %vm57 = vcmask 261120
  %v58 = vsel %vm57, %v53, 0.0
  %59 = vadd.xlane.f32.xlu0 %v58
  %v60 = vpop.xlane.xlu0 %59
  %v61 = vsel %vm57, %v54, 0.0
  %62 = vadd.xlane.f32.xlu0 %v61
  %v63 = vpop.xlane.xlu0 %62
  %v64 = vrcp.pop 32.0
  %v65 = vmul.f32 %v60, %v64
  %v66 = vmul.f32 %v63, %v64
  %v67 = vsub.f32 %v53, %v65
  %v68 = vsub.f32 %v54, %v66
  %v69 = vmul.f32 %v67, %v67
  %v70 = vmul.f32 %v68, %v68
  %v71 = vsel %vm57, %v69, 0.0
  %72 = vadd.xlane.f32.xlu0 %v71
  %v73 = vpop.xlane.xlu0 %72
  %v74 = vsel %vm57, %v70, 0.0
  %75 = vadd.xlane.f32.xlu0 %v74
  %v76 = vpop.xlane.xlu0 %75
  %v77 = vmul.f32 %v73, %v64
  %v78 = vmul.f32 %v76, %v64
  %v79 = vadd.f32 %v77, 1e-05
  %v80 = vadd.f32 %v78, 1e-05
  %v81 = vrsqrt.pop %v79
  %v82 = vrsqrt.pop %v80
  %v83 = vmul.f32 %v67, %v81
  %v84 = vmul.f32 %v68, %v82
  %v86 = vlaneseq
  %v87 = vshrl.u32 %v86, 7
  %v88 = vsub.s32 0, %v87
  %v89 = vrot.slane %v55, %v88
  %v91 = vmul.f32 %v83, %v89
  %v92 = vmul.f32 %v84, %v89
  %v94 = vlaneseq
  %v95 = vshrl.u32 %v94, 7
  %v96 = vsub.s32 0, %v95
  %v97 = vrot.slane %v56, %v96
  %v99 = vadd.f32 %v91, %v97
  %v100 = vadd.f32 %v92, %v97
  %v101 = vld [vmem:[%s4] sm:$0xff]
  %v102 = vld [vmem:[%s4 + $0x8] sm:$0xff]
  %v103 = vld [vmem:[%s4 + $0x10] sm:$0xff]
  %v104 = vld [vmem:[%s4 + $0x18] sm:$0xff]
  %v105 = vld [vmem:[%s5] sm:$0x1]
  %v107 = vlaneseq
  %v108 = vshrl.u32 %v107, 7
  %v109 = vsub.s32 0, %v108
  %v110 = vrot.slane %v105, %v109
  %v113 = vsel %vm57, %v99, 0
  %v116 = vsel %vm57, %v100, 0
  %118 = vmatprep.subr.mxu0 0.0
  %119 = vmatpush1.msra.mxu0 %v101
  %120 = vmatprep.subr.mxu0 0.0
  %121 = vmatpush1.msra.mxu0 %v102
  %122 = vmatprep.subr.mxu0 0.0
  %123 = vmatpush1.msra.mxu0 %v103
  %124 = vmatprep.subr.mxu0 0.0
  %125 = vmatpush1.msra.mxu0 %v104
  %126 = vmatprep.subr.mxu0 0.0
  %127 = vmatpush1.msra.mxu0 0.0
  %128 = vmatprep.subr.mxu0 0.0
  %129 = vmatpush1.msra.mxu0 0.0
  %130 = vmatprep.subr.mxu0 0.0
  %131 = vmatpush1.msra.mxu0 0.0
  %132 = vmatprep.subr.mxu0 0.0
  %133 = vmatpush1.msra.mxu0 0.0
  %134 = vmatprep.subr.mxu0 0.0
  %135 = vmatpush1.msra.mxu0 0.0
  %136 = vmatprep.subr.mxu0 0.0
  %137 = vmatpush1.msra.mxu0 0.0
  %138 = vmatprep.subr.mxu0 0.0
  %139 = vmatpush1.msra.mxu0 0.0
  %140 = vmatprep.subr.mxu0 0.0
  %141 = vmatpush1.msra.mxu0 0.0
  %142 = vmatprep.subr.mxu0 0.0
  %143 = vmatpush1.msra.mxu0 0.0
  %144 = vmatprep.subr.mxu0 0.0
  %145 = vmatpush1.msra.mxu0 0.0
  %146 = vmatprep.subr.mxu0 0.0
  %147 = vmatpush1.msra.mxu0 0.0
  %148 = vmatprep.subr.mxu0 0.0
  %149 = vmatpush1.msra.mxu0 0.0
  %150 = vmatprep.subr.mxu0 0.0
  %151 = vmatpush1.msra.mxu0 0.0
  %152 = vmatprep.subr.mxu0 0.0
  %153 = vmatpush1.msra.mxu0 0.0
  %154 = vmatprep.subr.mxu0 0.0
  %155 = vmatpush1.msra.mxu0 0.0
  %156 = vmatprep.subr.mxu0 0.0
  %157 = vmatpush1.msra.mxu0 0.0
  %158 = vmatprep.subr.mxu0 0.0
  %159 = vmatpush1.msra.mxu0 0.0
  %160 = vmatprep.subr.mxu0 0.0
  %161 = vmatpush1.msra.mxu0 0.0
  %162 = vmatprep.subr.mxu0 0.0
  %163 = vmatpush1.msra.mxu0 0.0
  %164 = vmatprep.subr.mxu0 0.0
  %165 = vmatpush1.msra.mxu0 0.0
  %166 = vmatprep.subr.mxu0 0.0
  %167 = vmatpush1.msra.mxu0 0.0
  %168 = vmatprep.subr.mxu0 0.0
  %169 = vmatpush1.msra.mxu0 0.0
  %170 = vmatprep.subr.mxu0 0.0
  %171 = vmatpush1.msra.mxu0 0.0
  %172 = vmatprep.subr.mxu0 0.0
  %173 = vmatpush1.msra.mxu0 0.0
  %174 = vmatprep.subr.mxu0 0.0
  %175 = vmatpush1.msra.mxu0 0.0
  %176 = vmatprep.subr.mxu0 0.0
  %177 = vmatpush1.msra.mxu0 0.0
  %178 = vmatprep.subr.mxu0 0.0
  %179 = vmatpush1.msra.mxu0 0.0
  %180 = vmatprep.subr.mxu0 0.0
  %181 = vmatpush1.msra.mxu0 0.0
  %182 = vmatprep.mubr.f32.mxu0 0.0
  %183 = vmatmul.mubr.f32.gmra.mrb[0].mxu0 %v113
  %v184 = vpop.f32.mrb[0].mxu0
  %v185 = vadd.f32 %v110, %v184
  %v186 = vpop.f32.mrb[0].mxu0
  %187 = vmatprep.mubr.f32.mxu0 0.0
  %188 = vmatmul.mubr.f32.gmra.mrb[0].mxu0 %v116
  %v189 = vpop.f32.mrb[0].mxu0
  %v190 = vadd.f32 %v110, %v189
  %v191 = vpop.f32.mrb[0].mxu0
  %192 = vdwg.mxu0
  %195 = vrot.lane.b32.xlu0 %v185, 96
  %v196 = vpop.permute.xlu0 %195
  %197 = vrot.lane.b32.xlu0 %v190, 96
  %v198 = vpop.permute.xlu0 %197
  %v199 = vsel %vm57, %v185, 0
  %v201 = vsel %vm57, %v190, 0
  %v203 = vsel %vm57, %v196, 0
  %v205 = vsel %vm57, %v198, 0
  %207 = vmatprep.subr.mxu0 0.0
  %208 = vmatpush1.xpose.msra.mxu0 %v203
  %209 = vmatprep.subr.mxu0 0.0
  %210 = vmatpush1.xpose.msra.mxu0 %v205
  %211 = vmatprep.subr.mxu0 0.0
  %212 = vmatpush1.xpose.msra.mxu0 0.0
  %213 = vmatprep.subr.mxu0 0.0
  %214 = vmatpush1.xpose.msra.mxu0 0.0
  %215 = vmatprep.subr.mxu0 0.0
  %216 = vmatpush1.xpose.msra.mxu0 0.0
  %217 = vmatprep.subr.mxu0 0.0
  %218 = vmatpush1.xpose.msra.mxu0 0.0
  %219 = vmatprep.subr.mxu0 0.0
  %220 = vmatpush1.xpose.msra.mxu0 0.0
  %221 = vmatprep.subr.mxu0 0.0
  %222 = vmatpush1.xpose.msra.mxu0 0.0
  %223 = vmatprep.subr.mxu0 0.0
  %224 = vmatpush1.xpose.msra.mxu0 0.0
  %225 = vmatprep.subr.mxu0 0.0
  %226 = vmatpush1.xpose.msra.mxu0 0.0
  %227 = vmatprep.subr.mxu0 0.0
  %228 = vmatpush1.xpose.msra.mxu0 0.0
  %229 = vmatprep.subr.mxu0 0.0
  %230 = vmatpush1.xpose.msra.mxu0 0.0
  %231 = vmatprep.subr.mxu0 0.0
  %232 = vmatpush1.xpose.msra.mxu0 0.0
  %233 = vmatprep.subr.mxu0 0.0
  %234 = vmatpush1.xpose.msra.mxu0 0.0
  %235 = vmatprep.subr.mxu0 0.0
  %236 = vmatpush1.xpose.msra.mxu0 0.0
  %237 = vmatprep.subr.mxu0 0.0
  %238 = vmatpush1.xpose.msra.mxu0 0.0
  %239 = vmatprep.subr.mxu0 0.0
  %240 = vmatpush1.xpose.msra.mxu0 0.0
  %241 = vmatprep.subr.mxu0 0.0
  %242 = vmatpush1.xpose.msra.mxu0 0.0
  %243 = vmatprep.subr.mxu0 0.0
  %244 = vmatpush1.xpose.msra.mxu0 0.0
  %245 = vmatprep.subr.mxu0 0.0
  %246 = vmatpush1.xpose.msra.mxu0 0.0
  %247 = vmatprep.subr.mxu0 0.0
  %248 = vmatpush1.xpose.msra.mxu0 0.0
  %249 = vmatprep.subr.mxu0 0.0
  %250 = vmatpush1.xpose.msra.mxu0 0.0
  %251 = vmatprep.subr.mxu0 0.0
  %252 = vmatpush1.xpose.msra.mxu0 0.0
  %253 = vmatprep.subr.mxu0 0.0
  %254 = vmatpush1.xpose.msra.mxu0 0.0
  %255 = vmatprep.subr.mxu0 0.0
  %256 = vmatpush1.xpose.msra.mxu0 0.0
  %257 = vmatprep.subr.mxu0 0.0
  %258 = vmatpush1.xpose.msra.mxu0 0.0
  %259 = vmatprep.subr.mxu0 0.0
  %260 = vmatpush1.xpose.msra.mxu0 0.0
  %261 = vmatprep.subr.mxu0 0.0
  %262 = vmatpush1.xpose.msra.mxu0 0.0
  %263 = vmatprep.subr.mxu0 0.0
  %264 = vmatpush1.xpose.msra.mxu0 0.0
  %265 = vmatprep.subr.mxu0 0.0
  %266 = vmatpush1.xpose.msra.mxu0 0.0
  %267 = vmatprep.subr.mxu0 0.0
  %268 = vmatpush1.xpose.msra.mxu0 0.0
  %269 = vmatprep.subr.mxu0 0.0
  %270 = vmatpush1.xpose.msra.mxu0 0.0
  %271 = vmatprep.mubr.f32.mxu0 0.0
  %272 = vmatmul.mubr.f32.gmra.mrb[0].mxu0 %v199
  %v273 = vpop.f32.mrb[0].mxu0
  %v274 = vadd.f32 0.0, %v273
  %v275 = vpop.f32.mrb[0].mxu0
  %276 = vmatprep.mubr.f32.mxu0 0.0
  %277 = vmatmul.mubr.f32.gmra.mrb[0].mxu0 %v201
  %v278 = vpop.f32.mrb[0].mxu0
  %v279 = vadd.f32 0.0, %v278
  %v280 = vpop.f32.mrb[0].mxu0
  %281 = vdwg.mxu0
  %v282 = vmul.f32 %v274, 0.17677669
  %v283 = vmul.f32 %v279, 0.17677669
  %v284 = vld [vmem:[%s1] sm:$0xff]
  %v285 = vld [vmem:[%s1 + $0x8] sm:$0xff]
  %v286 = vadd.f32 %v282, %v284
  %v287 = vadd.f32 %v283, %v285
  %vm288 = vcmask 130048
  %v289 = vsel %vm288, %v286, -inf
  %290 = vmax.xlane.f32.xlu0 %v289
  %v291 = vpop.xlane.xlu0 %290
  %v292 = vsel %vm288, %v287, -inf
  %293 = vmax.xlane.f32.xlu0 %v292
  %v294 = vpop.xlane.xlu0 %293
  %v295 = vsub.f32 %v286, %v291
  %v296 = vsub.f32 %v287, %v294
  %v297 = vmul.f32 %v295, 1.442695
  %v298 = vpow.pop %v297
  %v299 = vmul.f32 %v296, 1.442695
  %v300 = vpow.pop %v299
  %v301 = vsel %vm288, %v298, 0.0
  %302 = vadd.xlane.f32.xlu0 %v301
  %v303 = vpop.xlane.xlu0 %302
  %v304 = vsel %vm288, %v300, 0.0
  %305 = vadd.xlane.f32.xlu0 %v304
  %v306 = vpop.xlane.xlu0 %305
  %v307 = vrcp.pop %v303
  %v308 = vrcp.pop %v306
  %v309 = vmul.f32 %v298, %v307
  %v310 = vmul.f32 %v300, %v308
  %311 = vrot.lane.b32.xlu0 %v185, 64
  %v312 = vpop.permute.xlu0 %311
  %313 = vrot.lane.b32.xlu0 %v190, 64
  %v314 = vpop.permute.xlu0 %313
  %v318 = vsel %vm288, %v309, 0
  %v321 = vsel %vm288, %v310, 0
  %323 = vmatprep.subr.mxu0 0.0
  %324 = vmatpush1.msra.mxu0 %v312
  %325 = vmatprep.subr.mxu0 0.0
  %326 = vmatpush1.msra.mxu0 %v314
  %327 = vmatprep.subr.mxu0 0.0
  %328 = vmatpush1.msra.mxu0 0.0
  %329 = vmatprep.subr.mxu0 0.0
  %330 = vmatpush1.msra.mxu0 0.0
  %331 = vmatprep.subr.mxu0 0.0
  %332 = vmatpush1.msra.mxu0 0.0
  %333 = vmatprep.subr.mxu0 0.0
  %334 = vmatpush1.msra.mxu0 0.0
  %335 = vmatprep.subr.mxu0 0.0
  %336 = vmatpush1.msra.mxu0 0.0
  %337 = vmatprep.subr.mxu0 0.0
  %338 = vmatpush1.msra.mxu0 0.0
  %339 = vmatprep.subr.mxu0 0.0
  %340 = vmatpush1.msra.mxu0 0.0
  %341 = vmatprep.subr.mxu0 0.0
  %342 = vmatpush1.msra.mxu0 0.0
  %343 = vmatprep.subr.mxu0 0.0
  %344 = vmatpush1.msra.mxu0 0.0
  %345 = vmatprep.subr.mxu0 0.0
  %346 = vmatpush1.msra.mxu0 0.0
  %347 = vmatprep.subr.mxu0 0.0
  %348 = vmatpush1.msra.mxu0 0.0
  %349 = vmatprep.subr.mxu0 0.0
  %350 = vmatpush1.msra.mxu0 0.0
  %351 = vmatprep.subr.mxu0 0.0
  %352 = vmatpush1.msra.mxu0 0.0
  %353 = vmatprep.subr.mxu0 0.0
  %354 = vmatpush1.msra.mxu0 0.0
  %355 = vmatprep.subr.mxu0 0.0
  %356 = vmatpush1.msra.mxu0 0.0
  %357 = vmatprep.subr.mxu0 0.0
  %358 = vmatpush1.msra.mxu0 0.0
  %359 = vmatprep.subr.mxu0 0.0
  %360 = vmatpush1.msra.mxu0 0.0
  %361 = vmatprep.subr.mxu0 0.0
  %362 = vmatpush1.msra.mxu0 0.0
  %363 = vmatprep.subr.mxu0 0.0
  %364 = vmatpush1.msra.mxu0 0.0
  %365 = vmatprep.subr.mxu0 0.0
  %366 = vmatpush1.msra.mxu0 0.0
  %367 = vmatprep.subr.mxu0 0.0
  %368 = vmatpush1.msra.mxu0 0.0
  %369 = vmatprep.subr.mxu0 0.0
  %370 = vmatpush1.msra.mxu0 0.0
  %371 = vmatprep.subr.mxu0 0.0
  %372 = vmatpush1.msra.mxu0 0.0
  %373 = vmatprep.subr.mxu0 0.0
  %374 = vmatpush1.msra.mxu0 0.0
  %375 = vmatprep.subr.mxu0 0.0
  %376 = vmatpush1.msra.mxu0 0.0
  %377 = vmatprep.subr.mxu0 0.0
  %378 = vmatpush1.msra.mxu0 0.0
  %379 = vmatprep.subr.mxu0 0.0
  %380 = vmatpush1.msra.mxu0 0.0
  %381 = vmatprep.subr.mxu0 0.0
  %382 = vmatpush1.msra.mxu0 0.0
  %383 = vmatprep.subr.mxu0 0.0
  %384 = vmatpush1.msra.mxu0 0.0
  %385 = vmatprep.subr.mxu0 0.0
  %386 = vmatpush1.msra.mxu0 0.0
  %387 = vmatprep.mubr.f32.mxu0 0.0
  %388 = vmatmul.mubr.f32.gmra.mrb[0].mxu0 %v318
  %v389 = vpop.f32.mrb[0].mxu0
  %v390 = vadd.f32 0.0, %v389
  %v391 = vpop.f32.mrb[0].mxu0
  %392 = vmatprep.mubr.f32.mxu0 0.0
  %393 = vmatmul.mubr.f32.gmra.mrb[0].mxu0 %v321
  %v394 = vpop.f32.mrb[0].mxu0
  %v395 = vadd.f32 0.0, %v394
  %v396 = vpop.f32.mrb[0].mxu0
  %397 = vdwg.mxu0
  %v398 = vld [vmem:[%s6] sm:$0xff]
  %v399 = vld [vmem:[%s6 + $0x8] sm:$0xff]
  %v400 = vld [vmem:[%s6 + $0x10] sm:$0xff]
  %v401 = vld [vmem:[%s6 + $0x18] sm:$0xff]
  %v403 = vsel %vm57, %v390, 0
  %v406 = vsel %vm57, %v395, 0
  %408 = vmatprep.subr.mxu0 0.0
  %409 = vmatpush1.msra.mxu0 %v398
  %410 = vmatprep.subr.mxu0 0.0
  %411 = vmatpush1.msra.mxu0 %v399
  %412 = vmatprep.subr.mxu0 0.0
  %413 = vmatpush1.msra.mxu0 %v400
  %414 = vmatprep.subr.mxu0 0.0
  %415 = vmatpush1.msra.mxu0 %v401
  %416 = vmatprep.subr.mxu0 0.0
  %417 = vmatpush1.msra.mxu0 0.0
  %418 = vmatprep.subr.mxu0 0.0
  %419 = vmatpush1.msra.mxu0 0.0
  %420 = vmatprep.subr.mxu0 0.0
  %421 = vmatpush1.msra.mxu0 0.0
  %422 = vmatprep.subr.mxu0 0.0
  %423 = vmatpush1.msra.mxu0 0.0
  %424 = vmatprep.subr.mxu0 0.0
  %425 = vmatpush1.msra.mxu0 0.0
  %426 = vmatprep.subr.mxu0 0.0
  %427 = vmatpush1.msra.mxu0 0.0
  %428 = vmatprep.subr.mxu0 0.0
  %429 = vmatpush1.msra.mxu0 0.0
  %430 = vmatprep.subr.mxu0 0.0
  %431 = vmatpush1.msra.mxu0 0.0
  %432 = vmatprep.subr.mxu0 0.0
  %433 = vmatpush1.msra.mxu0 0.0
  %434 = vmatprep.subr.mxu0 0.0
  %435 = vmatpush1.msra.mxu0 0.0
  %436 = vmatprep.subr.mxu0 0.0
  %437 = vmatpush1.msra.mxu0 0.0
  %438 = vmatprep.subr.mxu0 0.0
  %439 = vmatpush1.msra.mxu0 0.0
  %440 = vmatprep.subr.mxu0 0.0
  %441 = vmatpush1.msra.mxu0 0.0
  %442 = vmatprep.subr.mxu0 0.0
  %443 = vmatpush1.msra.mxu0 0.0
  %444 = vmatprep.subr.mxu0 0.0
  %445 = vmatpush1.msra.mxu0 0.0
  %446 = vmatprep.subr.mxu0 0.0
  %447 = vmatpush1.msra.mxu0 0.0
  %448 = vmatprep.subr.mxu0 0.0
  %449 = vmatpush1.msra.mxu0 0.0
  %450 = vmatprep.subr.mxu0 0.0
  %451 = vmatpush1.msra.mxu0 0.0
  %452 = vmatprep.subr.mxu0 0.0
  %453 = vmatpush1.msra.mxu0 0.0
  %454 = vmatprep.subr.mxu0 0.0
  %455 = vmatpush1.msra.mxu0 0.0
  %456 = vmatprep.subr.mxu0 0.0
  %457 = vmatpush1.msra.mxu0 0.0
  %458 = vmatprep.subr.mxu0 0.0
  %459 = vmatpush1.msra.mxu0 0.0
  %460 = vmatprep.subr.mxu0 0.0
  %461 = vmatpush1.msra.mxu0 0.0
  %462 = vmatprep.subr.mxu0 0.0
  %463 = vmatpush1.msra.mxu0 0.0
  %464 = vmatprep.subr.mxu0 0.0
  %465 = vmatpush1.msra.mxu0 0.0
  %466 = vmatprep.subr.mxu0 0.0
  %467 = vmatpush1.msra.mxu0 0.0
  %468 = vmatprep.subr.mxu0 0.0
  %469 = vmatpush1.msra.mxu0 0.0
  %470 = vmatprep.subr.mxu0 0.0
  %471 = vmatpush1.msra.mxu0 0.0
  %472 = vmatprep.mubr.f32.mxu0 0.0
  %473 = vmatmul.mubr.f32.gmra.mrb[0].mxu0 %v403
  %v474 = vpop.f32.mrb[0].mxu0
  %v475 = vadd.f32 0.0, %v474
  %v476 = vpop.f32.mrb[0].mxu0
  %477 = vmatprep.mubr.f32.mxu0 0.0
  %478 = vmatmul.mubr.f32.gmra.mrb[0].mxu0 %v406
  %v479 = vpop.f32.mrb[0].mxu0
  %v480 = vadd.f32 0.0, %v479
  %v481 = vpop.f32.mrb[0].mxu0
  %482 = vdwg.mxu0
  %v483 = vadd.f32 %v99, %v475
  %v484 = vadd.f32 %v100, %v480
  %v485 = vld [vmem:[%s7] sm:$0x1]
  %v487 = vlaneseq
  %v488 = vshrl.u32 %v487, 7
  %v489 = vsub.s32 0, %v488
  %v490 = vrot.slane %v485, %v489
  %v492 = vadd.f32 %v483, %v490
  %v493 = vadd.f32 %v484, %v490
  %v494 = vld [vmem:[%s8] sm:$0x1]
  %v495 = vld [vmem:[%s9] sm:$0x1]
  %v496 = vsel %vm57, %v492, 0.0
  %497 = vadd.xlane.f32.xlu0 %v496
  %v498 = vpop.xlane.xlu0 %497
  %v499 = vsel %vm57, %v493, 0.0
  %500 = vadd.xlane.f32.xlu0 %v499
  %v501 = vpop.xlane.xlu0 %500
  %v502 = vmul.f32 %v498, %v64
  %v503 = vmul.f32 %v501, %v64
  %v504 = vsub.f32 %v492, %v502
  %v505 = vsub.f32 %v493, %v503
  %v506 = vmul.f32 %v504, %v504
  %v507 = vmul.f32 %v505, %v505
  %v508 = vsel %vm57, %v506, 0.0
  %509 = vadd.xlane.f32.xlu0 %v508
  %v510 = vpop.xlane.xlu0 %509
  %v511 = vsel %vm57, %v507, 0.0
  %512 = vadd.xlane.f32.xlu0 %v511
  %v513 = vpop.xlane.xlu0 %512
  %v514 = vmul.f32 %v510, %v64
  %v515 = vmul.f32 %v513, %v64
  %v516 = vadd.f32 %v514, 1e-05
  %v517 = vadd.f32 %v515, 1e-05
  %v518 = vrsqrt.pop %v516
  %v519 = vrsqrt.pop %v517
  %v520 = vmul.f32 %v504, %v518
  %v521 = vmul.f32 %v505, %v519
  %v523 = vlaneseq
  %v524 = vshrl.u32 %v523, 7
  %v525 = vsub.s32 0, %v524
  %v526 = vrot.slane %v494, %v525
  %v528 = vmul.f32 %v520, %v526
  %v529 = vmul.f32 %v521, %v526
  %v531 = vlaneseq
  %v532 = vshrl.u32 %v531, 7
  %v533 = vsub.s32 0, %v532
  %v534 = vrot.slane %v495, %v533
  %v536 = vadd.f32 %v528, %v534
  %v537 = vadd.f32 %v529, %v534
  %v538 = vld [vmem:[%s10] sm:$0xff]
  %v539 = vld [vmem:[%s10 + $0x8] sm:$0xff]
  %v540 = vld [vmem:[%s10 + $0x10] sm:$0xff]
  %v541 = vld [vmem:[%s10 + $0x18] sm:$0xff]
  %v542 = vld [vmem:[%s11] sm:$0x1]
  %v544 = vlaneseq
  %v545 = vshrl.u32 %v544, 7
  %v546 = vsub.s32 0, %v545
  %v547 = vrot.slane %v542, %v546
  %v550 = vsel %vm57, %v536, 0
  %v553 = vsel %vm57, %v537, 0
  %555 = vmatprep.subr.mxu0 0.0
  %556 = vmatpush1.msra.mxu0 %v538
  %557 = vmatprep.subr.mxu0 0.0
  %558 = vmatpush1.msra.mxu0 %v539
  %559 = vmatprep.subr.mxu0 0.0
  %560 = vmatpush1.msra.mxu0 %v540
  %561 = vmatprep.subr.mxu0 0.0
  %562 = vmatpush1.msra.mxu0 %v541
  %563 = vmatprep.subr.mxu0 0.0
  %564 = vmatpush1.msra.mxu0 0.0
  %565 = vmatprep.subr.mxu0 0.0
  %566 = vmatpush1.msra.mxu0 0.0
  %567 = vmatprep.subr.mxu0 0.0
  %568 = vmatpush1.msra.mxu0 0.0
  %569 = vmatprep.subr.mxu0 0.0
  %570 = vmatpush1.msra.mxu0 0.0
  %571 = vmatprep.subr.mxu0 0.0
  %572 = vmatpush1.msra.mxu0 0.0
  %573 = vmatprep.subr.mxu0 0.0
  %574 = vmatpush1.msra.mxu0 0.0
  %575 = vmatprep.subr.mxu0 0.0
  %576 = vmatpush1.msra.mxu0 0.0
  %577 = vmatprep.subr.mxu0 0.0
  %578 = vmatpush1.msra.mxu0 0.0
  %579 = vmatprep.subr.mxu0 0.0
  %580 = vmatpush1.msra.mxu0 0.0
  %581 = vmatprep.subr.mxu0 0.0
  %582 = vmatpush1.msra.mxu0 0.0
  %583 = vmatprep.subr.mxu0 0.0
  %584 = vmatpush1.msra.mxu0 0.0
  %585 = vmatprep.subr.mxu0 0.0
  %586 = vmatpush1.msra.mxu0 0.0
  %587 = vmatprep.subr.mxu0 0.0
  %588 = vmatpush1.msra.mxu0 0.0
  %589 = vmatprep.subr.mxu0 0.0
  %590 = vmatpush1.msra.mxu0 0.0
  %591 = vmatprep.subr.mxu0 0.0
  %592 = vmatpush1.msra.mxu0 0.0
  %593 = vmatprep.subr.mxu0 0.0
  %594 = vmatpush1.msra.mxu0 0.0
  %595 = vmatprep.subr.mxu0 0.0
  %596 = vmatpush1.msra.mxu0 0.0
  %597 = vmatprep.subr.mxu0 0.0
  %598 = vmatpush1.msra.mxu0 0.0
  %599 = vmatprep.subr.mxu0 0.0
  %600 = vmatpush1.msra.mxu0 0.0
  %601 = vmatprep.subr.mxu0 0.0
  %602 = vmatpush1.msra.mxu0 0.0
  %603 = vmatprep.subr.mxu0 0.0
  %604 = vmatpush1.msra.mxu0 0.0
  %605 = vmatprep.subr.mxu0 0.0
  %606 = vmatpush1.msra.mxu0 0.0
  %607 = vmatprep.subr.mxu0 0.0
  %608 = vmatpush1.msra.mxu0 0.0
  %609 = vmatprep.subr.mxu0 0.0
  %610 = vmatpush1.msra.mxu0 0.0
  %611 = vmatprep.subr.mxu0 0.0
  %612 = vmatpush1.msra.mxu0 0.0
  %613 = vmatprep.subr.mxu0 0.0
  %614 = vmatpush1.msra.mxu0 0.0
  %615 = vmatprep.subr.mxu0 0.0
  %616 = vmatpush1.msra.mxu0 0.0
  %617 = vmatprep.subr.mxu0 0.0
  %618 = vmatpush1.msra.mxu0 0.0
  %619 = vmatprep.mubr.f32.mxu0 0.0
  %620 = vmatmul.mubr.f32.gmra.mrb[0].mxu0 %v550
  %v621 = vpop.f32.mrb[0].mxu0
  %v622 = vadd.f32 %v547, %v621
  %v623 = vpop.f32.mrb[0].mxu0
  %624 = vmatprep.mubr.f32.mxu0 0.0
  %625 = vmatmul.mubr.f32.gmra.mrb[0].mxu0 %v553
  %v626 = vpop.f32.mrb[0].mxu0
  %v627 = vadd.f32 %v547, %v626
  %v628 = vpop.f32.mrb[0].mxu0
  %629 = vdwg.mxu0
  %v630 = vmax.f32 %v622, 0.0
  %v631 = vmax.f32 %v627, 0.0
  %v632 = vld [vmem:[%s12] sm:$0xff]
  %v633 = vld [vmem:[%s12 + $0x8] sm:$0xff]
  %v634 = vld [vmem:[%s12 + $0x10] sm:$0xff]
  %v635 = vld [vmem:[%s12 + $0x18] sm:$0xff]
  %v636 = vld [vmem:[%s12 + $0x20] sm:$0xff]
  %v637 = vld [vmem:[%s12 + $0x28] sm:$0xff]
  %v638 = vld [vmem:[%s12 + $0x30] sm:$0xff]
  %v639 = vld [vmem:[%s12 + $0x38] sm:$0xff]
  %v640 = vld [vmem:[%s12 + $0x40] sm:$0xff]
  %v641 = vld [vmem:[%s12 + $0x48] sm:$0xff]
  %v642 = vld [vmem:[%s12 + $0x50] sm:$0xff]
  %v643 = vld [vmem:[%s12 + $0x58] sm:$0xff]
  %v644 = vld [vmem:[%s12 + $0x60] sm:$0xff]
  %v645 = vld [vmem:[%s12 + $0x68] sm:$0xff]
  %v646 = vld [vmem:[%s12 + $0x70] sm:$0xff]
  %v647 = vld [vmem:[%s12 + $0x78] sm:$0xff]
  %v648 = vld [vmem:[%s13] sm:$0x1]
  %v650 = vlaneseq
  %v651 = vshrl.u32 %v650, 7
  %v652 = vsub.s32 0, %v651
  %v653 = vrot.slane %v648, %v652
  %655 = vmatprep.subr.mxu0 0.0
  %656 = vmatpush1.msra.mxu0 %v632
  %657 = vmatprep.subr.mxu0 0.0
  %658 = vmatpush1.msra.mxu0 %v633
  %659 = vmatprep.subr.mxu0 0.0
  %660 = vmatpush1.msra.mxu0 %v634
  %661 = vmatprep.subr.mxu0 0.0
  %662 = vmatpush1.msra.mxu0 %v635
  %663 = vmatprep.subr.mxu0 0.0
  %664 = vmatpush1.msra.mxu0 %v636
  %665 = vmatprep.subr.mxu0 0.0
  %666 = vmatpush1.msra.mxu0 %v637
  %667 = vmatprep.subr.mxu0 0.0
  %668 = vmatpush1.msra.mxu0 %v638
  %669 = vmatprep.subr.mxu0 0.0
  %670 = vmatpush1.msra.mxu0 %v639
  %671 = vmatprep.subr.mxu0 0.0
  %672 = vmatpush1.msra.mxu0 %v640
  %673 = vmatprep.subr.mxu0 0.0
  %674 = vmatpush1.msra.mxu0 %v641
  %675 = vmatprep.subr.mxu0 0.0
  %676 = vmatpush1.msra.mxu0 %v642
  %677 = vmatprep.subr.mxu0 0.0
  %678 = vmatpush1.msra.mxu0 %v643
  %679 = vmatprep.subr.mxu0 0.0
  %680 = vmatpush1.msra.mxu0 %v644
  %681 = vmatprep.subr.mxu0 0.0
  %682 = vmatpush1.msra.mxu0 %v645
  %683 = vmatprep.subr.mxu0 0.0
  %684 = vmatpush1.msra.mxu0 %v646
  %685 = vmatprep.subr.mxu0 0.0
  %686 = vmatpush1.msra.mxu0 %v647
  %687 = vmatprep.subr.mxu0 0.0
  %688 = vmatpush1.msra.mxu0 0.0
  %689 = vmatprep.subr.mxu0 0.0
  %690 = vmatpush1.msra.mxu0 0.0
  %691 = vmatprep.subr.mxu0 0.0
  %692 = vmatpush1.msra.mxu0 0.0
  %693 = vmatprep.subr.mxu0 0.0
  %694 = vmatpush1.msra.mxu0 0.0
  %695 = vmatprep.subr.mxu0 0.0
  %696 = vmatpush1.msra.mxu0 0.0
  %697 = vmatprep.subr.mxu0 0.0
  %698 = vmatpush1.msra.mxu0 0.0
  %699 = vmatprep.subr.mxu0 0.0
  %700 = vmatpush1.msra.mxu0 0.0
  %701 = vmatprep.subr.mxu0 0.0
  %702 = vmatpush1.msra.mxu0 0.0
  %703 = vmatprep.subr.mxu0 0.0
  %704 = vmatpush1.msra.mxu0 0.0
  %705 = vmatprep.subr.mxu0 0.0
  %706 = vmatpush1.msra.mxu0 0.0
  %707 = vmatprep.subr.mxu0 0.0
  %708 = vmatpush1.msra.mxu0 0.0
  %709 = vmatprep.subr.mxu0 0.0
  %710 = vmatpush1.msra.mxu0 0.0
  %711 = vmatprep.subr.mxu0 0.0
  %712 = vmatpush1.msra.mxu0 0.0
  %713 = vmatprep.subr.mxu0 0.0
  %714 = vmatpush1.msra.mxu0 0.0
  %715 = vmatprep.subr.mxu0 0.0
  %716 = vmatpush1.msra.mxu0 0.0
  %717 = vmatprep.subr.mxu0 0.0
  %718 = vmatpush1.msra.mxu0 0.0
  %719 = vmatprep.mubr.f32.mxu0 0.0
  %720 = vmatmul.mubr.f32.gmra.mrb[0].mxu0 %v630
  %v721 = vpop.f32.mrb[0].mxu0
  %v722 = vadd.f32 %v653, %v721
  %v723 = vpop.f32.mrb[0].mxu0
  %724 = vmatprep.mubr.f32.mxu0 0.0
  %725 = vmatmul.mubr.f32.gmra.mrb[0].mxu0 %v631
  %v726 = vpop.f32.mrb[0].mxu0
  %v727 = vadd.f32 %v653, %v726
  %v728 = vpop.f32.mrb[0].mxu0
  %729 = vdwg.mxu0
  %v730 = vadd.f32 %v536, %v722
  %v731 = vadd.f32 %v537, %v727
  %v732 = vld [vmem:[%s14] sm:$0x1]
  %v733 = vld [vmem:[%s15] sm:$0x1]
  %v734 = vsel %vm57, %v730, 0.0
  %735 = vadd.xlane.f32.xlu0 %v734
  %v736 = vpop.xlane.xlu0 %735
  %v737 = vsel %vm57, %v731, 0.0
  %738 = vadd.xlane.f32.xlu0 %v737
  %v739 = vpop.xlane.xlu0 %738
  %v740 = vmul.f32 %v736, %v64
  %v741 = vmul.f32 %v739, %v64
  %v742 = vsub.f32 %v730, %v740
  %v743 = vsub.f32 %v731, %v741
  %v744 = vmul.f32 %v742, %v742
  %v745 = vmul.f32 %v743, %v743
  %v746 = vsel %vm57, %v744, 0.0
  %747 = vadd.xlane.f32.xlu0 %v746
  %v748 = vpop.xlane.xlu0 %747
  %v749 = vsel %vm57, %v745, 0.0
  %750 = vadd.xlane.f32.xlu0 %v749
  %v751 = vpop.xlane.xlu0 %750
  %v752 = vmul.f32 %v748, %v64
  %v753 = vmul.f32 %v751, %v64
  %v754 = vadd.f32 %v752, 1e-05
  %v755 = vadd.f32 %v753, 1e-05
  %v756 = vrsqrt.pop %v754
  %v757 = vrsqrt.pop %v755
  %v758 = vmul.f32 %v742, %v756
  %v759 = vmul.f32 %v743, %v757
  %v761 = vlaneseq
  %v762 = vshrl.u32 %v761, 7
  %v763 = vsub.s32 0, %v762
  %v764 = vrot.slane %v732, %v763
  %v766 = vmul.f32 %v758, %v764
  %v767 = vmul.f32 %v759, %v764
  %v769 = vlaneseq
  %v770 = vshrl.u32 %v769, 7
  %v771 = vsub.s32 0, %v770
  %v772 = vrot.slane %v733, %v771
  %v774 = vadd.f32 %v766, %v772
  %v775 = vadd.f32 %v767, %v772
  %776 = vst.msk [vmem:[%s16] sm:$0xff] %vm57, %v774
  %777 = vst.msk [vmem:[%s16 + $0x8] sm:$0xff] %vm57, %v775
  // Predicated region
  $region66: #{eshgat_forward.4} parent=0 // pred_check
    _
  $region67: #{eshgat_forward.4} parent=0 // pred_check_branch
    %779 = sbr.rel (0) target = $region69
  $region68: #{eshgat_forward.4} parent=0 // pred_region
    _
  $region69: #{eshgat_forward.4} parent=0 // pred_fallthru
    _
  // Predicated region
  $region70: #{eshgat_forward.4} parent=0 // pred_check
    _
  $region71: #{eshgat_forward.4} parent=0 // pred_check_branch
    %781 = sbr.rel (0) target = $region73
  $region72: #{eshgat_forward.4} parent=0 // pred_region
    _
  $region73: #{eshgat_forward.4} parent=0 // pred_fallthru
    _

// kernel: eshgat_forward.7
$region0: #{eshgat_forward.7}
  #allocation0 [shape = 'u32[]', space=smem, size = 0x4, offset = 0x4, fixed_abs, tag = 'smem constant byte address 0x4 - core index']
  #allocation1 [shape = 'u32[144,128]{1,0:T(1,128)}', space=vmem, size = 0x12000, scoped, tag = 'internal scratch']
  %s0 = inlined_call_operand.vmem [shape: f32[16,32], index: 0, kind: input, shape index: {}]
  %s1 = inlined_call_operand.vmem [shape: f32[32,96], index: 1, kind: input, shape index: {}]
  %s2 = inlined_call_operand.vmem [shape: f32[32,4], index: 2, kind: input, shape index: {}]
  %s3 = inlined_call_operand.vmem [shape: f32[1,4], index: 3, kind: input, shape index: {}]
  %s4 = inlined_call_operand.hbm [shape: f32[2,4], index: 4, kind: output, shape index: {}]
  %s5 = sld [smem:[#allocation0]]
  $region26: #{eshgat_forward.7} parent=0
    _
  %s7 = ssub.s32 1, %s5
  %s8 = scalar_select 0, %s7, %s5
  $region1: #{eshgat_forward.7} parent=0
    #allocation2 [shape = 'u8[1024]{0}', space=vmem, size = 0x400, scoped, tag = 'output window, operand 0, single buffered']
    #allocation3 [shape = 's32[1]{0}', space=sflag, size = 0x4, scoped, tag = 'scoped memory for eshgat_forward.7']
    %9 = vsyncpa [#allocation3], 0
    // Predicated region
    $region2: #{eshgat_forward.7} parent=1 // pred_check
      _
    $region3: #{eshgat_forward.7} parent=1 // pred_check_branch
      %11 = sbr.rel (0) target = $region5
    $region4: #{eshgat_forward.7} parent=1 // pred_region
      _
    $region5: #{eshgat_forward.7} parent=1 // pred_fallthru
      _
    // Predicated region
    $region6: #{eshgat_forward.7} parent=1 // pred_check
      _
    $region7: #{eshgat_forward.7} parent=1 // pred_check_branch
      %13 = sbr.rel (0) target = $region9
    $region8: #{eshgat_forward.7} parent=1 // pred_region
      _
    $region9: #{eshgat_forward.7} parent=1 // pred_fallthru
      _
    // Predicated region
    $region10: #{eshgat_forward.7} parent=1 // pred_check
      _
    $region11: #{eshgat_forward.7} parent=1 // pred_check_branch
      %15 = sbr.rel (0) target = $region13
    $region12: #{eshgat_forward.7} parent=1 // pred_region
      _
    $region13: #{eshgat_forward.7} parent=1 // pred_fallthru
      _
    // Predicated region
    $region14: #{eshgat_forward.7} parent=1 // pred_check
      _
    $region15: #{eshgat_forward.7} parent=1 // pred_check_branch
      %17 = sbr.rel (0) target = $region17
    $region16: #{eshgat_forward.7} parent=1 // pred_region
      _
    $region17: #{eshgat_forward.7} parent=1 // pred_fallthru
      _
    %v18 = vld [vmem:[%s0] sm:$0xff]
    %v19 = vld [vmem:[%s0 + $0x8] sm:$0xff]
    %v20 = vld [vmem:[%s1] sm:$0xff]
    %v21 = vld [vmem:[%s1 + $0x8] sm:$0xff]
    %v22 = vld [vmem:[%s1 + $0x10] sm:$0xff]
    %v23 = vld [vmem:[%s1 + $0x18] sm:$0xff]
    %vm24 = vcmask 261120
    %v26 = vsel %vm24, %v18, 0
    %v29 = vsel %vm24, %v19, 0
    %31 = vmatprep.subr.mxu0 0.0
    %32 = vmatpush1.msra.mxu0 %v20
    %33 = vmatprep.subr.mxu0 0.0
    %34 = vmatpush1.msra.mxu0 %v21
    %35 = vmatprep.subr.mxu0 0.0
    %36 = vmatpush1.msra.mxu0 %v22
    %37 = vmatprep.subr.mxu0 0.0
    %38 = vmatpush1.msra.mxu0 %v23
    %39 = vmatprep.subr.mxu0 0.0
    %40 = vmatpush1.msra.mxu0 0.0
    %41 = vmatprep.subr.mxu0 0.0
    %42 = vmatpush1.msra.mxu0 0.0
    %43 = vmatprep.subr.mxu0 0.0
    %44 = vmatpush1.msra.mxu0 0.0
    %45 = vmatprep.subr.mxu0 0.0
    %46 = vmatpush1.msra.mxu0 0.0
    %47 = vmatprep.subr.mxu0 0.0
    %48 = vmatpush1.msra.mxu0 0.0
    %49 = vmatprep.subr.mxu0 0.0
    %50 = vmatpush1.msra.mxu0 0.0
    %51 = vmatprep.subr.mxu0 0.0
    %52 = vmatpush1.msra.mxu0 0.0
    %53 = vmatprep.subr.mxu0 0.0
    %54 = vmatpush1.msra.mxu0 0.0
    %55 = vmatprep.subr.mxu0 0.0
    %56 = vmatpush1.msra.mxu0 0.0
    %57 = vmatprep.subr.mxu0 0.0
    %58 = vmatpush1.msra.mxu0 0.0
    %59 = vmatprep.subr.mxu0 0.0
    %60 = vmatpush1.msra.mxu0 0.0
    %61 = vmatprep.subr.mxu0 0.0
    %62 = vmatpush1.msra.mxu0 0.0
    %63 = vmatprep.subr.mxu0 0.0
    %64 = vmatpush1.msra.mxu0 0.0
    %65 = vmatprep.subr.mxu0 0.0
    %66 = vmatpush1.msra.mxu0 0.0
    %67 = vmatprep.subr.mxu0 0.0
    %68 = vmatpush1.msra.mxu0 0.0
    %69 = vmatprep.subr.mxu0 0.0
    %70 = vmatpush1.msra.mxu0 0.0
    %71 = vmatprep.subr.mxu0 0.0
    %72 = vmatpush1.msra.mxu0 0.0
    %73 = vmatprep.subr.mxu0 0.0
    %74 = vmatpush1.msra.mxu0 0.0
    %75 = vmatprep.subr.mxu0 0.0
    %76 = vmatpush1.msra.mxu0 0.0
    %77 = vmatprep.subr.mxu0 0.0
    %78 = vmatpush1.msra.mxu0 0.0
    %79 = vmatprep.subr.mxu0 0.0
    %80 = vmatpush1.msra.mxu0 0.0
    %81 = vmatprep.subr.mxu0 0.0
    %82 = vmatpush1.msra.mxu0 0.0
    %83 = vmatprep.subr.mxu0 0.0
    %84 = vmatpush1.msra.mxu0 0.0
    %85 = vmatprep.subr.mxu0 0.0
    %86 = vmatpush1.msra.mxu0 0.0
    %87 = vmatprep.subr.mxu0 0.0
    %88 = vmatpush1.msra.mxu0 0.0
    %89 = vmatprep.subr.mxu0 0.0
    %90 = vmatpush1.msra.mxu0 0.0
    %91 = vmatprep.subr.mxu0 0.0
    %92 = vmatpush1.msra.mxu0 0.0
    %93 = vmatprep.subr.mxu0 0.0
    %94 = vmatpush1.msra.mxu0 0.0
    %95 = vmatprep.mubr.f32.mxu0 0.0
    %96 = vmatmul.mubr.f32.gmra.mrb[0].mxu0 %v26
    %v97 = vpop.f32.mrb[0].mxu0
    %v98 = vadd.f32 0.0, %v97
    %v99 = vpop.f32.mrb[0].mxu0
    %100 = vmatprep.mubr.f32.mxu0 0.0
    %101 = vmatmul.mubr.f32.gmra.mrb[0].mxu0 %v29
    %v102 = vpop.f32.mrb[0].mxu0
    %v103 = vadd.f32 0.0, %v102
    %v104 = vpop.f32.mrb[0].mxu0
    %105 = vdwg.mxu0
    %v106 = vlaneseq
    %v107 = vshrl.u32 %v106, 7
    %vm108 = vcmask 23552
    %v109 = vsel %vm108, 1.0, 0.0
    %110 = vadd.xlane.f32.xlu0 %v109
    %v111 = vpop.xlane.xlu0 %110
    %v112 = vrcp.pop %v111
    %v113 = vmul.f32 %v112, %v98
    %v114 = vsel %vm24, %v113, 0.0
    %v115 = vrot.slane %v114, 4
    %v116 = vadd.f32 %v114, %v115
    %v117 = vrot.slane %v116, 2
    %v118 = vadd.f32 %v116, %v117
    %v119 = vrot.slane %v118, 1
    %v120 = vadd.f32 %v118, %v119
    %v121 = vmul.f32 %v120, %v120
    %v122 = vsel %vm24, %v121, 0.0
    %123 = vadd.xlane.f32.xlu0 %v122
    %v124 = vpop.xlane.xlu0 %123
    %v125 = vadd.f32 %v124, 1.0
    %v126 = vrcp.pop %v125
    %v127 = vmul.f32 %v124, %v126
    %v128 = vmul.f32 %v127, %v120
    %v129 = vadd.f32 %v124, 1e-09
    %v130 = vrsqrt.pop %v129
    %v131 = vmul.f32 %v128, %v130
    %vm132 = vcmask 523520
    %v133 = vsel %vm132, %v113, 0.0
    %v134 = vrot.slane %v133, 4
    %v135 = vadd.f32 %v133, %v134
    %v136 = vrot.slane %v135, 2
    %v137 = vadd.f32 %v135, %v136
    %v138 = vrot.slane %v137, 1
    %v139 = vadd.f32 %v137, %v138
    %v140 = vmul.f32 %v139, %v139
    %142 = vrot.lane.b32.xlu0 %v140, 96
    %v143 = vpop.permute.xlu0 %142
    %v145 = vsel %vm24, %v143, 0.0
    %146 = vadd.xlane.f32.xlu0 %v145
    %v147 = vpop.xlane.xlu0 %146
    %v148 = vadd.f32 %v147, 1.0
    %v149 = vrcp.pop %v148
    %v150 = vmul.f32 %v147, %v149
    %v151 = vmul.f32 %v150, %v139
    %v152 = vadd.f32 %v147, 1e-09
    %v153 = vrsqrt.pop %v152
    %v154 = vmul.f32 %v151, %v153
    %vm155 = vcmask 785920
    %v156 = vsel %vm155, %v113, 0.0
    %v157 = vrot.slane %v156, 4
    %v158 = vadd.f32 %v156, %v157
    %v159 = vrot.slane %v158, 2
    %v160 = vadd.f32 %v158, %v159
    %v161 = vrot.slane %v160, 1
    %v162 = vadd.f32 %v160, %v161
    %v163 = vmul.f32 %v162, %v162
    %165 = vrot.lane.b32.xlu0 %v163, 64
    %v166 = vpop.permute.xlu0 %165
    %v168 = vsel %vm24, %v166, 0.0
    %169 = vadd.xlane.f32.xlu0 %v168
    %v170 = vpop.xlane.xlu0 %169
    %v171 = vadd.f32 %v170, 1.0
    %v172 = vrcp.pop %v171
    %v173 = vmul.f32 %v170, %v172
    %v174 = vmul.f32 %v173, %v162
    %v175 = vadd.f32 %v170, 1e-09
    %v176 = vrsqrt.pop %v175
    %v177 = vmul.f32 %v174, %v176
    %v178 = vmul.f32 %v98, %v131
    %v179 = vsel %vm24, %v178, 0.0
    %180 = vadd.xlane.f32.xlu0 %v179
    %v181 = vpop.xlane.xlu0 %180
    %v182 = vlaneseq
    %v183 = vand.u32 %v182, 127
    %vm184 = vcmp.eq.s32.totalorder %v183, 0
    %v185 = vsel %vm184, 1, 0
    %v186 = vcvt.s32.f32 %v185
    %v187 = vmul.f32 %v181, %v186
    %v188 = vadd.f32 %v187, 0.0
    %v189 = vmul.f32 %v98, %v154
    %191 = vrot.lane.b32.xlu0 %v189, 96
    %v192 = vpop.permute.xlu0 %191
    %v194 = vsel %vm24, %v192, 0.0
    %195 = vadd.xlane.f32.xlu0 %v194
    %v196 = vpop.xlane.xlu0 %195
    %vm197 = vcmp.eq.s32.totalorder %v183, 1
    %v198 = vsel %vm197, 1, 0
    %v199 = vcvt.s32.f32 %v198
    %v200 = vmul.f32 %v196, %v199
    %v201 = vadd.f32 %v188, %v200
    %v202 = vmul.f32 %v98, %v177
    %204 = vrot.lane.b32.xlu0 %v202, 64
    %v205 = vpop.permute.xlu0 %204
    %v207 = vsel %vm24, %v205, 0.0
    %208 = vadd.xlane.f32.xlu0 %v207
    %v209 = vpop.xlane.xlu0 %208
    %vm210 = vcmp.eq.s32.totalorder %v183, 2
    %v211 = vsel %vm210, 1, 0
    %v212 = vcvt.s32.f32 %v211
    %v213 = vmul.f32 %v209, %v212
    %v214 = vadd.f32 %v201, %v213
    %v215 = vsel %vm108, %v214, -inf
    %216 = vmax.xlane.f32.xlu0 %v215
    %v217 = vpop.xlane.xlu0 %216
    %v218 = vsub.f32 %v214, %v217
    %v219 = vmul.f32 %v218, 1.442695
    %v220 = vpow.pop %v219
    %v221 = vsel %vm108, %v220, 0.0
    %222 = vadd.xlane.f32.xlu0 %v221
    %v223 = vpop.xlane.xlu0 %222
    %v224 = vrcp.pop %v223
    %v225 = vmul.f32 %v220, %v224
    %227 = vset.pattern.permute.xlu0 0
    %228 = vperm.xlu0 %227, %v225
    %v229 = vpop.permute.xlu0 %228
    %v231 = vmul.f32 %v229, %v98
    %v232 = vsel %vm24, %v231, 0.0
    %v233 = vrot.slane %v232, 4
    %v234 = vadd.f32 %v232, %v233
    %v235 = vrot.slane %v234, 2
    %v236 = vadd.f32 %v234, %v235
    %v237 = vrot.slane %v236, 1
    %v238 = vadd.f32 %v236, %v237
    %v239 = vmul.f32 %v238, %v238
    %v240 = vsel %vm24, %v239, 0.0
    %241 = vadd.xlane.f32.xlu0 %v240
    %v242 = vpop.xlane.xlu0 %241
    %v243 = vadd.f32 %v242, 1.0
    %v244 = vrcp.pop %v243
    %v245 = vmul.f32 %v242, %v244
    %v246 = vmul.f32 %v245, %v238
    %v247 = vadd.f32 %v242, 1e-09
    %v248 = vrsqrt.pop %v247
    %v249 = vmul.f32 %v246, %v248
    %250 = vset.pattern.permute.xlu0 1
    %251 = vperm.xlu0 %250, %v225
    %v252 = vpop.permute.xlu0 %251
    %v254 = vmul.f32 %v252, %v98
    %v255 = vsel %vm132, %v254, 0.0
    %v256 = vrot.slane %v255, 4
    %v257 = vadd.f32 %v255, %v256
    %v258 = vrot.slane %v257, 2
    %v259 = vadd.f32 %v257, %v258
    %v260 = vrot.slane %v259, 1
    %v261 = vadd.f32 %v259, %v260
    %v262 = vmul.f32 %v261, %v261
    %264 = vrot.lane.b32.xlu0 %v262, 96
    %v265 = vpop.permute.xlu0 %264
    %v267 = vsel %vm24, %v265, 0.0
    %268 = vadd.xlane.f32.xlu0 %v267
    %v269 = vpop.xlane.xlu0 %268
    %v270 = vadd.f32 %v269, 1.0
    %v271 = vrcp.pop %v270
    %v272 = vmul.f32 %v269, %v271
    %v273 = vmul.f32 %v272, %v261
    %v274 = vadd.f32 %v269, 1e-09
    %v275 = vrsqrt.pop %v274
    %v276 = vmul.f32 %v273, %v275
    %277 = vset.pattern.permute.xlu0 2
    %278 = vperm.xlu0 %277, %v225
    %v279 = vpop.permute.xlu0 %278
    %v281 = vmul.f32 %v279, %v98
    %v282 = vsel %vm155, %v281, 0.0
    %v283 = vrot.slane %v282, 4
    %v284 = vadd.f32 %v282, %v283
    %v285 = vrot.slane %v284, 2
    %v286 = vadd.f32 %v284, %v285
    %v287 = vrot.slane %v286, 1
    %v288 = vadd.f32 %v286, %v287
    %v289 = vmul.f32 %v288, %v288
    %291 = vrot.lane.b32.xlu0 %v289, 64
    %v292 = vpop.permute.xlu0 %291
    %v294 = vsel %vm24, %v292, 0.0
    %295 = vadd.xlane.f32.xlu0 %v294
    %v296 = vpop.xlane.xlu0 %295
    %v297 = vadd.f32 %v296, 1.0
    %v298 = vrcp.pop %v297
    %v299 = vmul.f32 %v296, %v298
    %v300 = vmul.f32 %v299, %v288
    %v301 = vadd.f32 %v296, 1e-09
    %v302 = vrsqrt.pop %v301
    %v303 = vmul.f32 %v300, %v302
    %v304 = vmul.f32 %v98, %v249
    %v305 = vsel %vm24, %v304, 0.0
    %306 = vadd.xlane.f32.xlu0 %v305
    %v307 = vpop.xlane.xlu0 %306
    %v308 = vmul.f32 %v307, %v186
    %v309 = vadd.f32 %v214, %v308
    %v310 = vmul.f32 %v98, %v276
    %312 = vrot.lane.b32.xlu0 %v310, 96
    %v313 = vpop.permute.xlu0 %312
    %v315 = vsel %vm24, %v313, 0.0
    %316 = vadd.xlane.f32.xlu0 %v315
    %v317 = vpop.xlane.xlu0 %316
    %v318 = vmul.f32 %v317, %v199
    %v319 = vadd.f32 %v309, %v318
    %v320 = vmul.f32 %v98, %v303
    %322 = vrot.lane.b32.xlu0 %v320, 64
    %v323 = vpop.permute.xlu0 %322
    %v325 = vsel %vm24, %v323, 0.0
    %326 = vadd.xlane.f32.xlu0 %v325
    %v327 = vpop.xlane.xlu0 %326
    %v328 = vmul.f32 %v327, %v212
    %v329 = vadd.f32 %v319, %v328
    %v330 = vsel %vm108, %v329, -inf
    %331 = vmax.xlane.f32.xlu0 %v330
    %v332 = vpop.xlane.xlu0 %331
    %v333 = vsub.f32 %v329, %v332
    %v334 = vmul.f32 %v333, 1.442695
    %v335 = vpow.pop %v334
    %v336 = vsel %vm108, %v335, 0.0
    %337 = vadd.xlane.f32.xlu0 %v336
    %v338 = vpop.xlane.xlu0 %337
    %v339 = vrcp.pop %v338
    %v340 = vmul.f32 %v335, %v339
    %342 = vset.pattern.permute.xlu0 0
    %343 = vperm.xlu0 %342, %v340
    %v344 = vpop.permute.xlu0 %343
    %v346 = vmul.f32 %v344, %v98
    %v347 = vsel %vm24, %v346, 0.0
    %v348 = vrot.slane %v347, 4
    %v349 = vadd.f32 %v347, %v348
    %v350 = vrot.slane %v349, 2
    %v351 = vadd.f32 %v349, %v350
    %v352 = vrot.slane %v351, 1
    %v353 = vadd.f32 %v351, %v352
    %v354 = vmul.f32 %v353, %v353
    %v355 = vsel %vm24, %v354, 0.0
    %356 = vadd.xlane.f32.xlu0 %v355
    %v357 = vpop.xlane.xlu0 %356
    %v358 = vadd.f32 %v357, 1.0
    %v359 = vrcp.pop %v358
    %v360 = vmul.f32 %v357, %v359
    %v361 = vmul.f32 %v360, %v353
    %v362 = vadd.f32 %v357, 1e-09
    %v363 = vrsqrt.pop %v362
    %v364 = vmul.f32 %v361, %v363
    %365 = vset.pattern.permute.xlu0 1
    %366 = vperm.xlu0 %365, %v340
    %v367 = vpop.permute.xlu0 %366
    %v369 = vmul.f32 %v367, %v98
    %v370 = vsel %vm132, %v369, 0.0
    %v371 = vrot.slane %v370, 4
    %v372 = vadd.f32 %v370, %v371
    %v373 = vrot.slane %v372, 2
    %v374 = vadd.f32 %v372, %v373
    %v375 = vrot.slane %v374, 1
    %v376 = vadd.f32 %v374, %v375
    %v377 = vmul.f32 %v376, %v376
    %379 = vrot.lane.b32.xlu0 %v377, 96
    %v380 = vpop.permute.xlu0 %379
    %v382 = vsel %vm24, %v380, 0.0
    %383 = vadd.xlane.f32.xlu0 %v382
    %v384 = vpop.xlane.xlu0 %383
    %v385 = vadd.f32 %v384, 1.0
    %v386 = vrcp.pop %v385
    %v387 = vmul.f32 %v384, %v386
    %v388 = vmul.f32 %v387, %v376
    %v389 = vadd.f32 %v384, 1e-09
    %v390 = vrsqrt.pop %v389
    %v391 = vmul.f32 %v388, %v390
    %392 = vset.pattern.permute.xlu0 2
    %393 = vperm.xlu0 %392, %v340
    %v394 = vpop.permute.xlu0 %393
    %v396 = vmul.f32 %v394, %v98
    %v397 = vsel %vm155, %v396, 0.0
    %v398 = vrot.slane %v397, 4
    %v399 = vadd.f32 %v397, %v398
    %v400 = vrot.slane %v399, 2
    %v401 = vadd.f32 %v399, %v400
    %v402 = vrot.slane %v401, 1
    %v403 = vadd.f32 %v401, %v402
    %v404 = vmul.f32 %v403, %v403
    %406 = vrot.lane.b32.xlu0 %v404, 64
    %v407 = vpop.permute.xlu0 %406
    %v409 = vsel %vm24, %v407, 0.0
    %410 = vadd.xlane.f32.xlu0 %v409
    %v411 = vpop.xlane.xlu0 %410
    %v412 = vadd.f32 %v411, 1.0
    %v413 = vrcp.pop %v412
    %v414 = vmul.f32 %v411, %v413
    %v415 = vmul.f32 %v414, %v403
    %v416 = vadd.f32 %v411, 1e-09
    %v417 = vrsqrt.pop %v416
    %v418 = vmul.f32 %v415, %v417
    %420 = vrot.lane.b32.xlu0 %v391, 96
    %v421 = vpop.permute.xlu0 %420
    %v423 = vadd.f32 %v364, %v421
    %425 = vrot.lane.b32.xlu0 %v418, 64
    %v426 = vpop.permute.xlu0 %425
    %v428 = vadd.f32 %v423, %v426
    %vm429 = vcmp.eq.s32.totalorder %v107, 0
    %v430 = vsel %vm429, 1, 0
    %vm431 = vcmp.eq.s32.totalorder %v430, 1
    %v432 = vlaneseq
    %v433 = vshrl.u32 %v432, 7
    %v434 = vsub.s32 0, %v433
    %v435 = vrot.slane %v428, %v434
    %v436 = vsel %vm431, %v435, 0.0
    %v437 = vadd.f32 %v436, 0.0
    %v438 = vmul.f32 %v112, %v103
    %v439 = vsel %vm24, %v438, 0.0
    %v440 = vrot.slane %v439, 4
    %v441 = vadd.f32 %v439, %v440
    %v442 = vrot.slane %v441, 2
    %v443 = vadd.f32 %v441, %v442
    %v444 = vrot.slane %v443, 1
    %v445 = vadd.f32 %v443, %v444
    %v446 = vmul.f32 %v445, %v445
    %v447 = vsel %vm24, %v446, 0.0
    %448 = vadd.xlane.f32.xlu0 %v447
    %v449 = vpop.xlane.xlu0 %448
    %v450 = vadd.f32 %v449, 1.0
    %v451 = vrcp.pop %v450
    %v452 = vmul.f32 %v449, %v451
    %v453 = vmul.f32 %v452, %v445
    %v454 = vadd.f32 %v449, 1e-09
    %v455 = vrsqrt.pop %v454
    %v456 = vmul.f32 %v453, %v455
    %v457 = vsel %vm132, %v438, 0.0
    %v458 = vrot.slane %v457, 4
    %v459 = vadd.f32 %v457, %v458
    %v460 = vrot.slane %v459, 2
    %v461 = vadd.f32 %v459, %v460
    %v462 = vrot.slane %v461, 1
    %v463 = vadd.f32 %v461, %v462
    %v464 = vmul.f32 %v463, %v463
    %466 = vrot.lane.b32.xlu0 %v464, 96
    %v467 = vpop.permute.xlu0 %466
    %v469 = vsel %vm24, %v467, 0.0
    %470 = vadd.xlane.f32.xlu0 %v469
    %v471 = vpop.xlane.xlu0 %470
    %v472 = vadd.f32 %v471, 1.0
    %v473 = vrcp.pop %v472
    %v474 = vmul.f32 %v471, %v473
    %v475 = vmul.f32 %v474, %v463
    %v476 = vadd.f32 %v471, 1e-09
    %v477 = vrsqrt.pop %v476
    %v478 = vmul.f32 %v475, %v477
    %v479 = vsel %vm155, %v438, 0.0
    %v480 = vrot.slane %v479, 4
    %v481 = vadd.f32 %v479, %v480
    %v482 = vrot.slane %v481, 2
    %v483 = vadd.f32 %v481, %v482
    %v484 = vrot.slane %v483, 1
    %v485 = vadd.f32 %v483, %v484
    %v486 = vmul.f32 %v485, %v485
    %488 = vrot.lane.b32.xlu0 %v486, 64
    %v489 = vpop.permute.xlu0 %488
    %v491 = vsel %vm24, %v489, 0.0
    %492 = vadd.xlane.f32.xlu0 %v491
    %v493 = vpop.xlane.xlu0 %492
    %v494 = vadd.f32 %v493, 1.0
    %v495 = vrcp.pop %v494
    %v496 = vmul.f32 %v493, %v495
    %v497 = vmul.f32 %v496, %v485
    %v498 = vadd.f32 %v493, 1e-09
    %v499 = vrsqrt.pop %v498
    %v500 = vmul.f32 %v497, %v499
    %v501 = vmul.f32 %v103, %v456
    %v502 = vsel %vm24, %v501, 0.0
    %503 = vadd.xlane.f32.xlu0 %v502
    %v504 = vpop.xlane.xlu0 %503
    %v505 = vmul.f32 %v504, %v186
    %v506 = vadd.f32 %v505, 0.0
    %v507 = vmul.f32 %v103, %v478
    %509 = vrot.lane.b32.xlu0 %v507, 96
    %v510 = vpop.permute.xlu0 %509
    %v512 = vsel %vm24, %v510, 0.0
    %513 = vadd.xlane.f32.xlu0 %v512
    %v514 = vpop.xlane.xlu0 %513
    %v515 = vmul.f32 %v514, %v199
    %v516 = vadd.f32 %v506, %v515
    %v517 = vmul.f32 %v103, %v500
    %519 = vrot.lane.b32.xlu0 %v517, 64
    %v520 = vpop.permute.xlu0 %519
    %v522 = vsel %vm24, %v520, 0.0
    %523 = vadd.xlane.f32.xlu0 %v522
    %v524 = vpop.xlane.xlu0 %523
    %v525 = vmul.f32 %v524, %v212
    %v526 = vadd.f32 %v516, %v525
    %v527 = vsel %vm108, %v526, -inf
    %528 = vmax.xlane.f32.xlu0 %v527
    %v529 = vpop.xlane.xlu0 %528
    %v530 = vsub.f32 %v526, %v529
    %v531 = vmul.f32 %v530, 1.442695
    %v532 = vpow.pop %v531
    %v533 = vsel %vm108, %v532, 0.0
    %534 = vadd.xlane.f32.xlu0 %v533
    %v535 = vpop.xlane.xlu0 %534
    %v536 = vrcp.pop %v535
    %v537 = vmul.f32 %v532, %v536
    %539 = vset.pattern.permute.xlu0 0
    %540 = vperm.xlu0 %539, %v537
    %v541 = vpop.permute.xlu0 %540
    %v543 = vmul.f32 %v541, %v103
    %v544 = vsel %vm24, %v543, 0.0
    %v545 = vrot.slane %v544, 4
    %v546 = vadd.f32 %v544, %v545
    %v547 = vrot.slane %v546, 2
    %v548 = vadd.f32 %v546, %v547
    %v549 = vrot.slane %v548, 1
    %v550 = vadd.f32 %v548, %v549
    %v551 = vmul.f32 %v550, %v550
    %v552 = vsel %vm24, %v551, 0.0
    %553 = vadd.xlane.f32.xlu0 %v552
    %v554 = vpop.xlane.xlu0 %553
    %v555 = vadd.f32 %v554, 1.0
    %v556 = vrcp.pop %v555
    %v557 = vmul.f32 %v554, %v556
    %v558 = vmul.f32 %v557, %v550
    %v559 = vadd.f32 %v554, 1e-09
    %v560 = vrsqrt.pop %v559
    %v561 = vmul.f32 %v558, %v560
    %562 = vset.pattern.permute.xlu0 1
    %563 = vperm.xlu0 %562, %v537
    %v564 = vpop.permute.xlu0 %563
    %v566 = vmul.f32 %v564, %v103
    %v567 = vsel %vm132, %v566, 0.0
    %v568 = vrot.slane %v567, 4
    %v569 = vadd.f32 %v567, %v568
    %v570 = vrot.slane %v569, 2
    %v571 = vadd.f32 %v569, %v570
    %v572 = vrot.slane %v571, 1
    %v573 = vadd.f32 %v571, %v572
    %v574 = vmul.f32 %v573, %v573
    %576 = vrot.lane.b32.xlu0 %v574, 96
    %v577 = vpop.permute.xlu0 %576
    %v579 = vsel %vm24, %v577, 0.0
    %580 = vadd.xlane.f32.xlu0 %v579
    %v581 = vpop.xlane.xlu0 %580
    %v582 = vadd.f32 %v581, 1.0
    %v583 = vrcp.pop %v582
    %v584 = vmul.f32 %v581, %v583
    %v585 = vmul.f32 %v584, %v573
    %v586 = vadd.f32 %v581, 1e-09
    %v587 = vrsqrt.pop %v586
    %v588 = vmul.f32 %v585, %v587
    %589 = vset.pattern.permute.xlu0 2
    %590 = vperm.xlu0 %589, %v537
    %v591 = vpop.permute.xlu0 %590
    %v593 = vmul.f32 %v591, %v103
    %v594 = vsel %vm155, %v593, 0.0
    %v595 = vrot.slane %v594, 4
    %v596 = vadd.f32 %v594, %v595
    %v597 = vrot.slane %v596, 2
    %v598 = vadd.f32 %v596, %v597
    %v599 = vrot.slane %v598, 1
    %v600 = vadd.f32 %v598, %v599
    %v601 = vmul.f32 %v600, %v600
    %603 = vrot.lane.b32.xlu0 %v601, 64
    %v604 = vpop.permute.xlu0 %603
    %v606 = vsel %vm24, %v604, 0.0
    %607 = vadd.xlane.f32.xlu0 %v606
    %v608 = vpop.xlane.xlu0 %607
    %v609 = vadd.f32 %v608, 1.0
    %v610 = vrcp.pop %v609
    %v611 = vmul.f32 %v608, %v610
    %v612 = vmul.f32 %v611, %v600
    %v613 = vadd.f32 %v608, 1e-09
    %v614 = vrsqrt.pop %v613
    %v615 = vmul.f32 %v612, %v614
    %v616 = vmul.f32 %v103, %v561
    %v617 = vsel %vm24, %v616, 0.0
    %618 = vadd.xlane.f32.xlu0 %v617
    %v619 = vpop.xlane.xlu0 %618
    %v620 = vmul.f32 %v619, %v186
    %v621 = vadd.f32 %v526, %v620
    %v622 = vmul.f32 %v103, %v588
    %624 = vrot.lane.b32.xlu0 %v622, 96
    %v625 = vpop.permute.xlu0 %624
    %v627 = vsel %vm24, %v625, 0.0
    %628 = vadd.xlane.f32.xlu0 %v627
    %v629 = vpop.xlane.xlu0 %628
    %v630 = vmul.f32 %v629, %v199
    %v631 = vadd.f32 %v621, %v630
    %v632 = vmul.f32 %v103, %v615
    %634 = vrot.lane.b32.xlu0 %v632, 64
    %v635 = vpop.permute.xlu0 %634
    %v637 = vsel %vm24, %v635, 0.0
    %638 = vadd.xlane.f32.xlu0 %v637
    %v639 = vpop.xlane.xlu0 %638
    %v640 = vmul.f32 %v639, %v212
    %v641 = vadd.f32 %v631, %v640
    %v642 = vsel %vm108, %v641, -inf
    %643 = vmax.xlane.f32.xlu0 %v642
    %v644 = vpop.xlane.xlu0 %643
    %v645 = vsub.f32 %v641, %v644
    %v646 = vmul.f32 %v645, 1.442695
    %v647 = vpow.pop %v646
    %v648 = vsel %vm108, %v647, 0.0
    %649 = vadd.xlane.f32.xlu0 %v648
    %v650 = vpop.xlane.xlu0 %649
    %v651 = vrcp.pop %v650
    %v652 = vmul.f32 %v647, %v651
    %654 = vset.pattern.permute.xlu0 0
    %655 = vperm.xlu0 %654, %v652
    %v656 = vpop.permute.xlu0 %655
    %v658 = vmul.f32 %v656, %v103
    %v659 = vsel %vm24, %v658, 0.0
    %v660 = vrot.slane %v659, 4
    %v661 = vadd.f32 %v659, %v660
    %v662 = vrot.slane %v661, 2
    %v663 = vadd.f32 %v661, %v662
    %v664 = vrot.slane %v663, 1
    %v665 = vadd.f32 %v663, %v664
    %v666 = vmul.f32 %v665, %v665
    %v667 = vsel %vm24, %v666, 0.0
    %668 = vadd.xlane.f32.xlu0 %v667
    %v669 = vpop.xlane.xlu0 %668
    %v670 = vadd.f32 %v669, 1.0
    %v671 = vrcp.pop %v670
    %v672 = vmul.f32 %v669, %v671
    %v673 = vmul.f32 %v672, %v665
    %v674 = vadd.f32 %v669, 1e-09
    %v675 = vrsqrt.pop %v674
    %v676 = vmul.f32 %v673, %v675
    %677 = vset.pattern.permute.xlu0 1
    %678 = vperm.xlu0 %677, %v652
    %v679 = vpop.permute.xlu0 %678
    %v681 = vmul.f32 %v679, %v103
    %v682 = vsel %vm132, %v681, 0.0
    %v683 = vrot.slane %v682, 4
    %v684 = vadd.f32 %v682, %v683
    %v685 = vrot.slane %v684, 2
    %v686 = vadd.f32 %v684, %v685
    %v687 = vrot.slane %v686, 1
    %v688 = vadd.f32 %v686, %v687
    %v689 = vmul.f32 %v688, %v688
    %691 = vrot.lane.b32.xlu0 %v689, 96
    %v692 = vpop.permute.xlu0 %691
    %v694 = vsel %vm24, %v692, 0.0
    %695 = vadd.xlane.f32.xlu0 %v694
    %v696 = vpop.xlane.xlu0 %695
    %v697 = vadd.f32 %v696, 1.0
    %v698 = vrcp.pop %v697
    %v699 = vmul.f32 %v696, %v698
    %v700 = vmul.f32 %v699, %v688
    %v701 = vadd.f32 %v696, 1e-09
    %v702 = vrsqrt.pop %v701
    %v703 = vmul.f32 %v700, %v702
    %704 = vset.pattern.permute.xlu0 2
    %705 = vperm.xlu0 %704, %v652
    %v706 = vpop.permute.xlu0 %705
    %v708 = vmul.f32 %v706, %v103
    %v709 = vsel %vm155, %v708, 0.0
    %v710 = vrot.slane %v709, 4
    %v711 = vadd.f32 %v709, %v710
    %v712 = vrot.slane %v711, 2
    %v713 = vadd.f32 %v711, %v712
    %v714 = vrot.slane %v713, 1
    %v715 = vadd.f32 %v713, %v714
    %v716 = vmul.f32 %v715, %v715
    %718 = vrot.lane.b32.xlu0 %v716, 64
    %v719 = vpop.permute.xlu0 %718
    %v721 = vsel %vm24, %v719, 0.0
    %722 = vadd.xlane.f32.xlu0 %v721
    %v723 = vpop.xlane.xlu0 %722
    %v724 = vadd.f32 %v723, 1.0
    %v725 = vrcp.pop %v724
    %v726 = vmul.f32 %v723, %v725
    %v727 = vmul.f32 %v726, %v715
    %v728 = vadd.f32 %v723, 1e-09
    %v729 = vrsqrt.pop %v728
    %v730 = vmul.f32 %v727, %v729
    %732 = vrot.lane.b32.xlu0 %v703, 96
    %v733 = vpop.permute.xlu0 %732
    %v735 = vadd.f32 %v676, %v733
    %737 = vrot.lane.b32.xlu0 %v730, 64
    %v738 = vpop.permute.xlu0 %737
    %v740 = vadd.f32 %v735, %v738
    %vm741 = vcmp.eq.s32.totalorder %v107, 1
    %v742 = vsel %vm741, 1, 0
    %vm743 = vcmp.eq.s32.totalorder %v742, 1
    %v744 = vlaneseq
    %v745 = vshrl.u32 %v744, 7
    %v746 = vsub.s32 0, %v745
    %v747 = vrot.slane %v740, %v746
    %v748 = vsel %vm743, %v747, 0.0
    %v749 = vadd.f32 %v437, %v748
    %v750 = vld [vmem:[%s2] sm:$0xff]
    %v751 = vld [vmem:[%s2 + $0x8] sm:$0xff]
    %v752 = vld [vmem:[%s2 + $0x10] sm:$0xff]
    %v753 = vld [vmem:[%s2 + $0x18] sm:$0xff]
    %v754 = vld [vmem:[%s3] sm:$0x1]
    %v756 = vlaneseq
    %v757 = vshrl.u32 %v756, 7
    %v758 = vsub.s32 0, %v757
    %v759 = vrot.slane %v754, %v758
    %v762 = vsel %vm24, %v749, 0
    %764 = vmatprep.subr.mxu0 0.0
    %765 = vmatpush1.msra.mxu0 %v750
    %766 = vmatprep.subr.mxu0 0.0
    %767 = vmatpush1.msra.mxu0 %v751
    %768 = vmatprep.subr.mxu0 0.0
    %769 = vmatpush1.msra.mxu0 %v752
    %770 = vmatprep.subr.mxu0 0.0
    %771 = vmatpush1.msra.mxu0 %v753
    %772 = vmatprep.subr.mxu0 0.0
    %773 = vmatpush1.msra.mxu0 0.0
    %774 = vmatprep.subr.mxu0 0.0
    %775 = vmatpush1.msra.mxu0 0.0
    %776 = vmatprep.subr.mxu0 0.0
    %777 = vmatpush1.msra.mxu0 0.0
    %778 = vmatprep.subr.mxu0 0.0
    %779 = vmatpush1.msra.mxu0 0.0
    %780 = vmatprep.subr.mxu0 0.0
    %781 = vmatpush1.msra.mxu0 0.0
    %782 = vmatprep.subr.mxu0 0.0
    %783 = vmatpush1.msra.mxu0 0.0
    %784 = vmatprep.subr.mxu0 0.0
    %785 = vmatpush1.msra.mxu0 0.0
    %786 = vmatprep.subr.mxu0 0.0
    %787 = vmatpush1.msra.mxu0 0.0
    %788 = vmatprep.subr.mxu0 0.0
    %789 = vmatpush1.msra.mxu0 0.0
    %790 = vmatprep.subr.mxu0 0.0
    %791 = vmatpush1.msra.mxu0 0.0
    %792 = vmatprep.subr.mxu0 0.0
    %793 = vmatpush1.msra.mxu0 0.0
    %794 = vmatprep.subr.mxu0 0.0
    %795 = vmatpush1.msra.mxu0 0.0
    %796 = vmatprep.subr.mxu0 0.0
    %797 = vmatpush1.msra.mxu0 0.0
    %798 = vmatprep.subr.mxu0 0.0
    %799 = vmatpush1.msra.mxu0 0.0
    %800 = vmatprep.subr.mxu0 0.0
    %801 = vmatpush1.msra.mxu0 0.0
    %802 = vmatprep.subr.mxu0 0.0
    %803 = vmatpush1.msra.mxu0 0.0
    %804 = vmatprep.subr.mxu0 0.0
    %805 = vmatpush1.msra.mxu0 0.0
    %806 = vmatprep.subr.mxu0 0.0
    %807 = vmatpush1.msra.mxu0 0.0
    %808 = vmatprep.subr.mxu0 0.0
    %809 = vmatpush1.msra.mxu0 0.0
    %810 = vmatprep.subr.mxu0 0.0
    %811 = vmatpush1.msra.mxu0 0.0
    %812 = vmatprep.subr.mxu0 0.0
    %813 = vmatpush1.msra.mxu0 0.0
    %814 = vmatprep.subr.mxu0 0.0
    %815 = vmatpush1.msra.mxu0 0.0
    %816 = vmatprep.subr.mxu0 0.0
    %817 = vmatpush1.msra.mxu0 0.0
    %818 = vmatprep.subr.mxu0 0.0
    %819 = vmatpush1.msra.mxu0 0.0
    %820 = vmatprep.subr.mxu0 0.0
    %821 = vmatpush1.msra.mxu0 0.0
    %822 = vmatprep.subr.mxu0 0.0
    %823 = vmatpush1.msra.mxu0 0.0
    %824 = vmatprep.subr.mxu0 0.0
    %825 = vmatpush1.msra.mxu0 0.0
    %826 = vmatprep.subr.mxu0 0.0
    %827 = vmatpush1.msra.mxu0 0.0
    %828 = vmatprep.mubr.f32.mxu0 0.0
    %829 = vmatmul.mubr.f32.gmra.mrb[0].mxu0 %v762
    %v830 = vpop.f32.mrb[0].mxu0
    %v831 = vadd.f32 %v759, %v830
    %v832 = vpop.f32.mrb[0].mxu0
    %833 = vdwg.mxu0
    %vm834 = vcmask 25600
    %v835 = vsel %vm834, %v831, -inf
    %836 = vmax.xlane.f32.xlu0 %v835
    %v837 = vpop.xlane.xlu0 %836
    %v838 = vsub.f32 %v831, %v837
    %v839 = vmul.f32 %v838, 1.442695
    %v840 = vpow.pop %v839
    %v841 = vsel %vm834, %v840, 0.0
    %842 = vadd.xlane.f32.xlu0 %v841
    %v843 = vpop.xlane.xlu0 %842
    %v844 = vlog2.pop %v843
    %v845 = vmul.f32 %v844, 0.6931472
    %v846 = vsub.f32 %v838, %v845
    %847 = vst.msk [vmem:[#allocation2] sm:$0x3] %vm834, %v846
    // Predicated region
    $region18: #{eshgat_forward.7} parent=1 // pred_check
      _
    $region19: #{eshgat_forward.7} parent=1 // pred_check_branch
      %849 = sbr.rel (0) target = $region21
    $region20: #{eshgat_forward.7} parent=1 // pred_region
      %s851 = ssub.s32 32, 32
      %852 = vsyncadd [#allocation3], %s851
      %s854 = sshll.u32 [#allocation2], 4
      %s855 = int_to_ptr.vmem [resolvable:$true] %s854
      %857 = dma.vmem_to_hbm [thread:$0]  %s855, 32, %s4, [#allocation3]
    $region21: #{eshgat_forward.7} parent=1 // pred_fallthru
      _
    // Predicated region
    $region22: #{eshgat_forward.7} parent=1 // pred_check
      _
    $region23: #{eshgat_forward.7} parent=1 // pred_check_branch
      %859 = sbr.rel (0) target = $region25
    $region24: #{eshgat_forward.7} parent=1 // pred_region
      %860 = dma.done [#allocation3], 32
    $region25: #{eshgat_forward.7} parent=1 // pred_fallthru
      _
    %861 = vsyncpa [#allocation3], 1

</llo_original>
